<compile_context>
chip_gen: v7x
topology: tpu7x:2x2x1
jax: 0.10.0
libtpu: 0.0.40
codegen_flags: <defaults>
</compile_context>

<pallas_src>
import functools

import jax
import jax.numpy as jnp
from jax import lax
from jax.experimental import pallas as pl
from jax.experimental.pallas import tpu as pltpu

LANE = 128          # TPU lane width: channel dims are zero-padded to this
EXPANSION = 4


def _round_up(x, m):
    return (x + m - 1) // m * m


def _pick_vmem_limit_bytes():
    """~75% of physical VMEM: ~96 MiB on 128-MiB parts (v5e/v6e), ~48 MiB on v7x."""
    try:
        phys = int(pltpu.get_tpu_info().vmem_capacity_bytes)
    except Exception:
        return 64 * 1024 * 1024
    return min(phys * 3 // 4, 100 * 1024 * 1024)


# --------------------------------------------------------------------------- #
# Parameter preparation (wrapper side: BN folding, weight padding, mask)       #
# --------------------------------------------------------------------------- #
def _fold_and_pad_params(params, H, W):
    """Fold BN (eval) scale into the conv weights, pad channels to 128 lanes,
    cast matmul operands to bf16, and build the interior-pixel mask column."""
    w1, s1, b1, w2, s2, b2, w3, s3, b3 = params
    cin, c1 = w1.shape
    c3 = w3.shape[1]
    cin_p = _round_up(cin, LANE)
    c1_p = _round_up(c1, LANE)
    c3_p = _round_up(c3, LANE)

    m2 = (H + 2) * (W + 2)          # flattened spatially-padded pixel count
    m2p = _round_up(m2, 8)

    # BN fold: conv(x, w) * scale + bias == conv(x, w * scale) + bias
    w1f = w1 * s1
    w2f = w2 * s2.reshape(1, 1, 1, c1)
    w3f = w3 * s3

    def pad2(a, rows, cols):
        out = jnp.zeros((rows, cols), a.dtype)
        return out.at[:a.shape[0], :a.shape[1]].set(a)

    w1p = pad2(w1f, cin_p, c1_p).astype(jnp.bfloat16)
    w3p = pad2(w3f, c1_p, c3_p).astype(jnp.bfloat16)
    # 3x3 weight, tap-major (kh, kw) order, stacked along rows: (9*c1_p, c1_p).
    w2p = jnp.zeros((3, 3, c1_p, c1_p), w2f.dtype).at[:, :, :c1, :c1].set(w2f)
    w2p = w2p.reshape(9 * c1_p, c1_p).astype(jnp.bfloat16)

    b1p = pad2(b1, 1, c1_p)          # f32
    b2p = pad2(b2, 1, c1_p)          # f32
    b3p = pad2(b3, 1, c3_p)          # f32

    # Interior mask column: 1 on real image pixels, 0 on the zero ring and on
    # the rows padding m2 -> m2p.  t1 = mask * relu(x@w1 + b1) is then exactly
    # 0 outside the image, so the 3x3 taps read correct zeros at the borders.
    interior = jnp.zeros((H + 2, W + 2), jnp.float32).at[1:H + 1, 1:W + 1].set(1.0)
    mask = jnp.pad(interior.reshape(m2, 1), ((0, m2p - m2), (0, 0)))   # (m2p, 1)

    return (w1p, b1p, w2p, b2p, w3p, b3p, mask), (cin_p, c1_p, c3_p, m2, m2p)


# --------------------------------------------------------------------------- #
# Fused kernel                                                                 #
# --------------------------------------------------------------------------- #
def bottleneck_kernel(x_ref, w1_ref, b1_ref, mask_ref, w2_ref, b2_ref,
                      w3_ref, b3_ref, o_ref, t1_pad_ref, *, width, halo):
    m2p = x_ref.shape[1]
    c1_p = w1_ref.shape[1]
    row = width + 2                      # row stride of the spatially-padded image

    # Zero only the halo rows of the shift scratch (interior is fully
    # overwritten below).  Cheap, and safe under "parallel" batch sharding.
    zeros_halo = jnp.zeros((halo, c1_p), jnp.float32)
    t1_pad_ref[0:halo, :] = zeros_halo
    t1_pad_ref[halo + m2p:halo + m2p + halo, :] = zeros_halo

    # conv1 (1x1): bf16 MXU matmul, f32 accumulate; BN scale folded into w1,
    # BN bias + interior mask applied in the f32 epilogue.
    t1 = jnp.dot(x_ref[0], w1_ref[...], preferred_element_type=jnp.float32)
    t1 = mask_ref[...] * jnp.maximum(t1 + b1_ref[...], 0.0)   # (m2p, c1_p)

    # conv2 (3x3, stride 1, pad 1): 9 accumulating K=c1_p dots off row-shifted
    # views of the halo-padded flat scratch (pixels on sublanes, channels on
    # lanes).  No im2col tensor is materialized; the MXU has slack so the extra
    # dot issues are free while VMEM/vld pressure drops.
    t1_pad_ref[halo:halo + m2p, :] = t1
    acc = None
    k = 0
    for dy in (-1, 0, 1):
        for dx in (-1, 0, 1):
            start = halo + dy * row + dx
            tap = t1_pad_ref[start:start + m2p, :].astype(jnp.bfloat16)
            part = jnp.dot(tap, w2_ref[k * c1_p:(k + 1) * c1_p, :],
                           preferred_element_type=jnp.float32)
            acc = part if acc is None else acc + part
            k += 1
    t2 = jnp.maximum(acc + b2_ref[...], 0.0)             # (m2p, c1_p)

    # conv3 (1x1)
    t3 = jnp.dot(t2.astype(jnp.bfloat16), w3_ref[...],
                 preferred_element_type=jnp.float32)
    t3 = jnp.maximum(t3 + b3_ref[...], 0.0)               # (m2p, c3_p)

    # Identity shortcut (stride 1, downsample=None).  Re-read the resident x
    # tile here instead of keeping it live across all three matmuls.  Per the
    # module spec the ReLU lives inside ConvBlock; no ReLU after the add.
    o_ref[0] = (t3 + x_ref[0].astype(jnp.float32)).astype(o_ref.dtype)


# --------------------------------------------------------------------------- #
# Wrapper                                                                      #
# --------------------------------------------------------------------------- #
def bottleneck_pallas(x_nchw, params):
    N, cin, H, W = x_nchw.shape
    (w1p, b1p, w2p, b2p, w3p, b3p, mask), (cin_p, c1_p, c3_p, m2, m2p) = \
        _fold_and_pad_params(params, H, W)
    c3 = params[6].shape[1]
    assert c3 == cin and c3_p == cin_p, "identity shortcut needs inC == outC*4"

    halo = _round_up(W + 3, 8)     # covers the largest tap shift, 8-aligned

    # Layout plumbing: NCHW -> NHWC, 1-pixel zero ring, flatten pixels, pad
    # pixels to a multiple of 8 and channels to 128 lanes, cast to bf16 so the
    # activation crosses HBM at half width.  (See TODO(synk) in the header
    # about keeping this layout between blocks.)
    x_nhwc = jnp.transpose(x_nchw, (0, 2, 3, 1))
    xp = jnp.pad(x_nhwc, ((0, 0), (1, 1), (1, 1), (0, cin_p - cin)))
    xp = xp.reshape(N, m2, cin_p)
    xp = jnp.pad(xp, ((0, 0), (0, m2p - m2), (0, 0))).astype(jnp.bfloat16)

    def rep(arr):   # full operand, resident across all grid steps
        return pl.BlockSpec(arr.shape, lambda n: (0,) * arr.ndim)

    out_p = pl.pallas_call(
        functools.partial(bottleneck_kernel, width=W, halo=halo),
        out_shape=jax.ShapeDtypeStruct((N, m2p, c3_p), jnp.float32),
        grid_spec=pltpu.PrefetchScalarGridSpec(
            num_scalar_prefetch=0,
            grid=(N,),
            in_specs=[
                pl.BlockSpec((1, m2p, cin_p), lambda n: (n, 0, 0)),
                rep(w1p), rep(b1p), rep(mask),
                rep(w2p), rep(b2p), rep(w3p), rep(b3p),
            ],
            out_specs=pl.BlockSpec((1, m2p, c3_p), lambda n: (n, 0, 0)),
            scratch_shapes=[pltpu.VMEM((m2p + 2 * halo, c1_p), jnp.float32)],
        ),
        compiler_params=pltpu.CompilerParams(
            dimension_semantics=("parallel",),          # batch is independent
            vmem_limit_bytes=_pick_vmem_limit_bytes()),
    )(xp, w1p, b1p, mask, w2p, b2p, w3p, b3p)

    # Drop the pixel/channel padding and go back to NCHW.
    out = out_p[:, :m2, :c3].reshape(N, H + 2, W + 2, c3)[:, 1:H + 1, 1:W + 1, :]
    return jnp.transpose(out, (0, 3, 1, 2))


def bottleneck_forward(input_list, params):
    """Mirrors BottleneckBlock.forward: [x, features, get_features, detached]."""
    x_nchw, features, get_features, detached = input_list
    out_nchw = bottleneck_pallas(x_nchw, params)
    if get_features:
        if detached:
            # The detach()'d recomputation is numerically identical in the
            # forward pass -> append a stop_gradient'ed copy instead.
            features = features + [lax.stop_gradient(out_nchw)]
        else:
            features = features + [out_nchw]
    return [out_nchw, features, get_features, detached]


# --------------------------------------------------------------------------- #
# Pure-JAX reference + test harness                                            #
# --------------------------------------------------------------------------- #
def reference_forward(x_nhwc, params):
    w1, s1, b1, w2, s2, b2, w3, s3, b3 = params
    t1 = jnp.maximum(jnp.einsum('nhwc,cd->nhwd', x_nhwc, w1) * s1 + b1, 0.0)
    t2 = lax.conv_general_dilated(
        t1, w2, window_strides=(1, 1), padding=((1, 1), (1, 1)),
        dimension_numbers=('NHWC', 'HWIO', 'NHWC'))
    t2 = jnp.maximum(t2 * s2 + b2, 0.0)
    t3 = jnp.maximum(jnp.einsum('nhwc,cd->nhwd', t2, w3) * s3 + b3, 0.0)
    return t3 + x_nhwc


def make_params(key, in_channels, out_channels, expansion=EXPANSION):
    c1 = out_channels
    c3 = out_channels * expansion
    assert c3 == in_channels, "identity shortcut requires inC == outC * expansion"
    keys = jax.random.split(key, 15)
    eps = 1e-5

    def bn_fold(kg, kb, km, kv, c):
        gamma = 1.0 + 0.1 * jax.random.normal(kg, (1, c), jnp.float32)
        beta = 0.1 * jax.random.normal(kb, (1, c), jnp.float32)
        running_mean = 0.1 * jax.random.normal(km, (1, c), jnp.float32)
        running_var = jax.random.uniform(kv, (1, c), jnp.float32, 0.5, 1.5)
        scale = gamma / jnp.sqrt(running_var + eps)
        bias = beta - running_mean * scale
        return scale, bias

    w1 = 0.2 * jax.random.normal(keys[0], (in_channels, c1), jnp.float32)
    s1, b1 = bn_fold(keys[1], keys[2], keys[3], keys[4], c1)
    w2 = 0.2 * jax.random.normal(keys[5], (3, 3, c1, c1), jnp.float32)   # HWIO
    s2, b2 = bn_fold(keys[6], keys[7], keys[8], keys[9], c1)
    w3 = 0.2 * jax.random.normal(keys[10], (c1, c3), jnp.float32)
    s3, b3 = bn_fold(keys[11], keys[12], keys[13], keys[14], c3)
    return (w1, s1, b1, w2, s2, b2, w3, s3, b3)


if __name__ == "__main__":
    key = jax.random.PRNGKey(0)
    k_x, k_p = jax.random.split(key)

    N, H, W = 2, 16, 16
    out_channels = 4
    in_channels = out_channels * EXPANSION      # 16 -> identity shortcut valid

    # PyTorch-style NCHW input
    x_nchw = jax.random.normal(k_x, (N, in_channels, H, W), jnp.float32)
    params = make_params(k_p, in_channels, out_channels)

    input_list = [x_nchw, [], True, True]
    out_list = bottleneck_forward(input_list, params)
    out = jax.block_until_ready(out_list[0])

    # correctness check vs pure-JAX (f32) reference
    x_nhwc = jnp.transpose(x_nchw, (0, 2, 3, 1))
    ref = jnp.transpose(reference_forward(x_nhwc, params), (0, 3, 1, 2))
    assert out.shape == (N, in_channels, H, W)
    assert len(out_list[1]) == 1
    max_err = float(jnp.max(jnp.abs(out - ref)))
    assert jnp.allclose(out, ref, rtol=2e-2, atol=2e-2), (
        f"mismatch vs reference, max |err| = {max_err}")
    print("KERNEL_OK")
</pallas_src>

<mosaic_0001>
module attributes {stable_mosaic.version = 11 : i64} {
  func.func @bottleneck_kernel(%arg0: i32, %arg1: memref<1x328x128xbf16, #tpu.memory_space<vmem>>, %arg2: memref<128x128xbf16, #tpu.memory_space<vmem>>, %arg3: memref<1x128xf32, #tpu.memory_space<vmem>>, %arg4: memref<328x1xf32, #tpu.memory_space<vmem>>, %arg5: memref<1152x128xbf16, #tpu.memory_space<vmem>>, %arg6: memref<1x128xf32, #tpu.memory_space<vmem>>, %arg7: memref<128x128xbf16, #tpu.memory_space<vmem>>, %arg8: memref<1x128xf32, #tpu.memory_space<vmem>>, %arg9: memref<1x328x128xf32, #tpu.memory_space<vmem>>, %arg10: memref<376x128xf32, #tpu.memory_space<vmem>>) attributes {dimension_semantics = [#tpu.dimension_semantics<parallel>], iteration_bounds = array<i64: 2>, scalar_prefetch = 0 : i64, scratch_operands = 1 : i64, tpu.core_type = #tpu.core_type<tc>, window_params = [{transform_indices = @transform_0, window_bounds = array<i64: 1, 328, 128>}, {pipeline_mode = #tpu.pipeline_mode<synchronous>, transform_indices = @transform_1, window_bounds = array<i64: 128, 128>}, {pipeline_mode = #tpu.pipeline_mode<synchronous>, transform_indices = @transform_2, window_bounds = array<i64: 1, 128>}, {pipeline_mode = #tpu.pipeline_mode<synchronous>, transform_indices = @transform_3, window_bounds = array<i64: 328, 1>}, {pipeline_mode = #tpu.pipeline_mode<synchronous>, transform_indices = @transform_4, window_bounds = array<i64: 1152, 128>}, {pipeline_mode = #tpu.pipeline_mode<synchronous>, transform_indices = @transform_5, window_bounds = array<i64: 1, 128>}, {pipeline_mode = #tpu.pipeline_mode<synchronous>, transform_indices = @transform_6, window_bounds = array<i64: 128, 128>}, {pipeline_mode = #tpu.pipeline_mode<synchronous>, transform_indices = @transform_7, window_bounds = array<i64: 1, 128>}, {transform_indices = @transform_8, window_bounds = array<i64: 1, 328, 128>}]} {
    %cst = arith.constant 0.000000e+00 : f32
    %0 = vector.broadcast %cst : f32 to vector<24x128xf32>
    %c0 = arith.constant 0 : index
    %c0_0 = arith.constant 0 : index
    %1 = vector.load %arg10[%c0, %c0_0] : memref<376x128xf32, #tpu.memory_space<vmem>>, vector<24x128xf32>
    tpu.vector_store %arg10[%c0, %c0_0], %0 {strides = array<i32>} : memref<376x128xf32, #tpu.memory_space<vmem>>, vector<24x128xf32>,
    %c352 = arith.constant 352 : index
    %c0_1 = arith.constant 0 : index
    %2 = vector.load %arg10[%c352, %c0_1] : memref<376x128xf32, #tpu.memory_space<vmem>>, vector<24x128xf32>
    tpu.vector_store %arg10[%c352, %c0_1], %0 {strides = array<i32>} : memref<376x128xf32, #tpu.memory_space<vmem>>, vector<24x128xf32>,
    %c0_2 = arith.constant 0 : index
    %c0_3 = arith.constant 0 : index
    %c0_4 = arith.constant 0 : index
    %3 = vector.load %arg1[%c0_2, %c0_3, %c0_4] : memref<1x328x128xbf16, #tpu.memory_space<vmem>>, vector<1x328x128xbf16>
    %4 = vector.shape_cast %3 : vector<1x328x128xbf16> to vector<328x128xbf16>
    %c0_5 = arith.constant 0 : index
    %c0_6 = arith.constant 0 : index
    %5 = vector.load %arg2[%c0_5, %c0_6] : memref<128x128xbf16, #tpu.memory_space<vmem>>, vector<128x128xbf16>
    %cst_7 = arith.constant dense<0.000000e+00> : vector<328x128xf32>
    %6 = tpu.matmul %4, %5, %cst_7 {dimension_numbers = #tpu.dot_dimension_numbers<[1], [0], [0], [1], [0, 0, 1, 1], [], []>} : vector<328x128xbf16>, vector<128x128xbf16>, vector<328x128xf32> -> vector<328x128xf32>
    %c0_8 = arith.constant 0 : index
    %c0_9 = arith.constant 0 : index
    %7 = vector.load %arg4[%c0_8, %c0_9] : memref<328x1xf32, #tpu.memory_space<vmem>>, vector<328x1xf32>
    %c0_10 = arith.constant 0 : index
    %c0_11 = arith.constant 0 : index
    %8 = vector.load %arg3[%c0_10, %c0_11] : memref<1x128xf32, #tpu.memory_space<vmem>>, vector<1x128xf32>
    %9 = vector.broadcast %8 : vector<1x128xf32> to vector<328x128xf32>
    %10 = arith.addf %6, %9 : vector<328x128xf32>
    %cst_12 = arith.constant 0.000000e+00 : f32
    %11 = vector.broadcast %cst_12 : f32 to vector<328x128xf32>
    %12 = arith.maximumf %10, %11 : vector<328x128xf32>
    %13 = vector.broadcast %7 : vector<328x1xf32> to vector<328x128xf32>
    %14 = arith.mulf %13, %12 : vector<328x128xf32>
    %c24 = arith.constant 24 : index
    %c0_13 = arith.constant 0 : index
    %15 = vector.load %arg10[%c24, %c0_13] : memref<376x128xf32, #tpu.memory_space<vmem>>, vector<328x128xf32>
    tpu.vector_store %arg10[%c24, %c0_13], %14 {strides = array<i32>} : memref<376x128xf32, #tpu.memory_space<vmem>>, vector<328x128xf32>,
    %c5 = arith.constant 5 : index
    %c0_14 = arith.constant 0 : index
    %16 = vector.load %arg10[%c5, %c0_14] : memref<376x128xf32, #tpu.memory_space<vmem>>, vector<328x128xf32>
    %17 = arith.truncf %16 : vector<328x128xf32> to vector<328x128xbf16>
    %c0_15 = arith.constant 0 : index
    %c0_16 = arith.constant 0 : index
    %18 = vector.load %arg5[%c0_15, %c0_16] : memref<1152x128xbf16, #tpu.memory_space<vmem>>, vector<128x128xbf16>
    %cst_17 = arith.constant dense<0.000000e+00> : vector<328x128xf32>
    %19 = tpu.matmul %17, %18, %cst_17 {dimension_numbers = #tpu.dot_dimension_numbers<[1], [0], [0], [1], [0, 0, 1, 1], [], []>} : vector<328x128xbf16>, vector<128x128xbf16>, vector<328x128xf32> -> vector<328x128xf32>
    %c6 = arith.constant 6 : index
    %c0_18 = arith.constant 0 : index
    %20 = vector.load %arg10[%c6, %c0_18] : memref<376x128xf32, #tpu.memory_space<vmem>>, vector<328x128xf32>
    %21 = arith.truncf %20 : vector<328x128xf32> to vector<328x128xbf16>
    %c128 = arith.constant 128 : index
    %c0_19 = arith.constant 0 : index
    %22 = vector.load %arg5[%c128, %c0_19] : memref<1152x128xbf16, #tpu.memory_space<vmem>>, vector<128x128xbf16>
    %cst_20 = arith.constant dense<0.000000e+00> : vector<328x128xf32>
    %23 = tpu.matmul %21, %22, %cst_20 {dimension_numbers = #tpu.dot_dimension_numbers<[1], [0], [0], [1], [0, 0, 1, 1], [], []>} : vector<328x128xbf16>, vector<128x128xbf16>, vector<328x128xf32> -> vector<328x128xf32>
    %24 = arith.addf %19, %23 : vector<328x128xf32>
    %c7 = arith.constant 7 : index
    %c0_21 = arith.constant 0 : index
    %25 = vector.load %arg10[%c7, %c0_21] : memref<376x128xf32, #tpu.memory_space<vmem>>, vector<328x128xf32>
    %26 = arith.truncf %25 : vector<328x128xf32> to vector<328x128xbf16>
    %c256 = arith.constant 256 : index
    %c0_22 = arith.constant 0 : index
    %27 = vector.load %arg5[%c256, %c0_22] : memref<1152x128xbf16, #tpu.memory_space<vmem>>, vector<128x128xbf16>
    %cst_23 = arith.constant dense<0.000000e+00> : vector<328x128xf32>
    %28 = tpu.matmul %26, %27, %cst_23 {dimension_numbers = #tpu.dot_dimension_numbers<[1], [0], [0], [1], [0, 0, 1, 1], [], []>} : vector<328x128xbf16>, vector<128x128xbf16>, vector<328x128xf32> -> vector<328x128xf32>
    %29 = arith.addf %24, %28 : vector<328x128xf32>
    %c23 = arith.constant 23 : index
    %c0_24 = arith.constant 0 : index
    %30 = vector.load %arg10[%c23, %c0_24] : memref<376x128xf32, #tpu.memory_space<vmem>>, vector<328x128xf32>
    %31 = arith.truncf %30 : vector<328x128xf32> to vector<328x128xbf16>
    %c384 = arith.constant 384 : index
    %c0_25 = arith.constant 0 : index
    %32 = vector.load %arg5[%c384, %c0_25] : memref<1152x128xbf16, #tpu.memory_space<vmem>>, vector<128x128xbf16>
    %cst_26 = arith.constant dense<0.000000e+00> : vector<328x128xf32>
    %33 = tpu.matmul %31, %32, %cst_26 {dimension_numbers = #tpu.dot_dimension_numbers<[1], [0], [0], [1], [0, 0, 1, 1], [], []>} : vector<328x128xbf16>, vector<128x128xbf16>, vector<328x128xf32> -> vector<328x128xf32>
    %34 = arith.addf %29, %33 : vector<328x128xf32>
    %c24_27 = arith.constant 24 : index
    %c0_28 = arith.constant 0 : index
    %35 = vector.load %arg10[%c24_27, %c0_28] : memref<376x128xf32, #tpu.memory_space<vmem>>, vector<328x128xf32>
    %36 = arith.truncf %35 : vector<328x128xf32> to vector<328x128xbf16>
    %c512 = arith.constant 512 : index
    %c0_29 = arith.constant 0 : index
    %37 = vector.load %arg5[%c512, %c0_29] : memref<1152x128xbf16, #tpu.memory_space<vmem>>, vector<128x128xbf16>
    %cst_30 = arith.constant dense<0.000000e+00> : vector<328x128xf32>
    %38 = tpu.matmul %36, %37, %cst_30 {dimension_numbers = #tpu.dot_dimension_numbers<[1], [0], [0], [1], [0, 0, 1, 1], [], []>} : vector<328x128xbf16>, vector<128x128xbf16>, vector<328x128xf32> -> vector<328x128xf32>
    %39 = arith.addf %34, %38 : vector<328x128xf32>
    %c25 = arith.constant 25 : index
    %c0_31 = arith.constant 0 : index
    %40 = vector.load %arg10[%c25, %c0_31] : memref<376x128xf32, #tpu.memory_space<vmem>>, vector<328x128xf32>
    %41 = arith.truncf %40 : vector<328x128xf32> to vector<328x128xbf16>
    %c640 = arith.constant 640 : index
    %c0_32 = arith.constant 0 : index
    %42 = vector.load %arg5[%c640, %c0_32] : memref<1152x128xbf16, #tpu.memory_space<vmem>>, vector<128x128xbf16>
    %cst_33 = arith.constant dense<0.000000e+00> : vector<328x128xf32>
    %43 = tpu.matmul %41, %42, %cst_33 {dimension_numbers = #tpu.dot_dimension_numbers<[1], [0], [0], [1], [0, 0, 1, 1], [], []>} : vector<328x128xbf16>, vector<128x128xbf16>, vector<328x128xf32> -> vector<328x128xf32>
    %44 = arith.addf %39, %43 : vector<328x128xf32>
    %c41 = arith.constant 41 : index
    %c0_34 = arith.constant 0 : index
    %45 = vector.load %arg10[%c41, %c0_34] : memref<376x128xf32, #tpu.memory_space<vmem>>, vector<328x128xf32>
    %46 = arith.truncf %45 : vector<328x128xf32> to vector<328x128xbf16>
    %c768 = arith.constant 768 : index
    %c0_35 = arith.constant 0 : index
    %47 = vector.load %arg5[%c768, %c0_35] : memref<1152x128xbf16, #tpu.memory_space<vmem>>, vector<128x128xbf16>
    %cst_36 = arith.constant dense<0.000000e+00> : vector<328x128xf32>
    %48 = tpu.matmul %46, %47, %cst_36 {dimension_numbers = #tpu.dot_dimension_numbers<[1], [0], [0], [1], [0, 0, 1, 1], [], []>} : vector<328x128xbf16>, vector<128x128xbf16>, vector<328x128xf32> -> vector<328x128xf32>
    %49 = arith.addf %44, %48 : vector<328x128xf32>
    %c42 = arith.constant 42 : index
    %c0_37 = arith.constant 0 : index
    %50 = vector.load %arg10[%c42, %c0_37] : memref<376x128xf32, #tpu.memory_space<vmem>>, vector<328x128xf32>
    %51 = arith.truncf %50 : vector<328x128xf32> to vector<328x128xbf16>
    %c896 = arith.constant 896 : index
    %c0_38 = arith.constant 0 : index
    %52 = vector.load %arg5[%c896, %c0_38] : memref<1152x128xbf16, #tpu.memory_space<vmem>>, vector<128x128xbf16>
    %cst_39 = arith.constant dense<0.000000e+00> : vector<328x128xf32>
    %53 = tpu.matmul %51, %52, %cst_39 {dimension_numbers = #tpu.dot_dimension_numbers<[1], [0], [0], [1], [0, 0, 1, 1], [], []>} : vector<328x128xbf16>, vector<128x128xbf16>, vector<328x128xf32> -> vector<328x128xf32>
    %54 = arith.addf %49, %53 : vector<328x128xf32>
    %c43 = arith.constant 43 : index
    %c0_40 = arith.constant 0 : index
    %55 = vector.load %arg10[%c43, %c0_40] : memref<376x128xf32, #tpu.memory_space<vmem>>, vector<328x128xf32>
    %56 = arith.truncf %55 : vector<328x128xf32> to vector<328x128xbf16>
    %c1024 = arith.constant 1024 : index
    %c0_41 = arith.constant 0 : index
    %57 = vector.load %arg5[%c1024, %c0_41] : memref<1152x128xbf16, #tpu.memory_space<vmem>>, vector<128x128xbf16>
    %cst_42 = arith.constant dense<0.000000e+00> : vector<328x128xf32>
    %58 = tpu.matmul %56, %57, %cst_42 {dimension_numbers = #tpu.dot_dimension_numbers<[1], [0], [0], [1], [0, 0, 1, 1], [], []>} : vector<328x128xbf16>, vector<128x128xbf16>, vector<328x128xf32> -> vector<328x128xf32>
    %59 = arith.addf %54, %58 : vector<328x128xf32>
    %c0_43 = arith.constant 0 : index
    %c0_44 = arith.constant 0 : index
    %60 = vector.load %arg6[%c0_43, %c0_44] : memref<1x128xf32, #tpu.memory_space<vmem>>, vector<1x128xf32>
    %61 = vector.broadcast %60 : vector<1x128xf32> to vector<328x128xf32>
    %62 = arith.addf %59, %61 : vector<328x128xf32>
    %cst_45 = arith.constant 0.000000e+00 : f32
    %63 = vector.broadcast %cst_45 : f32 to vector<328x128xf32>
    %64 = arith.maximumf %62, %63 : vector<328x128xf32>
    %65 = arith.truncf %64 : vector<328x128xf32> to vector<328x128xbf16>
    %c0_46 = arith.constant 0 : index
    %c0_47 = arith.constant 0 : index
    %66 = vector.load %arg7[%c0_46, %c0_47] : memref<128x128xbf16, #tpu.memory_space<vmem>>, vector<128x128xbf16>
    %cst_48 = arith.constant dense<0.000000e+00> : vector<328x128xf32>
    %67 = tpu.matmul %65, %66, %cst_48 {dimension_numbers = #tpu.dot_dimension_numbers<[1], [0], [0], [1], [0, 0, 1, 1], [], []>} : vector<328x128xbf16>, vector<128x128xbf16>, vector<328x128xf32> -> vector<328x128xf32>
    %c0_49 = arith.constant 0 : index
    %c0_50 = arith.constant 0 : index
    %68 = vector.load %arg8[%c0_49, %c0_50] : memref<1x128xf32, #tpu.memory_space<vmem>>, vector<1x128xf32>
    %69 = vector.broadcast %68 : vector<1x128xf32> to vector<328x128xf32>
    %70 = arith.addf %67, %69 : vector<328x128xf32>
    %cst_51 = arith.constant 0.000000e+00 : f32
    %71 = vector.broadcast %cst_51 : f32 to vector<328x128xf32>
    %72 = arith.maximumf %70, %71 : vector<328x128xf32>
    %c0_52 = arith.constant 0 : index
    %c0_53 = arith.constant 0 : index
    %c0_54 = arith.constant 0 : index
    %73 = vector.load %arg1[%c0_52, %c0_53, %c0_54] : memref<1x328x128xbf16, #tpu.memory_space<vmem>>, vector<1x328x128xbf16>
    %74 = vector.shape_cast %73 : vector<1x328x128xbf16> to vector<328x128xbf16>
    %75 = arith.extf %74 : vector<328x128xbf16> to vector<328x128xf32>
    %76 = arith.addf %72, %75 : vector<328x128xf32>
    %c0_55 = arith.constant 0 : index
    %c0_56 = arith.constant 0 : index
    %c0_57 = arith.constant 0 : index
    %77 = vector.load %arg9[%c0_55, %c0_56, %c0_57] : memref<1x328x128xf32, #tpu.memory_space<vmem>>, vector<1x328x128xf32>
    %78 = vector.shape_cast %77 : vector<1x328x128xf32> to vector<328x128xf32>
    %79 = vector.shape_cast %76 : vector<328x128xf32> to vector<1x328x128xf32>
    tpu.vector_store %arg9[%c0_55, %c0_56, %c0_57], %79 {strides = array<i32>} : memref<1x328x128xf32, #tpu.memory_space<vmem>>, vector<1x328x128xf32>,
    return
  }
  func.func @transform_0(%arg0: i32) -> (i32, i32, i32) {
    %c0_i32 = arith.constant 0 : i32
    %c0_i32_0 = arith.constant 0 : i32
    %c0_i32_1 = arith.constant 0 : i32
    return %arg0, %c0_i32, %c0_i32_0 : i32, i32, i32
  }
  func.func @transform_1(%arg0: i32) -> (i32, i32) {
    %c0_i32 = arith.constant 0 : i32
    %c0_i32_0 = arith.constant 0 : i32
    %c0_i32_1 = arith.constant 0 : i32
    return %c0_i32, %c0_i32_0 : i32, i32
  }
  func.func @transform_2(%arg0: i32) -> (i32, i32) {
    %c0_i32 = arith.constant 0 : i32
    %c0_i32_0 = arith.constant 0 : i32
    %c0_i32_1 = arith.constant 0 : i32
    return %c0_i32, %c0_i32_0 : i32, i32
  }
  func.func @transform_3(%arg0: i32) -> (i32, i32) {
    %c0_i32 = arith.constant 0 : i32
    %c0_i32_0 = arith.constant 0 : i32
    %c0_i32_1 = arith.constant 0 : i32
    return %c0_i32, %c0_i32_0 : i32, i32
  }
  func.func @transform_4(%arg0: i32) -> (i32, i32) {
    %c0_i32 = arith.constant 0 : i32
    %c0_i32_0 = arith.constant 0 : i32
    %c0_i32_1 = arith.constant 0 : i32
    return %c0_i32, %c0_i32_0 : i32, i32
  }
  func.func @transform_5(%arg0: i32) -> (i32, i32) {
    %c0_i32 = arith.constant 0 : i32
    %c0_i32_0 = arith.constant 0 : i32
    %c0_i32_1 = arith.constant 0 : i32
    return %c0_i32, %c0_i32_0 : i32, i32
  }
  func.func @transform_6(%arg0: i32) -> (i32, i32) {
    %c0_i32 = arith.constant 0 : i32
    %c0_i32_0 = arith.constant 0 : i32
    %c0_i32_1 = arith.constant 0 : i32
    return %c0_i32, %c0_i32_0 : i32, i32
  }
  func.func @transform_7(%arg0: i32) -> (i32, i32) {
    %c0_i32 = arith.constant 0 : i32
    %c0_i32_0 = arith.constant 0 : i32
    %c0_i32_1 = arith.constant 0 : i32
    return %c0_i32, %c0_i32_0 : i32, i32
  }
  func.func @transform_8(%arg0: i32) -> (i32, i32, i32) {
    %c0_i32 = arith.constant 0 : i32
    %c0_i32_0 = arith.constant 0 : i32
    %c0_i32_1 = arith.constant 0 : i32
    return %arg0, %c0_i32, %c0_i32_0 : i32, i32, i32
  }
}

</mosaic_0001>

<llo_original>
// kernel: tpu_custom_call.1
$region0: #{tpu_custom_call.1}
  #allocation0 [shape = 'u32[]', space=smem, size = 0x4, offset = 0x4, fixed_abs, tag = 'smem constant byte address 0x4 - core index']
  #allocation1 [shape = 'u32[144,128]{1,0:T(1,128)}', space=vmem, size = 0x12000, scoped, tag = 'internal scratch']
  #allocation2 [shape = 'f32[376,128]{1,0:T(8,128)}', space=vmem, size = 0x2f000, scoped, tag = 'scratch operand']
  %s0 = inlined_call_operand.hbm [shape: bf16[2,328,128], index: 0, kind: input, shape index: {}]
  %s1 = inlined_call_operand.hbm [shape: bf16[128,128], index: 1, kind: input, shape index: {}]
  %s2 = inlined_call_operand.hbm [shape: f32[1,128], index: 2, kind: input, shape index: {}]
  %s3 = inlined_call_operand.hbm [shape: f32[328,1], index: 3, kind: input, shape index: {}]
  %s4 = inlined_call_operand.hbm [shape: bf16[1152,128], index: 4, kind: input, shape index: {}]
  %s5 = inlined_call_operand.hbm [shape: f32[1,128], index: 5, kind: input, shape index: {}]
  %s6 = inlined_call_operand.hbm [shape: bf16[128,128], index: 6, kind: input, shape index: {}]
  %s7 = inlined_call_operand.hbm [shape: f32[1,128], index: 7, kind: input, shape index: {}]
  %s8 = inlined_call_operand.hbm [shape: f32[2,328,128], index: 8, kind: output, shape index: {}]
  %s9 = sld [smem:[#allocation0]]
  $region97: #{tpu_custom_call.1} parent=0
    _
  %s11 = ssub.s32 1, %s9
  %s12 = scalar_select 0, %s11, %s9
  $region1: #{tpu_custom_call.1} parent=0
    #allocation3 [shape = 'u8[167936]{0}', space=vmem, size = 0x29000, scoped, tag = 'input window, operand 0']
    #allocation4 [shape = 's32[2]{0}', space=sflag, size = 0x8, scoped, tag = 'scoped memory for tpu_custom_call.1']
    #allocation5 [shape = 's32[2]{0}', space=sflag, size = 0x8, scoped, tag = 'scoped memory for tpu_custom_call.1']
    #allocation6 [shape = 'u8[32768]{0}', space=vmem, size = 0x8000, scoped, tag = 'input window, operand 1, single buffered']
    #allocation7 [shape = 's32[1]{0}', space=sflag, size = 0x4, scoped, tag = 'scoped memory for tpu_custom_call.1']
    #allocation8 [shape = 'u8[512]{0}', space=vmem, size = 0x400, scoped, tag = 'input window, operand 2, single buffered']
    #allocation9 [shape = 'u8[167936]{0}', space=vmem, size = 0x29000, scoped, tag = 'input window, operand 3, single buffered']
    #allocation10 [shape = 's32[1]{0}', space=sflag, size = 0x4, scoped, tag = 'scoped memory for tpu_custom_call.1']
    #allocation11 [shape = 'u8[294912]{0}', space=vmem, size = 0x48000, scoped, tag = 'input window, operand 4, single buffered']
    #allocation12 [shape = 'u8[512]{0}', space=vmem, size = 0x400, scoped, tag = 'input window, operand 5, single buffered']
    #allocation13 [shape = 's32[1]{0}', space=sflag, size = 0x4, scoped, tag = 'scoped memory for tpu_custom_call.1']
    #allocation14 [shape = 'u8[32768]{0}', space=vmem, size = 0x8000, scoped, tag = 'input window, operand 6, single buffered']
    #allocation15 [shape = 'u8[512]{0}', space=vmem, size = 0x400, scoped, tag = 'input window, operand 7, single buffered']
    #allocation16 [shape = 's32[1]{0}', space=sflag, size = 0x4, scoped, tag = 'scoped memory for tpu_custom_call.1']
    #allocation17 [shape = 'u8[335872]{0}', space=vmem, size = 0x52000, scoped, tag = 'output window, operand 0']
    %13 = vsyncpa [#allocation4], 0
    %s14 = scalar_lea.sflag [#allocation4], 1
    %15 = vsyncpa %s14, 0
    %16 = vsyncpa [#allocation7], 0
    %17 = vsyncpa [#allocation10], 0
    %18 = vsyncpa [#allocation13], 0
    %19 = vsyncpa [#allocation16], 0
    %20 = vsyncpa [#allocation5], 0
    %s21 = scalar_lea.sflag [#allocation5], 1
    %22 = vsyncpa %s21, 0
    loop: start=0, step=1, limit=4
    $region2: #{tpu_custom_call.1} parent=1 // loop_pre_header
      _
    $region3: #{tpu_custom_call.1} parent=1 // loop_header
      %s24 = sphi 0, %s28
      %p25 = scmp.ge.s32.totalorder %s24, 4
      %s34 = sphi 0, %s36
      %s37 = sphi 0, %s34
      %s38 = sphi 0, %s37
      %s54 = sphi 0, %s38
      %s58 = sphi 0, %s58
      %s60 = sphi 0, %s58
      %s61 = sphi 0, %s60
      %s75 = sphi 0, %s61
      %s79 = sphi 0, %s79
      %s81 = sphi 0, %s79
      %s82 = sphi 0, %s81
      %s96 = sphi 0, %s82
      %s100 = sphi 0, %s100
      %s102 = sphi 0, %s100
      %s103 = sphi 0, %s102
      %s117 = sphi 0, %s103
      %s121 = sphi 0, %s121
      %s123 = sphi 0, %s121
      %s124 = sphi 0, %s123
      %s138 = sphi 0, %s124
      %s142 = sphi 0, %s142
      %s144 = sphi 0, %s142
      %s145 = sphi 0, %s144
      %s159 = sphi 0, %s145
      %s163 = sphi 0, %s163
      %s165 = sphi 0, %s163
      %s166 = sphi 0, %s165
      %s180 = sphi 0, %s166
      %s184 = sphi 0, %s184
      %s186 = sphi 0, %s184
      %s187 = sphi 0, %s186
      %s201 = sphi 0, %s187
      %s207 = sphi 0, %s209
      %s210 = sphi 0, %s207
      %s211 = sphi 0, %s210
      %s227 = sphi 0, %s211
    $region4: #{tpu_custom_call.1} parent=1 // loop_header_branch
      %27 = sbr.rel (%p25) target = $region8
    $region5: #{tpu_custom_call.1} parent=1 // loop_body
      %s29 = ssub.s32 %s24, 1
      %s30 = ssub.s32 %s24, 2
      %s31 = sadd.s32 %s24, 1
      %s32 = ssub.s32 %s24, %s31
      %p33 = scmp.eq.s32.totalorder %s32, 0
      %s35 = sadd.s32 %s34, 1
      %s36 = scalar_select %p33, %s34, %s35
      %p39 = pneg %p33
      %p40 = scmp.eq.s32.totalorder %s24, 1
      %p41 = por %p39, %p40
      %p42 = scmp.ne.s32.totalorder %s34, %s37
      %p43 = scmp.eq.s32.totalorder %s24, 0
      %p44 = por %p42, %p43
      %p45 = scmp.ne.s32.totalorder %s34, %s37
      %p46 = scmp.eq.s32.totalorder %s29, 1
      %p47 = por %p45, %p46
      %p48 = scmp.ne.s32.totalorder %s37, %s38
      %p49 = scmp.eq.s32.totalorder %s29, 0
      %p50 = por %p48, %p49
      %p51 = scmp.ne.s32.totalorder %s37, %s38
      %p52 = scmp.eq.s32.totalorder %s30, 1
      %p53 = por %p51, %p52
      %p55 = scmp.ne.s32.totalorder %s38, %s54
      %p56 = scmp.eq.s32.totalorder %s30, 0
      %p57 = por %p55, %p56
      %s59 = sadd.s32 %s58, 1
      %p62 = scmp.eq.s32.totalorder %s24, 1
      %p63 = scmp.ne.s32.totalorder %s58, %s60
      %p64 = scmp.eq.s32.totalorder %s24, 0
      %p65 = por %p63, %p64
      %p66 = scmp.ne.s32.totalorder %s58, %s60
      %p67 = scmp.eq.s32.totalorder %s29, 1
      %p68 = por %p66, %p67
      %p69 = scmp.ne.s32.totalorder %s60, %s61
      %p70 = scmp.eq.s32.totalorder %s29, 0
      %p71 = por %p69, %p70
      %p72 = scmp.ne.s32.totalorder %s60, %s61
      %p73 = scmp.eq.s32.totalorder %s30, 1
      %p74 = por %p72, %p73
      %p76 = scmp.ne.s32.totalorder %s61, %s75
      %p77 = scmp.eq.s32.totalorder %s30, 0
      %p78 = por %p76, %p77
      %s80 = sadd.s32 %s79, 1
      %p83 = scmp.eq.s32.totalorder %s24, 1
      %p84 = scmp.ne.s32.totalorder %s79, %s81
      %p85 = scmp.eq.s32.totalorder %s24, 0
      %p86 = por %p84, %p85
      %p87 = scmp.ne.s32.totalorder %s79, %s81
      %p88 = scmp.eq.s32.totalorder %s29, 1
      %p89 = por %p87, %p88
      %p90 = scmp.ne.s32.totalorder %s81, %s82
      %p91 = scmp.eq.s32.totalorder %s29, 0
      %p92 = por %p90, %p91
      %p93 = scmp.ne.s32.totalorder %s81, %s82
      %p94 = scmp.eq.s32.totalorder %s30, 1
      %p95 = por %p93, %p94
      %p97 = scmp.ne.s32.totalorder %s82, %s96
      %p98 = scmp.eq.s32.totalorder %s30, 0
      %p99 = por %p97, %p98
      %s101 = sadd.s32 %s100, 1
      %p104 = scmp.eq.s32.totalorder %s24, 1
      %p105 = scmp.ne.s32.totalorder %s100, %s102
      %p106 = scmp.eq.s32.totalorder %s24, 0
      %p107 = por %p105, %p106
      %p108 = scmp.ne.s32.totalorder %s100, %s102
      %p109 = scmp.eq.s32.totalorder %s29, 1
      %p110 = por %p108, %p109
      %p111 = scmp.ne.s32.totalorder %s102, %s103
      %p112 = scmp.eq.s32.totalorder %s29, 0
      %p113 = por %p111, %p112
      %p114 = scmp.ne.s32.totalorder %s102, %s103
      %p115 = scmp.eq.s32.totalorder %s30, 1
      %p116 = por %p114, %p115
      %p118 = scmp.ne.s32.totalorder %s103, %s117
      %p119 = scmp.eq.s32.totalorder %s30, 0
      %p120 = por %p118, %p119
      %s122 = sadd.s32 %s121, 1
      %p125 = scmp.eq.s32.totalorder %s24, 1
      %p126 = scmp.ne.s32.totalorder %s121, %s123
      %p127 = scmp.eq.s32.totalorder %s24, 0
      %p128 = por %p126, %p127
      %p129 = scmp.ne.s32.totalorder %s121, %s123
      %p130 = scmp.eq.s32.totalorder %s29, 1
      %p131 = por %p129, %p130
      %p132 = scmp.ne.s32.totalorder %s123, %s124
      %p133 = scmp.eq.s32.totalorder %s29, 0
      %p134 = por %p132, %p133
      %p135 = scmp.ne.s32.totalorder %s123, %s124
      %p136 = scmp.eq.s32.totalorder %s30, 1
      %p137 = por %p135, %p136
      %p139 = scmp.ne.s32.totalorder %s124, %s138
      %p140 = scmp.eq.s32.totalorder %s30, 0
      %p141 = por %p139, %p140
      %s143 = sadd.s32 %s142, 1
      %p146 = scmp.eq.s32.totalorder %s24, 1
      %p147 = scmp.ne.s32.totalorder %s142, %s144
      %p148 = scmp.eq.s32.totalorder %s24, 0
      %p149 = por %p147, %p148
      %p150 = scmp.ne.s32.totalorder %s142, %s144
      %p151 = scmp.eq.s32.totalorder %s29, 1
      %p152 = por %p150, %p151
      %p153 = scmp.ne.s32.totalorder %s144, %s145
      %p154 = scmp.eq.s32.totalorder %s29, 0
      %p155 = por %p153, %p154
      %p156 = scmp.ne.s32.totalorder %s144, %s145
      %p157 = scmp.eq.s32.totalorder %s30, 1
      %p158 = por %p156, %p157
      %p160 = scmp.ne.s32.totalorder %s145, %s159
      %p161 = scmp.eq.s32.totalorder %s30, 0
      %p162 = por %p160, %p161
      %s164 = sadd.s32 %s163, 1
      %p167 = scmp.eq.s32.totalorder %s24, 1
      %p168 = scmp.ne.s32.totalorder %s163, %s165
      %p169 = scmp.eq.s32.totalorder %s24, 0
      %p170 = por %p168, %p169
      %p171 = scmp.ne.s32.totalorder %s163, %s165
      %p172 = scmp.eq.s32.totalorder %s29, 1
      %p173 = por %p171, %p172
      %p174 = scmp.ne.s32.totalorder %s165, %s166
      %p175 = scmp.eq.s32.totalorder %s29, 0
      %p176 = por %p174, %p175
      %p177 = scmp.ne.s32.totalorder %s165, %s166
      %p178 = scmp.eq.s32.totalorder %s30, 1
      %p179 = por %p177, %p178
      %p181 = scmp.ne.s32.totalorder %s166, %s180
      %p182 = scmp.eq.s32.totalorder %s30, 0
      %p183 = por %p181, %p182
      %s185 = sadd.s32 %s184, 1
      %p188 = scmp.eq.s32.totalorder %s24, 1
      %p189 = scmp.ne.s32.totalorder %s184, %s186
      %p190 = scmp.eq.s32.totalorder %s24, 0
      %p191 = por %p189, %p190
      %p192 = scmp.ne.s32.totalorder %s184, %s186
      %p193 = scmp.eq.s32.totalorder %s29, 1
      %p194 = por %p192, %p193
      %p195 = scmp.ne.s32.totalorder %s186, %s187
      %p196 = scmp.eq.s32.totalorder %s29, 0
      %p197 = por %p195, %p196
      %p198 = scmp.ne.s32.totalorder %s186, %s187
      %p199 = scmp.eq.s32.totalorder %s30, 1
      %p200 = por %p198, %p199
      %p202 = scmp.ne.s32.totalorder %s187, %s201
      %p203 = scmp.eq.s32.totalorder %s30, 0
      %p204 = por %p202, %p203
      %s205 = ssub.s32 %s24, %s31
      %p206 = scmp.eq.s32.totalorder %s205, 0
      %s208 = sadd.s32 %s207, 1
      %s209 = scalar_select %p206, %s207, %s208
      %p212 = pneg %p206
      %p213 = scmp.eq.s32.totalorder %s24, 1
      %p214 = por %p212, %p213
      %p215 = scmp.ne.s32.totalorder %s207, %s210
      %p216 = scmp.eq.s32.totalorder %s24, 0
      %p217 = por %p215, %p216
      %p218 = scmp.ne.s32.totalorder %s207, %s210
      %p219 = scmp.eq.s32.totalorder %s29, 1
      %p220 = por %p218, %p219
      %p221 = scmp.ne.s32.totalorder %s210, %s211
      %p222 = scmp.eq.s32.totalorder %s29, 0
      %p223 = por %p221, %p222
      %p224 = scmp.ne.s32.totalorder %s210, %s211
      %p225 = scmp.eq.s32.totalorder %s30, 1
      %p226 = por %p224, %p225
      %p228 = scmp.ne.s32.totalorder %s211, %s227
      %p229 = scmp.eq.s32.totalorder %s30, 0
      %p230 = por %p228, %p229
      %p231 = scmp.le.s32.totalorder 1, %s24
      %p232 = scmp.lt.s32.totalorder %s24, 3
      %p233 = pnand %p231, %p232
      %p234 = pneg %p233
      // Predicated region
      $region9: #{tpu_custom_call.1} parent=5 // pred_check
        _
      $region10: #{tpu_custom_call.1} parent=5 // pred_check_branch
        %236 = sbr.rel (%p233) target = $region12
      $region11: #{tpu_custom_call.1} parent=5 // pred_region
        %s237 = ssub.s32 %s24, 1
        // Predicated region
        $region13: #{tpu_custom_call.1} parent=11 // pred_check
          %p238 = pneg %p71
        $region14: #{tpu_custom_call.1} parent=11 // pred_check_branch
          %240 = sbr.rel (%p238) target = $region16
        $region15: #{tpu_custom_call.1} parent=11 // pred_region
          %s242 = ssub.s32 1024, 1024
          %243 = vsyncadd [#allocation7], %s242
          %s244 = sshll.u32 [#allocation6], 4
          %s245 = int_to_ptr.vmem [resolvable:$true] %s244
          %250 = dma.hbm_to_vmem [thread:$0]  %s1, 1024, %s245, [#allocation7], 64, 64, 4
        $region16: #{tpu_custom_call.1} parent=11 // pred_fallthru
          _
        // Predicated region
        $region17: #{tpu_custom_call.1} parent=11 // pred_check
          %p251 = pneg %p92
        $region18: #{tpu_custom_call.1} parent=11 // pred_check_branch
          %253 = sbr.rel (%p251) target = $region20
        $region19: #{tpu_custom_call.1} parent=11 // pred_region
          %s255 = ssub.s32 16, 16
          %256 = vsyncadd [#allocation7], %s255
          %s258 = sshll.u32 [#allocation8], 4
          %s259 = int_to_ptr.vmem [resolvable:$true] %s258
          %261 = dma.hbm_to_vmem [thread:$0]  %s2, 16, %s259, [#allocation7]
        $region20: #{tpu_custom_call.1} parent=11 // pred_fallthru
          _
        // Predicated region
        $region21: #{tpu_custom_call.1} parent=11 // pred_check
          %p262 = pneg %p113
        $region22: #{tpu_custom_call.1} parent=11 // pred_check_branch
          %264 = sbr.rel (%p262) target = $region24
        $region23: #{tpu_custom_call.1} parent=11 // pred_region
          %s266 = ssub.s32 5248, 5248
          %267 = vsyncadd [#allocation10], %s266
          %s268 = sshll.u32 [#allocation9], 4
          %s269 = int_to_ptr.vmem [resolvable:$true] %s268
          %274 = dma.hbm_to_vmem [thread:$0]  %s3, 5248, %s269, [#allocation10], 128, 128, 8
        $region24: #{tpu_custom_call.1} parent=11 // pred_fallthru
          _
        // Predicated region
        $region25: #{tpu_custom_call.1} parent=11 // pred_check
          %p275 = pneg %p134
        $region26: #{tpu_custom_call.1} parent=11 // pred_check_branch
          %277 = sbr.rel (%p275) target = $region28
        $region27: #{tpu_custom_call.1} parent=11 // pred_region
          %s279 = ssub.s32 9216, 9216
          %280 = vsyncadd [#allocation10], %s279
          %s281 = sshll.u32 [#allocation11], 4
          %s282 = int_to_ptr.vmem [resolvable:$true] %s281
          %287 = dma.hbm_to_vmem [thread:$0]  %s4, 9216, %s282, [#allocation10], 64, 64, 4
        $region28: #{tpu_custom_call.1} parent=11 // pred_fallthru
          _
        // Predicated region
        $region29: #{tpu_custom_call.1} parent=11 // pred_check
          %p288 = pneg %p155
        $region30: #{tpu_custom_call.1} parent=11 // pred_check_branch
          %290 = sbr.rel (%p288) target = $region32
        $region31: #{tpu_custom_call.1} parent=11 // pred_region
          %s292 = ssub.s32 16, 16
          %293 = vsyncadd [#allocation13], %s292
          %s295 = sshll.u32 [#allocation12], 4
          %s296 = int_to_ptr.vmem [resolvable:$true] %s295
          %298 = dma.hbm_to_vmem [thread:$0]  %s5, 16, %s296, [#allocation13]
        $region32: #{tpu_custom_call.1} parent=11 // pred_fallthru
          _
        // Predicated region
        $region33: #{tpu_custom_call.1} parent=11 // pred_check
          %p299 = pneg %p176
        $region34: #{tpu_custom_call.1} parent=11 // pred_check_branch
          %301 = sbr.rel (%p299) target = $region36
        $region35: #{tpu_custom_call.1} parent=11 // pred_region
          %s303 = ssub.s32 1024, 1024
          %304 = vsyncadd [#allocation13], %s303
          %s305 = sshll.u32 [#allocation14], 4
          %s306 = int_to_ptr.vmem [resolvable:$true] %s305
          %311 = dma.hbm_to_vmem [thread:$0]  %s6, 1024, %s306, [#allocation13], 64, 64, 4
        $region36: #{tpu_custom_call.1} parent=11 // pred_fallthru
          _
        // Predicated region
        $region37: #{tpu_custom_call.1} parent=11 // pred_check
          %p312 = pneg %p197
        $region38: #{tpu_custom_call.1} parent=11 // pred_check_branch
          %314 = sbr.rel (%p312) target = $region40
        $region39: #{tpu_custom_call.1} parent=11 // pred_region
          %s316 = ssub.s32 16, 16
          %317 = vsyncadd [#allocation16], %s316
          %s319 = sshll.u32 [#allocation15], 4
          %s320 = int_to_ptr.vmem [resolvable:$true] %s319
          %322 = dma.hbm_to_vmem [thread:$0]  %s7, 16, %s320, [#allocation16]
        $region40: #{tpu_custom_call.1} parent=11 // pred_fallthru
          _
      $region12: #{tpu_custom_call.1} parent=5 // pred_fallthru
        _
      %p323 = scmp.lt.s32.totalorder %s24, 2
      // Predicated region
      $region41: #{tpu_custom_call.1} parent=5 // pred_check
        %p324 = pneg %p323
      $region42: #{tpu_custom_call.1} parent=5 // pred_check_branch
        %326 = sbr.rel (%p324) target = $region44
      $region43: #{tpu_custom_call.1} parent=5 // pred_region
        // Predicated region
        $region45: #{tpu_custom_call.1} parent=43 // pred_check
          %p327 = pneg %p44
        $region46: #{tpu_custom_call.1} parent=43 // pred_check_branch
          %329 = sbr.rel (%p327) target = $region48
        $region47: #{tpu_custom_call.1} parent=43 // pred_region
          %s330 = sand.u32 %s34, 1
          %s331 = scalar_lea.sflag [#allocation4], %s330
          %s332 = sand.u32 %s34, 1
          %s333 = smul.addr %s332, 164
          %s334 = scalar_lea.vmem [#allocation3], %s333
          %s336 = ssub.s32 2624, 2624
          %337 = vsyncadd %s331, %s336
          %s338 = smul.addr %s24, 41
          %s339 = smul.addr %s338, 64
          %s340 = scalar_lea.hbm %s0, %s339
          %s341 = sshll.u32 %s334, 4
          %s342 = int_to_ptr.vmem [resolvable:$true] %s341
          %347 = dma.hbm_to_vmem [thread:$0]  %s340, 2624, %s342, %s331, 64, 64, 4
        $region48: #{tpu_custom_call.1} parent=43 // pred_fallthru
          _
      $region44: #{tpu_custom_call.1} parent=5 // pred_fallthru
        _
      %p348 = scmp.le.s32.totalorder 1, %s24
      %p349 = scmp.lt.s32.totalorder %s24, 3
      %p350 = pnand %p348, %p349
      %p351 = pneg %p350
      // Predicated region
      $region49: #{tpu_custom_call.1} parent=5 // pred_check
        _
      $region50: #{tpu_custom_call.1} parent=5 // pred_check_branch
        %353 = sbr.rel (%p350) target = $region52
      $region51: #{tpu_custom_call.1} parent=5 // pred_region
        %s354 = ssub.s32 %s24, 1
        %s355 = sand.u32 %s37, 1
        %s356 = scalar_lea.sflag [#allocation4], %s355
        %s357 = sand.u32 %s37, 1
        %s358 = smul.addr %s357, 164
        %s359 = scalar_lea.vmem [#allocation3], %s358
        // Predicated region
        $region53: #{tpu_custom_call.1} parent=51 // pred_check
          %p360 = pneg %p50
        $region54: #{tpu_custom_call.1} parent=51 // pred_check_branch
          %362 = sbr.rel (%p360) target = $region56
        $region55: #{tpu_custom_call.1} parent=51 // pred_region
          %363 = dma.done %s356, 2624
        $region56: #{tpu_custom_call.1} parent=51 // pred_fallthru
          _
        // Predicated region
        $region57: #{tpu_custom_call.1} parent=51 // pred_check
          %p364 = pneg %p71
        $region58: #{tpu_custom_call.1} parent=51 // pred_check_branch
          %366 = sbr.rel (%p364) target = $region60
        $region59: #{tpu_custom_call.1} parent=51 // pred_region
          %367 = dma.done [#allocation7], 1024
        $region60: #{tpu_custom_call.1} parent=51 // pred_fallthru
          _
        // Predicated region
        $region61: #{tpu_custom_call.1} parent=51 // pred_check
          %p368 = pneg %p92
        $region62: #{tpu_custom_call.1} parent=51 // pred_check_branch
          %370 = sbr.rel (%p368) target = $region64
        $region63: #{tpu_custom_call.1} parent=51 // pred_region
          %371 = dma.done [#allocation7], 16
        $region64: #{tpu_custom_call.1} parent=51 // pred_fallthru
          _
        // Predicated region
        $region65: #{tpu_custom_call.1} parent=51 // pred_check
          %p372 = pneg %p113
        $region66: #{tpu_custom_call.1} parent=51 // pred_check_branch
          %374 = sbr.rel (%p372) target = $region68
        $region67: #{tpu_custom_call.1} parent=51 // pred_region
          %375 = dma.done [#allocation10], 5248
        $region68: #{tpu_custom_call.1} parent=51 // pred_fallthru
          _
        // Predicated region
        $region69: #{tpu_custom_call.1} parent=51 // pred_check
          %p376 = pneg %p134
        $region70: #{tpu_custom_call.1} parent=51 // pred_check_branch
          %378 = sbr.rel (%p376) target = $region72
        $region71: #{tpu_custom_call.1} parent=51 // pred_region
          %379 = dma.done [#allocation10], 9216
        $region72: #{tpu_custom_call.1} parent=51 // pred_fallthru
          _
        // Predicated region
        $region73: #{tpu_custom_call.1} parent=51 // pred_check
          %p380 = pneg %p155
        $region74: #{tpu_custom_call.1} parent=51 // pred_check_branch
          %382 = sbr.rel (%p380) target = $region76
        $region75: #{tpu_custom_call.1} parent=51 // pred_region
          %383 = dma.done [#allocation13], 16
        $region76: #{tpu_custom_call.1} parent=51 // pred_fallthru
          _
        // Predicated region
        $region77: #{tpu_custom_call.1} parent=51 // pred_check
          %p384 = pneg %p176
        $region78: #{tpu_custom_call.1} parent=51 // pred_check_branch
          %386 = sbr.rel (%p384) target = $region80
        $region79: #{tpu_custom_call.1} parent=51 // pred_region
          %387 = dma.done [#allocation13], 1024
        $region80: #{tpu_custom_call.1} parent=51 // pred_fallthru
          _
        // Predicated region
        $region81: #{tpu_custom_call.1} parent=51 // pred_check
          %p388 = pneg %p197
        $region82: #{tpu_custom_call.1} parent=51 // pred_check_branch
          %390 = sbr.rel (%p388) target = $region84
        $region83: #{tpu_custom_call.1} parent=51 // pred_region
          %391 = dma.done [#allocation16], 16
        $region84: #{tpu_custom_call.1} parent=51 // pred_fallthru
          _
        %s392 = sand.u32 %s37, 1
        %s393 = scalar_lea.sflag [#allocation4], %s392
        %s394 = sand.u32 %s37, 1
        %s395 = smul.addr %s394, 164
        %s396 = scalar_lea.vmem [#allocation3], %s395
        %p397 = pneg %p50
        %p398 = pneg %p47
        %p399 = pneg %p71
        %p400 = pneg %p68
        %p401 = pneg %p92
        %p402 = pneg %p89
        %p403 = pneg %p113
        %p404 = pneg %p110
        %p405 = pneg %p134
        %p406 = pneg %p131
        %p407 = pneg %p155
        %p408 = pneg %p152
        %p409 = pneg %p176
        %p410 = pneg %p173
        %p411 = pneg %p197
        %p412 = pneg %p194
        %p413 = pneg %p223
        %p414 = pneg %p220
        %s415 = sand.u32 %s210, 1
        %s416 = scalar_lea.sflag [#allocation5], %s415
        %s417 = sand.u32 %s210, 1
        %s418 = smul.addr %s417, 328
        %s419 = scalar_lea.vmem [#allocation17], %s418
        %421 = vst [vmem:[#allocation2] sm:$0xff] 0.0
        %422 = vst [vmem:[#allocation2 + $0x8] sm:$0xff] 0.0
        %423 = vst [vmem:[#allocation2 + $0x10] sm:$0xff] 0.0
        %424 = vst [vmem:[#allocation2 + $0x160] sm:$0xff] 0.0
        %425 = vst [vmem:[#allocation2 + $0x168] sm:$0xff] 0.0
        %426 = vst [vmem:[#allocation2 + $0x170] sm:$0xff] 0.0
        %v427 = vld [vmem:[%s359] sm:$0xf]
        %v428 = vld [vmem:[%s359 + $0x4] sm:$0xf]
        %v429 = vld [vmem:[%s359 + $0x8] sm:$0xf]
        %v430 = vld [vmem:[%s359 + $0xc] sm:$0xf]
        %v431 = vld [vmem:[%s359 + $0x10] sm:$0xf]
        %v432 = vld [vmem:[%s359 + $0x14] sm:$0xf]
        %v433 = vld [vmem:[%s359 + $0x18] sm:$0xf]
        %v434 = vld [vmem:[%s359 + $0x1c] sm:$0xf]
        %v435 = vld [vmem:[%s359 + $0x20] sm:$0xf]
        %v436 = vld [vmem:[%s359 + $0x24] sm:$0xf]
        %v437 = vld [vmem:[%s359 + $0x28] sm:$0xf]
        %v438 = vld [vmem:[%s359 + $0x2c] sm:$0xf]
        %v439 = vld [vmem:[%s359 + $0x30] sm:$0xf]
        %v440 = vld [vmem:[%s359 + $0x34] sm:$0xf]
        %v441 = vld [vmem:[%s359 + $0x38] sm:$0xf]
        %v442 = vld [vmem:[%s359 + $0x3c] sm:$0xf]
        %v443 = vld [vmem:[%s359 + $0x40] sm:$0xf]
        %v444 = vld [vmem:[%s359 + $0x44] sm:$0xf]
        %v445 = vld [vmem:[%s359 + $0x48] sm:$0xf]
        %v446 = vld [vmem:[%s359 + $0x4c] sm:$0xf]
        %v447 = vld [vmem:[%s359 + $0x50] sm:$0xf]
        %v448 = vld [vmem:[%s359 + $0x54] sm:$0xf]
        %v449 = vld [vmem:[%s359 + $0x58] sm:$0xf]
        %v450 = vld [vmem:[%s359 + $0x5c] sm:$0xf]
        %v451 = vld [vmem:[%s359 + $0x60] sm:$0xf]
        %v452 = vld [vmem:[%s359 + $0x64] sm:$0xf]
        %v453 = vld [vmem:[%s359 + $0x68] sm:$0xf]
        %v454 = vld [vmem:[%s359 + $0x6c] sm:$0xf]
        %v455 = vld [vmem:[%s359 + $0x70] sm:$0xf]
        %v456 = vld [vmem:[%s359 + $0x74] sm:$0xf]
        %v457 = vld [vmem:[%s359 + $0x78] sm:$0xf]
        %v458 = vld [vmem:[%s359 + $0x7c] sm:$0xf]
        %v459 = vld [vmem:[%s359 + $0x80] sm:$0xf]
        %v460 = vld [vmem:[%s359 + $0x84] sm:$0xf]
        %v461 = vld [vmem:[%s359 + $0x88] sm:$0xf]
        %v462 = vld [vmem:[%s359 + $0x8c] sm:$0xf]
        %v463 = vld [vmem:[%s359 + $0x90] sm:$0xf]
        %v464 = vld [vmem:[%s359 + $0x94] sm:$0xf]
        %v465 = vld [vmem:[%s359 + $0x98] sm:$0xf]
        %v466 = vld [vmem:[%s359 + $0x9c] sm:$0xf]
        %v467 = vld [vmem:[%s359 + $0xa0] sm:$0xf]
        %v468 = vld [vmem:[#allocation6] sm:$0xf]
        %v469 = vld [vmem:[#allocation6 + $0x4] sm:$0xf]
        %v470 = vld [vmem:[#allocation6 + $0x8] sm:$0xf]
        %v471 = vld [vmem:[#allocation6 + $0xc] sm:$0xf]
        %v472 = vld [vmem:[#allocation6 + $0x10] sm:$0xf]
        %v473 = vld [vmem:[#allocation6 + $0x14] sm:$0xf]
        %v474 = vld [vmem:[#allocation6 + $0x18] sm:$0xf]
        %v475 = vld [vmem:[#allocation6 + $0x1c] sm:$0xf]
        %v476 = vld [vmem:[#allocation6 + $0x20] sm:$0xf]
        %v477 = vld [vmem:[#allocation6 + $0x24] sm:$0xf]
        %v478 = vld [vmem:[#allocation6 + $0x28] sm:$0xf]
        %v479 = vld [vmem:[#allocation6 + $0x2c] sm:$0xf]
        %v480 = vld [vmem:[#allocation6 + $0x30] sm:$0xf]
        %v481 = vld [vmem:[#allocation6 + $0x34] sm:$0xf]
        %v482 = vld [vmem:[#allocation6 + $0x38] sm:$0xf]
        %v483 = vld [vmem:[#allocation6 + $0x3c] sm:$0xf]
        %v484 = vld [vmem:[#allocation9] sm:$0xff]
        %v485 = vld [vmem:[#allocation9 + $0x8] sm:$0xff]
        %v486 = vld [vmem:[#allocation9 + $0x10] sm:$0xff]
        %v487 = vld [vmem:[#allocation9 + $0x18] sm:$0xff]
        %v488 = vld [vmem:[#allocation9 + $0x20] sm:$0xff]
        %v489 = vld [vmem:[#allocation9 + $0x28] sm:$0xff]
        %v490 = vld [vmem:[#allocation9 + $0x30] sm:$0xff]
        %v491 = vld [vmem:[#allocation9 + $0x38] sm:$0xff]
        %v492 = vld [vmem:[#allocation9 + $0x40] sm:$0xff]
        %v493 = vld [vmem:[#allocation9 + $0x48] sm:$0xff]
        %v494 = vld [vmem:[#allocation9 + $0x50] sm:$0xff]
        %v495 = vld [vmem:[#allocation9 + $0x58] sm:$0xff]
        %v496 = vld [vmem:[#allocation9 + $0x60] sm:$0xff]
        %v497 = vld [vmem:[#allocation9 + $0x68] sm:$0xff]
        %v498 = vld [vmem:[#allocation9 + $0x70] sm:$0xff]
        %v499 = vld [vmem:[#allocation9 + $0x78] sm:$0xff]
        %v500 = vld [vmem:[#allocation9 + $0x80] sm:$0xff]
        %v501 = vld [vmem:[#allocation9 + $0x88] sm:$0xff]
        %v502 = vld [vmem:[#allocation9 + $0x90] sm:$0xff]
        %v503 = vld [vmem:[#allocation9 + $0x98] sm:$0xff]
        %v504 = vld [vmem:[#allocation9 + $0xa0] sm:$0xff]
        %v505 = vld [vmem:[#allocation9 + $0xa8] sm:$0xff]
        %v506 = vld [vmem:[#allocation9 + $0xb0] sm:$0xff]
        %v507 = vld [vmem:[#allocation9 + $0xb8] sm:$0xff]
        %v508 = vld [vmem:[#allocation9 + $0xc0] sm:$0xff]
        %v509 = vld [vmem:[#allocation9 + $0xc8] sm:$0xff]
        %v510 = vld [vmem:[#allocation9 + $0xd0] sm:$0xff]
        %v511 = vld [vmem:[#allocation9 + $0xd8] sm:$0xff]
        %v512 = vld [vmem:[#allocation9 + $0xe0] sm:$0xff]
        %v513 = vld [vmem:[#allocation9 + $0xe8] sm:$0xff]
        %v514 = vld [vmem:[#allocation9 + $0xf0] sm:$0xff]
        %v515 = vld [vmem:[#allocation9 + $0xf8] sm:$0xff]
        %v516 = vld [vmem:[#allocation9 + $0x100] sm:$0xff]
        %v517 = vld [vmem:[#allocation9 + $0x108] sm:$0xff]
        %v518 = vld [vmem:[#allocation9 + $0x110] sm:$0xff]
        %v519 = vld [vmem:[#allocation9 + $0x118] sm:$0xff]
        %v520 = vld [vmem:[#allocation9 + $0x120] sm:$0xff]
        %v521 = vld [vmem:[#allocation9 + $0x128] sm:$0xff]
        %v522 = vld [vmem:[#allocation9 + $0x130] sm:$0xff]
        %v523 = vld [vmem:[#allocation9 + $0x138] sm:$0xff]
        %v524 = vld [vmem:[#allocation9 + $0x140] sm:$0xff]
        %v525 = vld [vmem:[#allocation8] sm:$0x1]
        %v527 = vlaneseq
        %v528 = vshrl.u32 %v527, 7
        %v529 = vsub.s32 0, %v528
        %v530 = vrot.slane %v525, %v529
        %v573 = vunpack.c.l.b16 %v427
        %v574 = vunpack.c.l.b16 %v428
        %v575 = vunpack.c.l.b16 %v429
        %v576 = vunpack.c.l.b16 %v430
        %v577 = vunpack.c.l.b16 %v431
        %v578 = vunpack.c.l.b16 %v432
        %v579 = vunpack.c.l.b16 %v433
        %v580 = vunpack.c.l.b16 %v434
        %v581 = vunpack.c.l.b16 %v435
        %v582 = vunpack.c.l.b16 %v436
        %v583 = vunpack.c.l.b16 %v437
        %v584 = vunpack.c.l.b16 %v438
        %v585 = vunpack.c.l.b16 %v439
        %v586 = vunpack.c.l.b16 %v440
        %v587 = vunpack.c.l.b16 %v441
        %v588 = vunpack.c.l.b16 %v442
        %v589 = vunpack.c.l.b16 %v443
        %v590 = vunpack.c.l.b16 %v444
        %v591 = vunpack.c.l.b16 %v445
        %v592 = vunpack.c.l.b16 %v446
        %v593 = vunpack.c.l.b16 %v447
        %v594 = vunpack.c.l.b16 %v448
        %v595 = vunpack.c.l.b16 %v449
        %v596 = vunpack.c.l.b16 %v450
        %v597 = vunpack.c.l.b16 %v451
        %v598 = vunpack.c.l.b16 %v452
        %v599 = vunpack.c.l.b16 %v453
        %v600 = vunpack.c.l.b16 %v454
        %v601 = vunpack.c.l.b16 %v455
        %v602 = vunpack.c.l.b16 %v456
        %v603 = vunpack.c.l.b16 %v457
        %v604 = vunpack.c.l.b16 %v458
        %v605 = vunpack.c.l.b16 %v459
        %v606 = vunpack.c.l.b16 %v460
        %v607 = vunpack.c.l.b16 %v461
        %v608 = vunpack.c.l.b16 %v462
        %v609 = vunpack.c.l.b16 %v463
        %v610 = vunpack.c.l.b16 %v464
        %v611 = vunpack.c.l.b16 %v465
        %v612 = vunpack.c.l.b16 %v466
        %v613 = vunpack.c.l.b16 %v467
        %v614 = vpack.c.b16 %v574, %v573
        %v615 = vpack.c.b16 %v576, %v575
        %v616 = vpack.c.b16 %v578, %v577
        %v617 = vpack.c.b16 %v580, %v579
        %v618 = vpack.c.b16 %v582, %v581
        %v619 = vpack.c.b16 %v584, %v583
        %v620 = vpack.c.b16 %v586, %v585
        %v621 = vpack.c.b16 %v588, %v587
        %v622 = vpack.c.b16 %v590, %v589
        %v623 = vpack.c.b16 %v592, %v591
        %v624 = vpack.c.b16 %v594, %v593
        %v625 = vpack.c.b16 %v596, %v595
        %v626 = vpack.c.b16 %v598, %v597
        %v627 = vpack.c.b16 %v600, %v599
        %v628 = vpack.c.b16 %v602, %v601
        %v629 = vpack.c.b16 %v604, %v603
        %v630 = vpack.c.b16 %v606, %v605
        %v631 = vpack.c.b16 %v608, %v607
        %v632 = vpack.c.b16 %v610, %v609
        %v633 = vpack.c.b16 %v612, %v611
        %v634 = vpack.c.b16 %v613, %v613
        %v672 = vunpack.c.l.b16 %v468
        %v673 = vunpack.c.l.b16 %v469
        %v674 = vunpack.c.l.b16 %v470
        %v675 = vunpack.c.l.b16 %v471
        %v676 = vunpack.c.l.b16 %v472
        %v677 = vunpack.c.l.b16 %v473
        %v678 = vunpack.c.l.b16 %v474
        %v679 = vunpack.c.l.b16 %v475
        %v680 = vunpack.c.l.b16 %v476
        %v681 = vunpack.c.l.b16 %v477
        %v682 = vunpack.c.l.b16 %v478
        %v683 = vunpack.c.l.b16 %v479
        %v684 = vunpack.c.l.b16 %v480
        %v685 = vunpack.c.l.b16 %v481
        %v686 = vunpack.c.l.b16 %v482
        %v687 = vunpack.c.l.b16 %v483
        %v688 = vpack.c.b16 %v673, %v672
        %v689 = vpack.c.b16 %v675, %v674
        %v690 = vpack.c.b16 %v677, %v676
        %v691 = vpack.c.b16 %v679, %v678
        %v692 = vpack.c.b16 %v681, %v680
        %v693 = vpack.c.b16 %v683, %v682
        %v694 = vpack.c.b16 %v685, %v684
        %v695 = vpack.c.b16 %v687, %v686
        %704 = vmatprep.subr.bf16.mxu0 0
        %705 = vmatpush1.bf16.msra.mxu0 %v688
        %706 = vmatprep.subr.bf16.mxu0 0
        %707 = vmatpush1.bf16.msra.mxu0 %v689
        %708 = vmatprep.subr.bf16.mxu0 0
        %709 = vmatpush1.bf16.msra.mxu0 %v690
        %710 = vmatprep.subr.bf16.mxu0 0
        %711 = vmatpush1.bf16.msra.mxu0 %v691
        %712 = vmatprep.subr.bf16.mxu0 0
        %713 = vmatpush1.bf16.msra.mxu0 %v692
        %714 = vmatprep.subr.bf16.mxu0 0
        %715 = vmatpush1.bf16.msra.mxu0 %v693
        %716 = vmatprep.subr.bf16.mxu0 0
        %717 = vmatpush1.bf16.msra.mxu0 %v694
        %718 = vmatprep.subr.bf16.mxu0 0
        %719 = vmatpush1.bf16.msra.mxu0 %v695
        %720 = vmatprep.subr.bf16.mxu0 0
        %721 = vmatpush1.bf16.msra.mxu0 0
        %722 = vmatprep.subr.bf16.mxu0 0
        %723 = vmatpush1.bf16.msra.mxu0 0
        %724 = vmatprep.subr.bf16.mxu0 0
        %725 = vmatpush1.bf16.msra.mxu0 0
        %726 = vmatprep.subr.bf16.mxu0 0
        %727 = vmatpush1.bf16.msra.mxu0 0
        %728 = vmatprep.subr.bf16.mxu0 0
        %729 = vmatpush1.bf16.msra.mxu0 0
        %730 = vmatprep.subr.bf16.mxu0 0
        %731 = vmatpush1.bf16.msra.mxu0 0
        %732 = vmatprep.subr.bf16.mxu0 0
        %733 = vmatpush1.bf16.msra.mxu0 0
        %734 = vmatprep.subr.bf16.mxu0 0
        %735 = vmatpush1.bf16.msra.mxu0 0
        %736 = vmatprep.mubr.bf16.mxu0 0
        %737 = vmatmul.mubr.bf16.gmra.mrb[0].mxu0 %v614
        %v738 = vpop.f32.mrb[0].mxu0
        %v739 = vadd.f32 %v530, %v738
        %v740 = vpop.f32.mrb[0].mxu0
        %v741 = vpop.f32.mrb[0].mxu0
        %v742 = vadd.f32 %v530, %v741
        %v743 = vpop.f32.mrb[0].mxu0
        %744 = vmatprep.mubr.bf16.mxu0 0
        %745 = vmatmul.mubr.bf16.gmra.mrb[0].mxu0 %v615
        %v746 = vpop.f32.mrb[0].mxu0
        %v747 = vadd.f32 %v530, %v746
        %v748 = vpop.f32.mrb[0].mxu0
        %v749 = vpop.f32.mrb[0].mxu0
        %v750 = vadd.f32 %v530, %v749
        %v751 = vpop.f32.mrb[0].mxu0
        %752 = vmatprep.mubr.bf16.mxu0 0
        %753 = vmatmul.mubr.bf16.gmra.mrb[0].mxu0 %v616
        %v754 = vpop.f32.mrb[0].mxu0
        %v755 = vadd.f32 %v530, %v754
        %v756 = vpop.f32.mrb[0].mxu0
        %v757 = vpop.f32.mrb[0].mxu0
        %v758 = vadd.f32 %v530, %v757
        %v759 = vpop.f32.mrb[0].mxu0
        %760 = vmatprep.mubr.bf16.mxu0 0
        %761 = vmatmul.mubr.bf16.gmra.mrb[0].mxu0 %v617
        %v762 = vpop.f32.mrb[0].mxu0
        %v763 = vadd.f32 %v530, %v762
        %v764 = vpop.f32.mrb[0].mxu0
        %v765 = vpop.f32.mrb[0].mxu0
        %v766 = vadd.f32 %v530, %v765
        %v767 = vpop.f32.mrb[0].mxu0
        %768 = vmatprep.mubr.bf16.mxu0 0
        %769 = vmatmul.mubr.bf16.gmra.mrb[0].mxu0 %v618
        %v770 = vpop.f32.mrb[0].mxu0
        %v771 = vadd.f32 %v530, %v770
        %v772 = vpop.f32.mrb[0].mxu0
        %v773 = vpop.f32.mrb[0].mxu0
        %v774 = vadd.f32 %v530, %v773
        %v775 = vpop.f32.mrb[0].mxu0
        %776 = vmatprep.mubr.bf16.mxu0 0
        %777 = vmatmul.mubr.bf16.gmra.mrb[0].mxu0 %v619
        %v778 = vpop.f32.mrb[0].mxu0
        %v779 = vadd.f32 %v530, %v778
        %v780 = vpop.f32.mrb[0].mxu0
        %v781 = vpop.f32.mrb[0].mxu0
        %v782 = vadd.f32 %v530, %v781
        %v783 = vpop.f32.mrb[0].mxu0
        %784 = vmatprep.mubr.bf16.mxu0 0
        %785 = vmatmul.mubr.bf16.gmra.mrb[0].mxu0 %v620
        %v786 = vpop.f32.mrb[0].mxu0
        %v787 = vadd.f32 %v530, %v786
        %v788 = vpop.f32.mrb[0].mxu0
        %v789 = vpop.f32.mrb[0].mxu0
        %v790 = vadd.f32 %v530, %v789
        %v791 = vpop.f32.mrb[0].mxu0
        %792 = vmatprep.mubr.bf16.mxu0 0
        %793 = vmatmul.mubr.bf16.gmra.mrb[0].mxu0 %v621
        %v794 = vpop.f32.mrb[0].mxu0
        %v795 = vadd.f32 %v530, %v794
        %v796 = vpop.f32.mrb[0].mxu0
        %v797 = vpop.f32.mrb[0].mxu0
        %v798 = vadd.f32 %v530, %v797
        %v799 = vpop.f32.mrb[0].mxu0
        %800 = vmatprep.mubr.bf16.mxu0 0
        %801 = vmatmul.mubr.bf16.gmra.mrb[0].mxu0 %v622
        %v802 = vpop.f32.mrb[0].mxu0
        %v803 = vadd.f32 %v530, %v802
        %v804 = vpop.f32.mrb[0].mxu0
        %v805 = vpop.f32.mrb[0].mxu0
        %v806 = vadd.f32 %v530, %v805
        %v807 = vpop.f32.mrb[0].mxu0
        %808 = vmatprep.mubr.bf16.mxu0 0
        %809 = vmatmul.mubr.bf16.gmra.mrb[0].mxu0 %v623
        %v810 = vpop.f32.mrb[0].mxu0
        %v811 = vadd.f32 %v530, %v810
        %v812 = vpop.f32.mrb[0].mxu0
        %v813 = vpop.f32.mrb[0].mxu0
        %v814 = vadd.f32 %v530, %v813
        %v815 = vpop.f32.mrb[0].mxu0
        %816 = vmatprep.mubr.bf16.mxu0 0
        %817 = vmatmul.mubr.bf16.gmra.mrb[0].mxu0 %v624
        %v818 = vpop.f32.mrb[0].mxu0
        %v819 = vadd.f32 %v530, %v818
        %v820 = vpop.f32.mrb[0].mxu0
        %v821 = vpop.f32.mrb[0].mxu0
        %v822 = vadd.f32 %v530, %v821
        %v823 = vpop.f32.mrb[0].mxu0
        %824 = vmatprep.mubr.bf16.mxu0 0
        %825 = vmatmul.mubr.bf16.gmra.mrb[0].mxu0 %v625
        %v826 = vpop.f32.mrb[0].mxu0
        %v827 = vadd.f32 %v530, %v826
        %v828 = vpop.f32.mrb[0].mxu0
        %v829 = vpop.f32.mrb[0].mxu0
        %v830 = vadd.f32 %v530, %v829
        %v831 = vpop.f32.mrb[0].mxu0
        %832 = vmatprep.mubr.bf16.mxu0 0
        %833 = vmatmul.mubr.bf16.gmra.mrb[0].mxu0 %v626
        %v834 = vpop.f32.mrb[0].mxu0
        %v835 = vadd.f32 %v530, %v834
        %v836 = vpop.f32.mrb[0].mxu0
        %v837 = vpop.f32.mrb[0].mxu0
        %v838 = vadd.f32 %v530, %v837
        %v839 = vpop.f32.mrb[0].mxu0
        %840 = vmatprep.mubr.bf16.mxu0 0
        %841 = vmatmul.mubr.bf16.gmra.mrb[0].mxu0 %v627
        %v842 = vpop.f32.mrb[0].mxu0
        %v843 = vadd.f32 %v530, %v842
        %v844 = vpop.f32.mrb[0].mxu0
        %v845 = vpop.f32.mrb[0].mxu0
        %v846 = vadd.f32 %v530, %v845
        %v847 = vpop.f32.mrb[0].mxu0
        %848 = vmatprep.mubr.bf16.mxu0 0
        %849 = vmatmul.mubr.bf16.gmra.mrb[0].mxu0 %v628
        %v850 = vpop.f32.mrb[0].mxu0
        %v851 = vadd.f32 %v530, %v850
        %v852 = vpop.f32.mrb[0].mxu0
        %v853 = vpop.f32.mrb[0].mxu0
        %v854 = vadd.f32 %v530, %v853
        %v855 = vpop.f32.mrb[0].mxu0
        %856 = vmatprep.mubr.bf16.mxu0 0
        %857 = vmatmul.mubr.bf16.gmra.mrb[0].mxu0 %v629
        %v858 = vpop.f32.mrb[0].mxu0
        %v859 = vadd.f32 %v530, %v858
        %v860 = vpop.f32.mrb[0].mxu0
        %v861 = vpop.f32.mrb[0].mxu0
        %v862 = vadd.f32 %v530, %v861
        %v863 = vpop.f32.mrb[0].mxu0
        %864 = vmatprep.mubr.bf16.mxu0 0
        %865 = vmatmul.mubr.bf16.gmra.mrb[0].mxu0 %v630
        %v866 = vpop.f32.mrb[0].mxu0
        %v867 = vadd.f32 %v530, %v866
        %v868 = vpop.f32.mrb[0].mxu0
        %v869 = vpop.f32.mrb[0].mxu0
        %v870 = vadd.f32 %v530, %v869
        %v871 = vpop.f32.mrb[0].mxu0
        %872 = vmatprep.mubr.bf16.mxu0 0
        %873 = vmatmul.mubr.bf16.gmra.mrb[0].mxu0 %v631
        %v874 = vpop.f32.mrb[0].mxu0
        %v875 = vadd.f32 %v530, %v874
        %v876 = vpop.f32.mrb[0].mxu0
        %v877 = vpop.f32.mrb[0].mxu0
        %v878 = vadd.f32 %v530, %v877
        %v879 = vpop.f32.mrb[0].mxu0
        %880 = vmatprep.mubr.bf16.mxu0 0
        %881 = vmatmul.mubr.bf16.gmra.mrb[0].mxu0 %v632
        %v882 = vpop.f32.mrb[0].mxu0
        %v883 = vadd.f32 %v530, %v882
        %v884 = vpop.f32.mrb[0].mxu0
        %v885 = vpop.f32.mrb[0].mxu0
        %v886 = vadd.f32 %v530, %v885
        %v887 = vpop.f32.mrb[0].mxu0
        %888 = vmatprep.mubr.bf16.mxu0 0
        %889 = vmatmul.mubr.bf16.gmra.mrb[0].mxu0 %v633
        %v890 = vpop.f32.mrb[0].mxu0
        %v891 = vadd.f32 %v530, %v890
        %v892 = vpop.f32.mrb[0].mxu0
        %v893 = vpop.f32.mrb[0].mxu0
        %v894 = vadd.f32 %v530, %v893
        %v895 = vpop.f32.mrb[0].mxu0
        %896 = vmatprep.mubr.bf16.mxu0 0
        %897 = vmatmul.mubr.bf16.gmra.mrb[0].mxu0 %v634
        %v898 = vpop.f32.mrb[0].mxu0
        %v899 = vadd.f32 %v530, %v898
        %v900 = vpop.f32.mrb[0].mxu0
        %v901 = vpop.f32.mrb[0].mxu0
        %v902 = vpop.f32.mrb[0].mxu0
        %903 = vdwg.mxu0
        %v904 = vmax.f32 %v739, 0.0
        %v905 = vmax.f32 %v742, 0.0
        %v906 = vmax.f32 %v747, 0.0
        %v907 = vmax.f32 %v750, 0.0
        %v908 = vmax.f32 %v755, 0.0
        %v909 = vmax.f32 %v758, 0.0
        %v910 = vmax.f32 %v763, 0.0
        %v911 = vmax.f32 %v766, 0.0
        %v912 = vmax.f32 %v771, 0.0
        %v913 = vmax.f32 %v774, 0.0
        %v914 = vmax.f32 %v779, 0.0
        %v915 = vmax.f32 %v782, 0.0
        %v916 = vmax.f32 %v787, 0.0
        %v917 = vmax.f32 %v790, 0.0
        %v918 = vmax.f32 %v795, 0.0
        %v919 = vmax.f32 %v798, 0.0
        %v920 = vmax.f32 %v803, 0.0
        %v921 = vmax.f32 %v806, 0.0
        %v922 = vmax.f32 %v811, 0.0
        %v923 = vmax.f32 %v814, 0.0
        %v924 = vmax.f32 %v819, 0.0
        %v925 = vmax.f32 %v822, 0.0
        %v926 = vmax.f32 %v827, 0.0
        %v927 = vmax.f32 %v830, 0.0
        %v928 = vmax.f32 %v835, 0.0
        %v929 = vmax.f32 %v838, 0.0
        %v930 = vmax.f32 %v843, 0.0
        %v931 = vmax.f32 %v846, 0.0
        %v932 = vmax.f32 %v851, 0.0
        %v933 = vmax.f32 %v854, 0.0
        %v934 = vmax.f32 %v859, 0.0
        %v935 = vmax.f32 %v862, 0.0
        %v936 = vmax.f32 %v867, 0.0
        %v937 = vmax.f32 %v870, 0.0
        %v938 = vmax.f32 %v875, 0.0
        %v939 = vmax.f32 %v878, 0.0
        %v940 = vmax.f32 %v883, 0.0
        %v941 = vmax.f32 %v886, 0.0
        %v942 = vmax.f32 %v891, 0.0
        %v943 = vmax.f32 %v894, 0.0
        %v944 = vmax.f32 %v899, 0.0
        %946 = vset.pattern.permute.xlu0 0
        %947 = vperm.xlu0 %946, %v484
        %v948 = vpop.permute.xlu0 %947
        %951 = vset.pattern.permute.xlu0 0
        %952 = vperm.xlu0 %951, %v485
        %v953 = vpop.permute.xlu0 %952
        %956 = vset.pattern.permute.xlu0 0
        %957 = vperm.xlu0 %956, %v486
        %v958 = vpop.permute.xlu0 %957
        %961 = vset.pattern.permute.xlu0 0
        %962 = vperm.xlu0 %961, %v487
        %v963 = vpop.permute.xlu0 %962
        %966 = vset.pattern.permute.xlu0 0
        %967 = vperm.xlu0 %966, %v488
        %v968 = vpop.permute.xlu0 %967
        %971 = vset.pattern.permute.xlu0 0
        %972 = vperm.xlu0 %971, %v489
        %v973 = vpop.permute.xlu0 %972
        %976 = vset.pattern.permute.xlu0 0
        %977 = vperm.xlu0 %976, %v490
        %v978 = vpop.permute.xlu0 %977
        %981 = vset.pattern.permute.xlu0 0
        %982 = vperm.xlu0 %981, %v491
        %v983 = vpop.permute.xlu0 %982
        %986 = vset.pattern.permute.xlu0 0
        %987 = vperm.xlu0 %986, %v492
        %v988 = vpop.permute.xlu0 %987
        %991 = vset.pattern.permute.xlu0 0
        %992 = vperm.xlu0 %991, %v493
        %v993 = vpop.permute.xlu0 %992
        %996 = vset.pattern.permute.xlu0 0
        %997 = vperm.xlu0 %996, %v494
        %v998 = vpop.permute.xlu0 %997
        %1001 = vset.pattern.permute.xlu0 0
        %1002 = vperm.xlu0 %1001, %v495
        %v1003 = vpop.permute.xlu0 %1002
        %1006 = vset.pattern.permute.xlu0 0
        %1007 = vperm.xlu0 %1006, %v496
        %v1008 = vpop.permute.xlu0 %1007
        %1011 = vset.pattern.permute.xlu0 0
        %1012 = vperm.xlu0 %1011, %v497
        %v1013 = vpop.permute.xlu0 %1012
        %1016 = vset.pattern.permute.xlu0 0
        %1017 = vperm.xlu0 %1016, %v498
        %v1018 = vpop.permute.xlu0 %1017
        %1021 = vset.pattern.permute.xlu0 0
        %1022 = vperm.xlu0 %1021, %v499
        %v1023 = vpop.permute.xlu0 %1022
        %1026 = vset.pattern.permute.xlu0 0
        %1027 = vperm.xlu0 %1026, %v500
        %v1028 = vpop.permute.xlu0 %1027
        %1031 = vset.pattern.permute.xlu0 0
        %1032 = vperm.xlu0 %1031, %v501
        %v1033 = vpop.permute.xlu0 %1032
        %1036 = vset.pattern.permute.xlu0 0
        %1037 = vperm.xlu0 %1036, %v502
        %v1038 = vpop.permute.xlu0 %1037
        %1041 = vset.pattern.permute.xlu0 0
        %1042 = vperm.xlu0 %1041, %v503
        %v1043 = vpop.permute.xlu0 %1042
        %1046 = vset.pattern.permute.xlu0 0
        %1047 = vperm.xlu0 %1046, %v504
        %v1048 = vpop.permute.xlu0 %1047
        %1051 = vset.pattern.permute.xlu0 0
        %1052 = vperm.xlu0 %1051, %v505
        %v1053 = vpop.permute.xlu0 %1052
        %1056 = vset.pattern.permute.xlu0 0
        %1057 = vperm.xlu0 %1056, %v506
        %v1058 = vpop.permute.xlu0 %1057
        %1061 = vset.pattern.permute.xlu0 0
        %1062 = vperm.xlu0 %1061, %v507
        %v1063 = vpop.permute.xlu0 %1062
        %1066 = vset.pattern.permute.xlu0 0
        %1067 = vperm.xlu0 %1066, %v508
        %v1068 = vpop.permute.xlu0 %1067
        %1071 = vset.pattern.permute.xlu0 0
        %1072 = vperm.xlu0 %1071, %v509
        %v1073 = vpop.permute.xlu0 %1072
        %1076 = vset.pattern.permute.xlu0 0
        %1077 = vperm.xlu0 %1076, %v510
        %v1078 = vpop.permute.xlu0 %1077
        %1081 = vset.pattern.permute.xlu0 0
        %1082 = vperm.xlu0 %1081, %v511
        %v1083 = vpop.permute.xlu0 %1082
        %1086 = vset.pattern.permute.xlu0 0
        %1087 = vperm.xlu0 %1086, %v512
        %v1088 = vpop.permute.xlu0 %1087
        %1091 = vset.pattern.permute.xlu0 0
        %1092 = vperm.xlu0 %1091, %v513
        %v1093 = vpop.permute.xlu0 %1092
        %1096 = vset.pattern.permute.xlu0 0
        %1097 = vperm.xlu0 %1096, %v514
        %v1098 = vpop.permute.xlu0 %1097
        %1101 = vset.pattern.permute.xlu0 0
        %1102 = vperm.xlu0 %1101, %v515
        %v1103 = vpop.permute.xlu0 %1102
        %1106 = vset.pattern.permute.xlu0 0
        %1107 = vperm.xlu0 %1106, %v516
        %v1108 = vpop.permute.xlu0 %1107
        %1111 = vset.pattern.permute.xlu0 0
        %1112 = vperm.xlu0 %1111, %v517
        %v1113 = vpop.permute.xlu0 %1112
        %1116 = vset.pattern.permute.xlu0 0
        %1117 = vperm.xlu0 %1116, %v518
        %v1118 = vpop.permute.xlu0 %1117
        %1121 = vset.pattern.permute.xlu0 0
        %1122 = vperm.xlu0 %1121, %v519
        %v1123 = vpop.permute.xlu0 %1122
        %1126 = vset.pattern.permute.xlu0 0
        %1127 = vperm.xlu0 %1126, %v520
        %v1128 = vpop.permute.xlu0 %1127
        %1131 = vset.pattern.permute.xlu0 0
        %1132 = vperm.xlu0 %1131, %v521
        %v1133 = vpop.permute.xlu0 %1132
        %1136 = vset.pattern.permute.xlu0 0
        %1137 = vperm.xlu0 %1136, %v522
        %v1138 = vpop.permute.xlu0 %1137
        %1141 = vset.pattern.permute.xlu0 0
        %1142 = vperm.xlu0 %1141, %v523
        %v1143 = vpop.permute.xlu0 %1142
        %1146 = vset.pattern.permute.xlu0 0
        %1147 = vperm.xlu0 %1146, %v524
        %v1148 = vpop.permute.xlu0 %1147
        %v1150 = vmul.f32 %v948, %v904
        %v1151 = vmul.f32 %v953, %v905
        %v1152 = vmul.f32 %v958, %v906
        %v1153 = vmul.f32 %v963, %v907
        %v1154 = vmul.f32 %v968, %v908
        %v1155 = vmul.f32 %v973, %v909
        %v1156 = vmul.f32 %v978, %v910
        %v1157 = vmul.f32 %v983, %v911
        %v1158 = vmul.f32 %v988, %v912
        %v1159 = vmul.f32 %v993, %v913
        %v1160 = vmul.f32 %v998, %v914
        %v1161 = vmul.f32 %v1003, %v915
        %v1162 = vmul.f32 %v1008, %v916
        %v1163 = vmul.f32 %v1013, %v917
        %v1164 = vmul.f32 %v1018, %v918
        %v1165 = vmul.f32 %v1023, %v919
        %v1166 = vmul.f32 %v1028, %v920
        %v1167 = vmul.f32 %v1033, %v921
        %v1168 = vmul.f32 %v1038, %v922
        %v1169 = vmul.f32 %v1043, %v923
        %v1170 = vmul.f32 %v1048, %v924
        %v1171 = vmul.f32 %v1053, %v925
        %v1172 = vmul.f32 %v1058, %v926
        %v1173 = vmul.f32 %v1063, %v927
        %v1174 = vmul.f32 %v1068, %v928
        %v1175 = vmul.f32 %v1073, %v929
        %v1176 = vmul.f32 %v1078, %v930
        %v1177 = vmul.f32 %v1083, %v931
        %v1178 = vmul.f32 %v1088, %v932
        %v1179 = vmul.f32 %v1093, %v933
        %v1180 = vmul.f32 %v1098, %v934
        %v1181 = vmul.f32 %v1103, %v935
        %v1182 = vmul.f32 %v1108, %v936
        %v1183 = vmul.f32 %v1113, %v937
        %v1184 = vmul.f32 %v1118, %v938
        %v1185 = vmul.f32 %v1123, %v939
        %v1186 = vmul.f32 %v1128, %v940
        %v1187 = vmul.f32 %v1133, %v941
        %v1188 = vmul.f32 %v1138, %v942
        %v1189 = vmul.f32 %v1143, %v943
        %v1190 = vmul.f32 %v1148, %v944
        %1191 = vst [vmem:[#allocation2 + $0x18] sm:$0xff] %v1150
        %1192 = vst [vmem:[#allocation2 + $0x20] sm:$0xff] %v1151
        %1193 = vst [vmem:[#allocation2 + $0x28] sm:$0xff] %v1152
        %1194 = vst [vmem:[#allocation2 + $0x30] sm:$0xff] %v1153
        %1195 = vst [vmem:[#allocation2 + $0x38] sm:$0xff] %v1154
        %1196 = vst [vmem:[#allocation2 + $0x40] sm:$0xff] %v1155
        %1197 = vst [vmem:[#allocation2 + $0x48] sm:$0xff] %v1156
        %1198 = vst [vmem:[#allocation2 + $0x50] sm:$0xff] %v1157
        %1199 = vst [vmem:[#allocation2 + $0x58] sm:$0xff] %v1158
        %1200 = vst [vmem:[#allocation2 + $0x60] sm:$0xff] %v1159
        %1201 = vst [vmem:[#allocation2 + $0x68] sm:$0xff] %v1160
        %1202 = vst [vmem:[#allocation2 + $0x70] sm:$0xff] %v1161
        %1203 = vst [vmem:[#allocation2 + $0x78] sm:$0xff] %v1162
        %1204 = vst [vmem:[#allocation2 + $0x80] sm:$0xff] %v1163
        %1205 = vst [vmem:[#allocation2 + $0x88] sm:$0xff] %v1164
        %1206 = vst [vmem:[#allocation2 + $0x90] sm:$0xff] %v1165
        %1207 = vst [vmem:[#allocation2 + $0x98] sm:$0xff] %v1166
        %1208 = vst [vmem:[#allocation2 + $0xa0] sm:$0xff] %v1167
        %1209 = vst [vmem:[#allocation2 + $0xa8] sm:$0xff] %v1168
        %1210 = vst [vmem:[#allocation2 + $0xb0] sm:$0xff] %v1169
        %1211 = vst [vmem:[#allocation2 + $0xb8] sm:$0xff] %v1170
        %1212 = vst [vmem:[#allocation2 + $0xc0] sm:$0xff] %v1171
        %1213 = vst [vmem:[#allocation2 + $0xc8] sm:$0xff] %v1172
        %1214 = vst [vmem:[#allocation2 + $0xd0] sm:$0xff] %v1173
        %1215 = vst [vmem:[#allocation2 + $0xd8] sm:$0xff] %v1174
        %1216 = vst [vmem:[#allocation2 + $0xe0] sm:$0xff] %v1175
        %1217 = vst [vmem:[#allocation2 + $0xe8] sm:$0xff] %v1176
        %1218 = vst [vmem:[#allocation2 + $0xf0] sm:$0xff] %v1177
        %1219 = vst [vmem:[#allocation2 + $0xf8] sm:$0xff] %v1178
        %1220 = vst [vmem:[#allocation2 + $0x100] sm:$0xff] %v1179
        %1221 = vst [vmem:[#allocation2 + $0x108] sm:$0xff] %v1180
        %1222 = vst [vmem:[#allocation2 + $0x110] sm:$0xff] %v1181
        %1223 = vst [vmem:[#allocation2 + $0x118] sm:$0xff] %v1182
        %1224 = vst [vmem:[#allocation2 + $0x120] sm:$0xff] %v1183
        %1225 = vst [vmem:[#allocation2 + $0x128] sm:$0xff] %v1184
        %1226 = vst [vmem:[#allocation2 + $0x130] sm:$0xff] %v1185
        %1227 = vst [vmem:[#allocation2 + $0x138] sm:$0xff] %v1186
        %1228 = vst [vmem:[#allocation2 + $0x140] sm:$0xff] %v1187
        %1229 = vst [vmem:[#allocation2 + $0x148] sm:$0xff] %v1188
        %1230 = vst [vmem:[#allocation2 + $0x150] sm:$0xff] %v1189
        %1231 = vst [vmem:[#allocation2 + $0x158] sm:$0xff] %v1190
        %v1232 = vld [vmem:[#allocation2 + $0x5] sm:$0xff]
        %v1233 = vld [vmem:[#allocation2 + $0xd] sm:$0xff]
        %v1234 = vld [vmem:[#allocation2 + $0x15] sm:$0xff]
        %v1235 = vld [vmem:[#allocation2 + $0x1d] sm:$0xff]
        %v1236 = vld [vmem:[#allocation2 + $0x25] sm:$0xff]
        %v1237 = vld [vmem:[#allocation2 + $0x2d] sm:$0xff]
        %v1238 = vld [vmem:[#allocation2 + $0x35] sm:$0xff]
        %v1239 = vld [vmem:[#allocation2 + $0x3d] sm:$0xff]
        %v1240 = vld [vmem:[#allocation2 + $0x45] sm:$0xff]
        %v1241 = vld [vmem:[#allocation2 + $0x4d] sm:$0xff]
        %v1242 = vld [vmem:[#allocation2 + $0x55] sm:$0xff]
        %v1243 = vld [vmem:[#allocation2 + $0x5d] sm:$0xff]
        %v1244 = vld [vmem:[#allocation2 + $0x65] sm:$0xff]
        %v1245 = vld [vmem:[#allocation2 + $0x6d] sm:$0xff]
        %v1246 = vld [vmem:[#allocation2 + $0x75] sm:$0xff]
        %v1247 = vld [vmem:[#allocation2 + $0x7d] sm:$0xff]
        %v1248 = vld [vmem:[#allocation2 + $0x85] sm:$0xff]
        %v1249 = vld [vmem:[#allocation2 + $0x8d] sm:$0xff]
        %v1250 = vld [vmem:[#allocation2 + $0x95] sm:$0xff]
        %v1251 = vld [vmem:[#allocation2 + $0x9d] sm:$0xff]
        %v1252 = vld [vmem:[#allocation2 + $0xa5] sm:$0xff]
        %v1253 = vld [vmem:[#allocation2 + $0xad] sm:$0xff]
        %v1254 = vld [vmem:[#allocation2 + $0xb5] sm:$0xff]
        %v1255 = vld [vmem:[#allocation2 + $0xbd] sm:$0xff]
        %v1256 = vld [vmem:[#allocation2 + $0xc5] sm:$0xff]
        %v1257 = vld [vmem:[#allocation2 + $0xcd] sm:$0xff]
        %v1258 = vld [vmem:[#allocation2 + $0xd5] sm:$0xff]
        %v1259 = vld [vmem:[#allocation2 + $0xdd] sm:$0xff]
        %v1260 = vld [vmem:[#allocation2 + $0xe5] sm:$0xff]
        %v1261 = vld [vmem:[#allocation2 + $0xed] sm:$0xff]
        %v1262 = vld [vmem:[#allocation2 + $0xf5] sm:$0xff]
        %v1263 = vld [vmem:[#allocation2 + $0xfd] sm:$0xff]
        %v1264 = vld [vmem:[#allocation2 + $0x105] sm:$0xff]
        %v1265 = vld [vmem:[#allocation2 + $0x10d] sm:$0xff]
        %v1266 = vld [vmem:[#allocation2 + $0x115] sm:$0xff]
        %v1267 = vld [vmem:[#allocation2 + $0x11d] sm:$0xff]
        %v1268 = vld [vmem:[#allocation2 + $0x125] sm:$0xff]
        %v1269 = vld [vmem:[#allocation2 + $0x12d] sm:$0xff]
        %v1270 = vld [vmem:[#allocation2 + $0x135] sm:$0xff]
        %v1271 = vld [vmem:[#allocation2 + $0x13d] sm:$0xff]
        %v1272 = vld [vmem:[#allocation2 + $0x145] sm:$0xff]
        %v1273 = vpack.c.bf16 %v1233, %v1232
        %v1274 = vpack.c.bf16 %v1235, %v1234
        %v1275 = vpack.c.bf16 %v1237, %v1236
        %v1276 = vpack.c.bf16 %v1239, %v1238
        %v1277 = vpack.c.bf16 %v1241, %v1240
        %v1278 = vpack.c.bf16 %v1243, %v1242
        %v1279 = vpack.c.bf16 %v1245, %v1244
        %v1280 = vpack.c.bf16 %v1247, %v1246
        %v1281 = vpack.c.bf16 %v1249, %v1248
        %v1282 = vpack.c.bf16 %v1251, %v1250
        %v1283 = vpack.c.bf16 %v1253, %v1252
        %v1284 = vpack.c.bf16 %v1255, %v1254
        %v1285 = vpack.c.bf16 %v1257, %v1256
        %v1286 = vpack.c.bf16 %v1259, %v1258
        %v1287 = vpack.c.bf16 %v1261, %v1260
        %v1288 = vpack.c.bf16 %v1263, %v1262
        %v1289 = vpack.c.bf16 %v1265, %v1264
        %v1290 = vpack.c.bf16 %v1267, %v1266
        %v1291 = vpack.c.bf16 %v1269, %v1268
        %v1292 = vpack.c.bf16 %v1271, %v1270
        %v1293 = vpack.c.bf16 %v1272, %v1272
        %v1294 = vld [vmem:[#allocation11] sm:$0xf]
        %v1295 = vld [vmem:[#allocation11 + $0x4] sm:$0xf]
        %v1296 = vld [vmem:[#allocation11 + $0x8] sm:$0xf]
        %v1297 = vld [vmem:[#allocation11 + $0xc] sm:$0xf]
        %v1298 = vld [vmem:[#allocation11 + $0x10] sm:$0xf]
        %v1299 = vld [vmem:[#allocation11 + $0x14] sm:$0xf]
        %v1300 = vld [vmem:[#allocation11 + $0x18] sm:$0xf]
        %v1301 = vld [vmem:[#allocation11 + $0x1c] sm:$0xf]
        %v1302 = vld [vmem:[#allocation11 + $0x20] sm:$0xf]
        %v1303 = vld [vmem:[#allocation11 + $0x24] sm:$0xf]
        %v1304 = vld [vmem:[#allocation11 + $0x28] sm:$0xf]
        %v1305 = vld [vmem:[#allocation11 + $0x2c] sm:$0xf]
        %v1306 = vld [vmem:[#allocation11 + $0x30] sm:$0xf]
        %v1307 = vld [vmem:[#allocation11 + $0x34] sm:$0xf]
        %v1308 = vld [vmem:[#allocation11 + $0x38] sm:$0xf]
        %v1309 = vld [vmem:[#allocation11 + $0x3c] sm:$0xf]
        %v1310 = vld [vmem:[#allocation2 + $0x6] sm:$0xff]
        %v1311 = vld [vmem:[#allocation2 + $0xe] sm:$0xff]
        %v1312 = vld [vmem:[#allocation2 + $0x16] sm:$0xff]
        %v1313 = vld [vmem:[#allocation2 + $0x1e] sm:$0xff]
        %v1314 = vld [vmem:[#allocation2 + $0x26] sm:$0xff]
        %v1315 = vld [vmem:[#allocation2 + $0x2e] sm:$0xff]
        %v1316 = vld [vmem:[#allocation2 + $0x36] sm:$0xff]
        %v1317 = vld [vmem:[#allocation2 + $0x3e] sm:$0xff]
        %v1318 = vld [vmem:[#allocation2 + $0x46] sm:$0xff]
        %v1319 = vld [vmem:[#allocation2 + $0x4e] sm:$0xff]
        %v1320 = vld [vmem:[#allocation2 + $0x56] sm:$0xff]
        %v1321 = vld [vmem:[#allocation2 + $0x5e] sm:$0xff]
        %v1322 = vld [vmem:[#allocation2 + $0x66] sm:$0xff]
        %v1323 = vld [vmem:[#allocation2 + $0x6e] sm:$0xff]
        %v1324 = vld [vmem:[#allocation2 + $0x76] sm:$0xff]
        %v1325 = vld [vmem:[#allocation2 + $0x7e] sm:$0xff]
        %v1326 = vld [vmem:[#allocation2 + $0x86] sm:$0xff]
        %v1327 = vld [vmem:[#allocation2 + $0x8e] sm:$0xff]
        %v1328 = vld [vmem:[#allocation2 + $0x96] sm:$0xff]
        %v1329 = vld [vmem:[#allocation2 + $0x9e] sm:$0xff]
        %v1330 = vld [vmem:[#allocation2 + $0xa6] sm:$0xff]
        %v1331 = vld [vmem:[#allocation2 + $0xae] sm:$0xff]
        %v1332 = vld [vmem:[#allocation2 + $0xb6] sm:$0xff]
        %v1333 = vld [vmem:[#allocation2 + $0xbe] sm:$0xff]
        %v1334 = vld [vmem:[#allocation2 + $0xc6] sm:$0xff]
        %v1335 = vld [vmem:[#allocation2 + $0xce] sm:$0xff]
        %v1336 = vld [vmem:[#allocation2 + $0xd6] sm:$0xff]
        %v1337 = vld [vmem:[#allocation2 + $0xde] sm:$0xff]
        %v1338 = vld [vmem:[#allocation2 + $0xe6] sm:$0xff]
        %v1339 = vld [vmem:[#allocation2 + $0xee] sm:$0xff]
        %v1340 = vld [vmem:[#allocation2 + $0xf6] sm:$0xff]
        %v1341 = vld [vmem:[#allocation2 + $0xfe] sm:$0xff]
        %v1342 = vld [vmem:[#allocation2 + $0x106] sm:$0xff]
        %v1343 = vld [vmem:[#allocation2 + $0x10e] sm:$0xff]
        %v1344 = vld [vmem:[#allocation2 + $0x116] sm:$0xff]
        %v1345 = vld [vmem:[#allocation2 + $0x11e] sm:$0xff]
        %v1346 = vld [vmem:[#allocation2 + $0x126] sm:$0xff]
        %v1347 = vld [vmem:[#allocation2 + $0x12e] sm:$0xff]
        %v1348 = vld [vmem:[#allocation2 + $0x136] sm:$0xff]
        %v1349 = vld [vmem:[#allocation2 + $0x13e] sm:$0xff]
        %v1350 = vld [vmem:[#allocation2 + $0x146] sm:$0xff]
        %v1351 = vpack.c.bf16 %v1311, %v1310
        %v1352 = vpack.c.bf16 %v1313, %v1312
        %v1353 = vpack.c.bf16 %v1315, %v1314
        %v1354 = vpack.c.bf16 %v1317, %v1316
        %v1355 = vpack.c.bf16 %v1319, %v1318
        %v1356 = vpack.c.bf16 %v1321, %v1320
        %v1357 = vpack.c.bf16 %v1323, %v1322
        %v1358 = vpack.c.bf16 %v1325, %v1324
        %v1359 = vpack.c.bf16 %v1327, %v1326
        %v1360 = vpack.c.bf16 %v1329, %v1328
        %v1361 = vpack.c.bf16 %v1331, %v1330
        %v1362 = vpack.c.bf16 %v1333, %v1332
        %v1363 = vpack.c.bf16 %v1335, %v1334
        %v1364 = vpack.c.bf16 %v1337, %v1336
        %v1365 = vpack.c.bf16 %v1339, %v1338
        %v1366 = vpack.c.bf16 %v1341, %v1340
        %v1367 = vpack.c.bf16 %v1343, %v1342
        %v1368 = vpack.c.bf16 %v1345, %v1344
        %v1369 = vpack.c.bf16 %v1347, %v1346
        %v1370 = vpack.c.bf16 %v1349, %v1348
        %v1371 = vpack.c.bf16 %v1350, %v1350
        %v1372 = vld [vmem:[#allocation11 + $0x40] sm:$0xf]
        %v1373 = vld [vmem:[#allocation11 + $0x44] sm:$0xf]
        %v1374 = vld [vmem:[#allocation11 + $0x48] sm:$0xf]
        %v1375 = vld [vmem:[#allocation11 + $0x4c] sm:$0xf]
        %v1376 = vld [vmem:[#allocation11 + $0x50] sm:$0xf]
        %v1377 = vld [vmem:[#allocation11 + $0x54] sm:$0xf]
        %v1378 = vld [vmem:[#allocation11 + $0x58] sm:$0xf]
        %v1379 = vld [vmem:[#allocation11 + $0x5c] sm:$0xf]
        %v1380 = vld [vmem:[#allocation11 + $0x60] sm:$0xf]
        %v1381 = vld [vmem:[#allocation11 + $0x64] sm:$0xf]
        %v1382 = vld [vmem:[#allocation11 + $0x68] sm:$0xf]
        %v1383 = vld [vmem:[#allocation11 + $0x6c] sm:$0xf]
        %v1384 = vld [vmem:[#allocation11 + $0x70] sm:$0xf]
        %v1385 = vld [vmem:[#allocation11 + $0x74] sm:$0xf]
        %v1386 = vld [vmem:[#allocation11 + $0x78] sm:$0xf]
        %v1387 = vld [vmem:[#allocation11 + $0x7c] sm:$0xf]
        %v1404 = vunpack.c.l.b16 %v1372
        %v1405 = vunpack.c.l.b16 %v1373
        %v1406 = vunpack.c.l.b16 %v1374
        %v1407 = vunpack.c.l.b16 %v1375
        %v1408 = vunpack.c.l.b16 %v1376
        %v1409 = vunpack.c.l.b16 %v1377
        %v1410 = vunpack.c.l.b16 %v1378
        %v1411 = vunpack.c.l.b16 %v1379
        %v1412 = vunpack.c.l.b16 %v1380
        %v1413 = vunpack.c.l.b16 %v1381
        %v1414 = vunpack.c.l.b16 %v1382
        %v1415 = vunpack.c.l.b16 %v1383
        %v1416 = vunpack.c.l.b16 %v1384
        %v1417 = vunpack.c.l.b16 %v1385
        %v1418 = vunpack.c.l.b16 %v1386
        %v1419 = vunpack.c.l.b16 %v1387
        %v1420 = vpack.c.b16 %v1405, %v1404
        %v1421 = vpack.c.b16 %v1407, %v1406
        %v1422 = vpack.c.b16 %v1409, %v1408
        %v1423 = vpack.c.b16 %v1411, %v1410
        %v1424 = vpack.c.b16 %v1413, %v1412
        %v1425 = vpack.c.b16 %v1415, %v1414
        %v1426 = vpack.c.b16 %v1417, %v1416
        %v1427 = vpack.c.b16 %v1419, %v1418
        %1436 = vmatprep.subr.bf16.mxu0 0
        %1437 = vmatpush1.bf16.msra.mxu0 %v1420
        %1438 = vmatprep.subr.bf16.mxu0 0
        %1439 = vmatpush1.bf16.msra.mxu0 %v1421
        %1440 = vmatprep.subr.bf16.mxu0 0
        %1441 = vmatpush1.bf16.msra.mxu0 %v1422
        %1442 = vmatprep.subr.bf16.mxu0 0
        %1443 = vmatpush1.bf16.msra.mxu0 %v1423
        %1444 = vmatprep.subr.bf16.mxu0 0
        %1445 = vmatpush1.bf16.msra.mxu0 %v1424
        %1446 = vmatprep.subr.bf16.mxu0 0
        %1447 = vmatpush1.bf16.msra.mxu0 %v1425
        %1448 = vmatprep.subr.bf16.mxu0 0
        %1449 = vmatpush1.bf16.msra.mxu0 %v1426
        %1450 = vmatprep.subr.bf16.mxu0 0
        %1451 = vmatpush1.bf16.msra.mxu0 %v1427
        %1452 = vmatprep.subr.bf16.mxu0 0
        %1453 = vmatpush1.bf16.msra.mxu0 0
        %1454 = vmatprep.subr.bf16.mxu0 0
        %1455 = vmatpush1.bf16.msra.mxu0 0
        %1456 = vmatprep.subr.bf16.mxu0 0
        %1457 = vmatpush1.bf16.msra.mxu0 0
        %1458 = vmatprep.subr.bf16.mxu0 0
        %1459 = vmatpush1.bf16.msra.mxu0 0
        %1460 = vmatprep.subr.bf16.mxu0 0
        %1461 = vmatpush1.bf16.msra.mxu0 0
        %1462 = vmatprep.subr.bf16.mxu0 0
        %1463 = vmatpush1.bf16.msra.mxu0 0
        %1464 = vmatprep.subr.bf16.mxu0 0
        %1465 = vmatpush1.bf16.msra.mxu0 0
        %1466 = vmatprep.subr.bf16.mxu0 0
        %1467 = vmatpush1.bf16.msra.mxu0 0
        %1468 = vmatprep.mubr.bf16.mxu0 0
        %1469 = vmatmul.mubr.bf16.gmra.mrb[0].mxu0 %v1351
        %v1470 = vpop.f32.mrb[0].mxu0
        %v1471 = vadd.f32 0.0, %v1470
        %v1472 = vpop.f32.mrb[0].mxu0
        %v1473 = vpop.f32.mrb[0].mxu0
        %v1474 = vadd.f32 0.0, %v1473
        %v1475 = vpop.f32.mrb[0].mxu0
        %1476 = vmatprep.mubr.bf16.mxu0 0
        %1477 = vmatmul.mubr.bf16.gmra.mrb[0].mxu0 %v1352
        %v1478 = vpop.f32.mrb[0].mxu0
        %v1479 = vadd.f32 0.0, %v1478
        %v1480 = vpop.f32.mrb[0].mxu0
        %v1481 = vpop.f32.mrb[0].mxu0
        %v1482 = vadd.f32 0.0, %v1481
        %v1483 = vpop.f32.mrb[0].mxu0
        %1484 = vmatprep.mubr.bf16.mxu0 0
        %1485 = vmatmul.mubr.bf16.gmra.mrb[0].mxu0 %v1353
        %v1486 = vpop.f32.mrb[0].mxu0
        %v1487 = vadd.f32 0.0, %v1486
        %v1488 = vpop.f32.mrb[0].mxu0
        %v1489 = vpop.f32.mrb[0].mxu0
        %v1490 = vadd.f32 0.0, %v1489
        %v1491 = vpop.f32.mrb[0].mxu0
        %1492 = vmatprep.mubr.bf16.mxu0 0
        %1493 = vmatmul.mubr.bf16.gmra.mrb[0].mxu0 %v1354
        %v1494 = vpop.f32.mrb[0].mxu0
        %v1495 = vadd.f32 0.0, %v1494
        %v1496 = vpop.f32.mrb[0].mxu0
        %v1497 = vpop.f32.mrb[0].mxu0
        %v1498 = vadd.f32 0.0, %v1497
        %v1499 = vpop.f32.mrb[0].mxu0
        %1500 = vmatprep.mubr.bf16.mxu0 0
        %1501 = vmatmul.mubr.bf16.gmra.mrb[0].mxu0 %v1355
        %v1502 = vpop.f32.mrb[0].mxu0
        %v1503 = vadd.f32 0.0, %v1502
        %v1504 = vpop.f32.mrb[0].mxu0
        %v1505 = vpop.f32.mrb[0].mxu0
        %v1506 = vadd.f32 0.0, %v1505
        %v1507 = vpop.f32.mrb[0].mxu0
        %1508 = vmatprep.mubr.bf16.mxu0 0
        %1509 = vmatmul.mubr.bf16.gmra.mrb[0].mxu0 %v1356
        %v1510 = vpop.f32.mrb[0].mxu0
        %v1511 = vadd.f32 0.0, %v1510
        %v1512 = vpop.f32.mrb[0].mxu0
        %v1513 = vpop.f32.mrb[0].mxu0
        %v1514 = vadd.f32 0.0, %v1513
        %v1515 = vpop.f32.mrb[0].mxu0
        %1516 = vmatprep.mubr.bf16.mxu0 0
        %1517 = vmatmul.mubr.bf16.gmra.mrb[0].mxu0 %v1357
        %v1518 = vpop.f32.mrb[0].mxu0
        %v1519 = vadd.f32 0.0, %v1518
        %v1520 = vpop.f32.mrb[0].mxu0
        %v1521 = vpop.f32.mrb[0].mxu0
        %v1522 = vadd.f32 0.0, %v1521
        %v1523 = vpop.f32.mrb[0].mxu0
        %1524 = vmatprep.mubr.bf16.mxu0 0
        %1525 = vmatmul.mubr.bf16.gmra.mrb[0].mxu0 %v1358
        %v1526 = vpop.f32.mrb[0].mxu0
        %v1527 = vadd.f32 0.0, %v1526
        %v1528 = vpop.f32.mrb[0].mxu0
        %v1529 = vpop.f32.mrb[0].mxu0
        %v1530 = vadd.f32 0.0, %v1529
        %v1531 = vpop.f32.mrb[0].mxu0
        %1532 = vmatprep.mubr.bf16.mxu0 0
        %1533 = vmatmul.mubr.bf16.gmra.mrb[0].mxu0 %v1359
        %v1534 = vpop.f32.mrb[0].mxu0
        %v1535 = vadd.f32 0.0, %v1534
        %v1536 = vpop.f32.mrb[0].mxu0
        %v1537 = vpop.f32.mrb[0].mxu0
        %v1538 = vadd.f32 0.0, %v1537
        %v1539 = vpop.f32.mrb[0].mxu0
        %1540 = vmatprep.mubr.bf16.mxu0 0
        %1541 = vmatmul.mubr.bf16.gmra.mrb[0].mxu0 %v1360
        %v1542 = vpop.f32.mrb[0].mxu0
        %v1543 = vadd.f32 0.0, %v1542
        %v1544 = vpop.f32.mrb[0].mxu0
        %v1545 = vpop.f32.mrb[0].mxu0
        %v1546 = vadd.f32 0.0, %v1545
        %v1547 = vpop.f32.mrb[0].mxu0
        %1548 = vmatprep.mubr.bf16.mxu0 0
        %1549 = vmatmul.mubr.bf16.gmra.mrb[0].mxu0 %v1361
        %v1550 = vpop.f32.mrb[0].mxu0
        %v1551 = vadd.f32 0.0, %v1550
        %v1552 = vpop.f32.mrb[0].mxu0
        %v1553 = vpop.f32.mrb[0].mxu0
        %v1554 = vadd.f32 0.0, %v1553
        %v1555 = vpop.f32.mrb[0].mxu0
        %1556 = vmatprep.mubr.bf16.mxu0 0
        %1557 = vmatmul.mubr.bf16.gmra.mrb[0].mxu0 %v1362
        %v1558 = vpop.f32.mrb[0].mxu0
        %v1559 = vadd.f32 0.0, %v1558
        %v1560 = vpop.f32.mrb[0].mxu0
        %v1561 = vpop.f32.mrb[0].mxu0
        %v1562 = vadd.f32 0.0, %v1561
        %v1563 = vpop.f32.mrb[0].mxu0
        %1564 = vmatprep.mubr.bf16.mxu0 0
        %1565 = vmatmul.mubr.bf16.gmra.mrb[0].mxu0 %v1363
        %v1566 = vpop.f32.mrb[0].mxu0
        %v1567 = vadd.f32 0.0, %v1566
        %v1568 = vpop.f32.mrb[0].mxu0
        %v1569 = vpop.f32.mrb[0].mxu0
        %v1570 = vadd.f32 0.0, %v1569
        %v1571 = vpop.f32.mrb[0].mxu0
        %1572 = vmatprep.mubr.bf16.mxu0 0
        %1573 = vmatmul.mubr.bf16.gmra.mrb[0].mxu0 %v1364
        %v1574 = vpop.f32.mrb[0].mxu0
        %v1575 = vadd.f32 0.0, %v1574
        %v1576 = vpop.f32.mrb[0].mxu0
        %v1577 = vpop.f32.mrb[0].mxu0
        %v1578 = vadd.f32 0.0, %v1577
        %v1579 = vpop.f32.mrb[0].mxu0
        %1580 = vmatprep.mubr.bf16.mxu0 0
        %1581 = vmatmul.mubr.bf16.gmra.mrb[0].mxu0 %v1365
        %v1582 = vpop.f32.mrb[0].mxu0
        %v1583 = vadd.f32 0.0, %v1582
        %v1584 = vpop.f32.mrb[0].mxu0
        %v1585 = vpop.f32.mrb[0].mxu0
        %v1586 = vadd.f32 0.0, %v1585
        %v1587 = vpop.f32.mrb[0].mxu0
        %1588 = vmatprep.mubr.bf16.mxu0 0
        %1589 = vmatmul.mubr.bf16.gmra.mrb[0].mxu0 %v1366
        %v1590 = vpop.f32.mrb[0].mxu0
        %v1591 = vadd.f32 0.0, %v1590
        %v1592 = vpop.f32.mrb[0].mxu0
        %v1593 = vpop.f32.mrb[0].mxu0
        %v1594 = vadd.f32 0.0, %v1593
        %v1595 = vpop.f32.mrb[0].mxu0
        %1596 = vmatprep.mubr.bf16.mxu0 0
        %1597 = vmatmul.mubr.bf16.gmra.mrb[0].mxu0 %v1367
        %v1598 = vpop.f32.mrb[0].mxu0
        %v1599 = vadd.f32 0.0, %v1598
        %v1600 = vpop.f32.mrb[0].mxu0
        %v1601 = vpop.f32.mrb[0].mxu0
        %v1602 = vadd.f32 0.0, %v1601
        %v1603 = vpop.f32.mrb[0].mxu0
        %1604 = vmatprep.mubr.bf16.mxu0 0
        %1605 = vmatmul.mubr.bf16.gmra.mrb[0].mxu0 %v1368
        %v1606 = vpop.f32.mrb[0].mxu0
        %v1607 = vadd.f32 0.0, %v1606
        %v1608 = vpop.f32.mrb[0].mxu0
        %v1609 = vpop.f32.mrb[0].mxu0
        %v1610 = vadd.f32 0.0, %v1609
        %v1611 = vpop.f32.mrb[0].mxu0
        %1612 = vmatprep.mubr.bf16.mxu0 0
        %1613 = vmatmul.mubr.bf16.gmra.mrb[0].mxu0 %v1369
        %v1614 = vpop.f32.mrb[0].mxu0
        %v1615 = vadd.f32 0.0, %v1614
        %v1616 = vpop.f32.mrb[0].mxu0
        %v1617 = vpop.f32.mrb[0].mxu0
        %v1618 = vadd.f32 0.0, %v1617
        %v1619 = vpop.f32.mrb[0].mxu0
        %1620 = vmatprep.mubr.bf16.mxu0 0
        %1621 = vmatmul.mubr.bf16.gmra.mrb[0].mxu0 %v1370
        %v1622 = vpop.f32.mrb[0].mxu0
        %v1623 = vadd.f32 0.0, %v1622
        %v1624 = vpop.f32.mrb[0].mxu0
        %v1625 = vpop.f32.mrb[0].mxu0
        %v1626 = vadd.f32 0.0, %v1625
        %v1627 = vpop.f32.mrb[0].mxu0
        %1628 = vmatprep.mubr.bf16.mxu0 0
        %1629 = vmatmul.mubr.bf16.gmra.mrb[0].mxu0 %v1371
        %v1630 = vpop.f32.mrb[0].mxu0
        %v1631 = vadd.f32 0.0, %v1630
        %v1632 = vpop.f32.mrb[0].mxu0
        %v1633 = vpop.f32.mrb[0].mxu0
        %v1634 = vpop.f32.mrb[0].mxu0
        %1635 = vdwg.mxu0
        %v1652 = vunpack.c.l.b16 %v1294
        %v1653 = vunpack.c.l.b16 %v1295
        %v1654 = vunpack.c.l.b16 %v1296
        %v1655 = vunpack.c.l.b16 %v1297
        %v1656 = vunpack.c.l.b16 %v1298
        %v1657 = vunpack.c.l.b16 %v1299
        %v1658 = vunpack.c.l.b16 %v1300
        %v1659 = vunpack.c.l.b16 %v1301
        %v1660 = vunpack.c.l.b16 %v1302
        %v1661 = vunpack.c.l.b16 %v1303
        %v1662 = vunpack.c.l.b16 %v1304
        %v1663 = vunpack.c.l.b16 %v1305
        %v1664 = vunpack.c.l.b16 %v1306
        %v1665 = vunpack.c.l.b16 %v1307
        %v1666 = vunpack.c.l.b16 %v1308
        %v1667 = vunpack.c.l.b16 %v1309
        %v1668 = vpack.c.b16 %v1653, %v1652
        %v1669 = vpack.c.b16 %v1655, %v1654
        %v1670 = vpack.c.b16 %v1657, %v1656
        %v1671 = vpack.c.b16 %v1659, %v1658
        %v1672 = vpack.c.b16 %v1661, %v1660
        %v1673 = vpack.c.b16 %v1663, %v1662
        %v1674 = vpack.c.b16 %v1665, %v1664
        %v1675 = vpack.c.b16 %v1667, %v1666
        %1684 = vmatprep.subr.bf16.mxu0 0
        %1685 = vmatpush1.bf16.msra.mxu0 %v1668
        %1686 = vmatprep.subr.bf16.mxu0 0
        %1687 = vmatpush1.bf16.msra.mxu0 %v1669
        %1688 = vmatprep.subr.bf16.mxu0 0
        %1689 = vmatpush1.bf16.msra.mxu0 %v1670
        %1690 = vmatprep.subr.bf16.mxu0 0
        %1691 = vmatpush1.bf16.msra.mxu0 %v1671
        %1692 = vmatprep.subr.bf16.mxu0 0
        %1693 = vmatpush1.bf16.msra.mxu0 %v1672
        %1694 = vmatprep.subr.bf16.mxu0 0
        %1695 = vmatpush1.bf16.msra.mxu0 %v1673
        %1696 = vmatprep.subr.bf16.mxu0 0
        %1697 = vmatpush1.bf16.msra.mxu0 %v1674
        %1698 = vmatprep.subr.bf16.mxu0 0
        %1699 = vmatpush1.bf16.msra.mxu0 %v1675
        %1700 = vmatprep.subr.bf16.mxu0 0
        %1701 = vmatpush1.bf16.msra.mxu0 0
        %1702 = vmatprep.subr.bf16.mxu0 0
        %1703 = vmatpush1.bf16.msra.mxu0 0
        %1704 = vmatprep.subr.bf16.mxu0 0
        %1705 = vmatpush1.bf16.msra.mxu0 0
        %1706 = vmatprep.subr.bf16.mxu0 0
        %1707 = vmatpush1.bf16.msra.mxu0 0
        %1708 = vmatprep.subr.bf16.mxu0 0
        %1709 = vmatpush1.bf16.msra.mxu0 0
        %1710 = vmatprep.subr.bf16.mxu0 0
        %1711 = vmatpush1.bf16.msra.mxu0 0
        %1712 = vmatprep.subr.bf16.mxu0 0
        %1713 = vmatpush1.bf16.msra.mxu0 0
        %1714 = vmatprep.subr.bf16.mxu0 0
        %1715 = vmatpush1.bf16.msra.mxu0 0
        %1716 = vmatprep.mubr.bf16.mxu0 0
        %1717 = vmatmul.mubr.bf16.gmra.mrb[0].mxu0 %v1273
        %v1718 = vpop.f32.mrb[0].mxu0
        %v1719 = vadd.f32 %v1471, %v1718
        %v1720 = vpop.f32.mrb[0].mxu0
        %v1721 = vpop.f32.mrb[0].mxu0
        %v1722 = vadd.f32 %v1474, %v1721
        %v1723 = vpop.f32.mrb[0].mxu0
        %1724 = vmatprep.mubr.bf16.mxu0 0
        %1725 = vmatmul.mubr.bf16.gmra.mrb[0].mxu0 %v1274
        %v1726 = vpop.f32.mrb[0].mxu0
        %v1727 = vadd.f32 %v1479, %v1726
        %v1728 = vpop.f32.mrb[0].mxu0
        %v1729 = vpop.f32.mrb[0].mxu0
        %v1730 = vadd.f32 %v1482, %v1729
        %v1731 = vpop.f32.mrb[0].mxu0
        %1732 = vmatprep.mubr.bf16.mxu0 0
        %1733 = vmatmul.mubr.bf16.gmra.mrb[0].mxu0 %v1275
        %v1734 = vpop.f32.mrb[0].mxu0
        %v1735 = vadd.f32 %v1487, %v1734
        %v1736 = vpop.f32.mrb[0].mxu0
        %v1737 = vpop.f32.mrb[0].mxu0
        %v1738 = vadd.f32 %v1490, %v1737
        %v1739 = vpop.f32.mrb[0].mxu0
        %1740 = vmatprep.mubr.bf16.mxu0 0
        %1741 = vmatmul.mubr.bf16.gmra.mrb[0].mxu0 %v1276
        %v1742 = vpop.f32.mrb[0].mxu0
        %v1743 = vadd.f32 %v1495, %v1742
        %v1744 = vpop.f32.mrb[0].mxu0
        %v1745 = vpop.f32.mrb[0].mxu0
        %v1746 = vadd.f32 %v1498, %v1745
        %v1747 = vpop.f32.mrb[0].mxu0
        %1748 = vmatprep.mubr.bf16.mxu0 0
        %1749 = vmatmul.mubr.bf16.gmra.mrb[0].mxu0 %v1277
        %v1750 = vpop.f32.mrb[0].mxu0
        %v1751 = vadd.f32 %v1503, %v1750
        %v1752 = vpop.f32.mrb[0].mxu0
        %v1753 = vpop.f32.mrb[0].mxu0
        %v1754 = vadd.f32 %v1506, %v1753
        %v1755 = vpop.f32.mrb[0].mxu0
        %1756 = vmatprep.mubr.bf16.mxu0 0
        %1757 = vmatmul.mubr.bf16.gmra.mrb[0].mxu0 %v1278
        %v1758 = vpop.f32.mrb[0].mxu0
        %v1759 = vadd.f32 %v1511, %v1758
        %v1760 = vpop.f32.mrb[0].mxu0
        %v1761 = vpop.f32.mrb[0].mxu0
        %v1762 = vadd.f32 %v1514, %v1761
        %v1763 = vpop.f32.mrb[0].mxu0
        %1764 = vmatprep.mubr.bf16.mxu0 0
        %1765 = vmatmul.mubr.bf16.gmra.mrb[0].mxu0 %v1279
        %v1766 = vpop.f32.mrb[0].mxu0
        %v1767 = vadd.f32 %v1519, %v1766
        %v1768 = vpop.f32.mrb[0].mxu0
        %v1769 = vpop.f32.mrb[0].mxu0
        %v1770 = vadd.f32 %v1522, %v1769
        %v1771 = vpop.f32.mrb[0].mxu0
        %1772 = vmatprep.mubr.bf16.mxu0 0
        %1773 = vmatmul.mubr.bf16.gmra.mrb[0].mxu0 %v1280
        %v1774 = vpop.f32.mrb[0].mxu0
        %v1775 = vadd.f32 %v1527, %v1774
        %v1776 = vpop.f32.mrb[0].mxu0
        %v1777 = vpop.f32.mrb[0].mxu0
        %v1778 = vadd.f32 %v1530, %v1777
        %v1779 = vpop.f32.mrb[0].mxu0
        %1780 = vmatprep.mubr.bf16.mxu0 0
        %1781 = vmatmul.mubr.bf16.gmra.mrb[0].mxu0 %v1281
        %v1782 = vpop.f32.mrb[0].mxu0
        %v1783 = vadd.f32 %v1535, %v1782
        %v1784 = vpop.f32.mrb[0].mxu0
        %v1785 = vpop.f32.mrb[0].mxu0
        %v1786 = vadd.f32 %v1538, %v1785
        %v1787 = vpop.f32.mrb[0].mxu0
        %1788 = vmatprep.mubr.bf16.mxu0 0
        %1789 = vmatmul.mubr.bf16.gmra.mrb[0].mxu0 %v1282
        %v1790 = vpop.f32.mrb[0].mxu0
        %v1791 = vadd.f32 %v1543, %v1790
        %v1792 = vpop.f32.mrb[0].mxu0
        %v1793 = vpop.f32.mrb[0].mxu0
        %v1794 = vadd.f32 %v1546, %v1793
        %v1795 = vpop.f32.mrb[0].mxu0
        %1796 = vmatprep.mubr.bf16.mxu0 0
        %1797 = vmatmul.mubr.bf16.gmra.mrb[0].mxu0 %v1283
        %v1798 = vpop.f32.mrb[0].mxu0
        %v1799 = vadd.f32 %v1551, %v1798
        %v1800 = vpop.f32.mrb[0].mxu0
        %v1801 = vpop.f32.mrb[0].mxu0
        %v1802 = vadd.f32 %v1554, %v1801
        %v1803 = vpop.f32.mrb[0].mxu0
        %1804 = vmatprep.mubr.bf16.mxu0 0
        %1805 = vmatmul.mubr.bf16.gmra.mrb[0].mxu0 %v1284
        %v1806 = vpop.f32.mrb[0].mxu0
        %v1807 = vadd.f32 %v1559, %v1806
        %v1808 = vpop.f32.mrb[0].mxu0
        %v1809 = vpop.f32.mrb[0].mxu0
        %v1810 = vadd.f32 %v1562, %v1809
        %v1811 = vpop.f32.mrb[0].mxu0
        %1812 = vmatprep.mubr.bf16.mxu0 0
        %1813 = vmatmul.mubr.bf16.gmra.mrb[0].mxu0 %v1285
        %v1814 = vpop.f32.mrb[0].mxu0
        %v1815 = vadd.f32 %v1567, %v1814
        %v1816 = vpop.f32.mrb[0].mxu0
        %v1817 = vpop.f32.mrb[0].mxu0
        %v1818 = vadd.f32 %v1570, %v1817
        %v1819 = vpop.f32.mrb[0].mxu0
        %1820 = vmatprep.mubr.bf16.mxu0 0
        %1821 = vmatmul.mubr.bf16.gmra.mrb[0].mxu0 %v1286
        %v1822 = vpop.f32.mrb[0].mxu0
        %v1823 = vadd.f32 %v1575, %v1822
        %v1824 = vpop.f32.mrb[0].mxu0
        %v1825 = vpop.f32.mrb[0].mxu0
        %v1826 = vadd.f32 %v1578, %v1825
        %v1827 = vpop.f32.mrb[0].mxu0
        %1828 = vmatprep.mubr.bf16.mxu0 0
        %1829 = vmatmul.mubr.bf16.gmra.mrb[0].mxu0 %v1287
        %v1830 = vpop.f32.mrb[0].mxu0
        %v1831 = vadd.f32 %v1583, %v1830
        %v1832 = vpop.f32.mrb[0].mxu0
        %v1833 = vpop.f32.mrb[0].mxu0
        %v1834 = vadd.f32 %v1586, %v1833
        %v1835 = vpop.f32.mrb[0].mxu0
        %1836 = vmatprep.mubr.bf16.mxu0 0
        %1837 = vmatmul.mubr.bf16.gmra.mrb[0].mxu0 %v1288
        %v1838 = vpop.f32.mrb[0].mxu0
        %v1839 = vadd.f32 %v1591, %v1838
        %v1840 = vpop.f32.mrb[0].mxu0
        %v1841 = vpop.f32.mrb[0].mxu0
        %v1842 = vadd.f32 %v1594, %v1841
        %v1843 = vpop.f32.mrb[0].mxu0
        %1844 = vmatprep.mubr.bf16.mxu0 0
        %1845 = vmatmul.mubr.bf16.gmra.mrb[0].mxu0 %v1289
        %v1846 = vpop.f32.mrb[0].mxu0
        %v1847 = vadd.f32 %v1599, %v1846
        %v1848 = vpop.f32.mrb[0].mxu0
        %v1849 = vpop.f32.mrb[0].mxu0
        %v1850 = vadd.f32 %v1602, %v1849
        %v1851 = vpop.f32.mrb[0].mxu0
        %1852 = vmatprep.mubr.bf16.mxu0 0
        %1853 = vmatmul.mubr.bf16.gmra.mrb[0].mxu0 %v1290
        %v1854 = vpop.f32.mrb[0].mxu0
        %v1855 = vadd.f32 %v1607, %v1854
        %v1856 = vpop.f32.mrb[0].mxu0
        %v1857 = vpop.f32.mrb[0].mxu0
        %v1858 = vadd.f32 %v1610, %v1857
        %v1859 = vpop.f32.mrb[0].mxu0
        %1860 = vmatprep.mubr.bf16.mxu0 0
        %1861 = vmatmul.mubr.bf16.gmra.mrb[0].mxu0 %v1291
        %v1862 = vpop.f32.mrb[0].mxu0
        %v1863 = vadd.f32 %v1615, %v1862
        %v1864 = vpop.f32.mrb[0].mxu0
        %v1865 = vpop.f32.mrb[0].mxu0
        %v1866 = vadd.f32 %v1618, %v1865
        %v1867 = vpop.f32.mrb[0].mxu0
        %1868 = vmatprep.mubr.bf16.mxu0 0
        %1869 = vmatmul.mubr.bf16.gmra.mrb[0].mxu0 %v1292
        %v1870 = vpop.f32.mrb[0].mxu0
        %v1871 = vadd.f32 %v1623, %v1870
        %v1872 = vpop.f32.mrb[0].mxu0
        %v1873 = vpop.f32.mrb[0].mxu0
        %v1874 = vadd.f32 %v1626, %v1873
        %v1875 = vpop.f32.mrb[0].mxu0
        %1876 = vmatprep.mubr.bf16.mxu0 0
        %1877 = vmatmul.mubr.bf16.gmra.mrb[0].mxu0 %v1293
        %v1878 = vpop.f32.mrb[0].mxu0
        %v1879 = vadd.f32 %v1631, %v1878
        %v1880 = vpop.f32.mrb[0].mxu0
        %v1881 = vpop.f32.mrb[0].mxu0
        %v1882 = vpop.f32.mrb[0].mxu0
        %1883 = vdwg.mxu0
        %v1884 = vld [vmem:[#allocation2 + $0x7] sm:$0xff]
        %v1885 = vld [vmem:[#allocation2 + $0xf] sm:$0xff]
        %v1886 = vld [vmem:[#allocation2 + $0x17] sm:$0xff]
        %v1887 = vld [vmem:[#allocation2 + $0x1f] sm:$0xff]
        %v1888 = vld [vmem:[#allocation2 + $0x27] sm:$0xff]
        %v1889 = vld [vmem:[#allocation2 + $0x2f] sm:$0xff]
        %v1890 = vld [vmem:[#allocation2 + $0x37] sm:$0xff]
        %v1891 = vld [vmem:[#allocation2 + $0x3f] sm:$0xff]
        %v1892 = vld [vmem:[#allocation2 + $0x47] sm:$0xff]
        %v1893 = vld [vmem:[#allocation2 + $0x4f] sm:$0xff]
        %v1894 = vld [vmem:[#allocation2 + $0x57] sm:$0xff]
        %v1895 = vld [vmem:[#allocation2 + $0x5f] sm:$0xff]
        %v1896 = vld [vmem:[#allocation2 + $0x67] sm:$0xff]
        %v1897 = vld [vmem:[#allocation2 + $0x6f] sm:$0xff]
        %v1898 = vld [vmem:[#allocation2 + $0x77] sm:$0xff]
        %v1899 = vld [vmem:[#allocation2 + $0x7f] sm:$0xff]
        %v1900 = vld [vmem:[#allocation2 + $0x87] sm:$0xff]
        %v1901 = vld [vmem:[#allocation2 + $0x8f] sm:$0xff]
        %v1902 = vld [vmem:[#allocation2 + $0x97] sm:$0xff]
        %v1903 = vld [vmem:[#allocation2 + $0x9f] sm:$0xff]
        %v1904 = vld [vmem:[#allocation2 + $0xa7] sm:$0xff]
        %v1905 = vld [vmem:[#allocation2 + $0xaf] sm:$0xff]
        %v1906 = vld [vmem:[#allocation2 + $0xb7] sm:$0xff]
        %v1907 = vld [vmem:[#allocation2 + $0xbf] sm:$0xff]
        %v1908 = vld [vmem:[#allocation2 + $0xc7] sm:$0xff]
        %v1909 = vld [vmem:[#allocation2 + $0xcf] sm:$0xff]
        %v1910 = vld [vmem:[#allocation2 + $0xd7] sm:$0xff]
        %v1911 = vld [vmem:[#allocation2 + $0xdf] sm:$0xff]
        %v1912 = vld [vmem:[#allocation2 + $0xe7] sm:$0xff]
        %v1913 = vld [vmem:[#allocation2 + $0xef] sm:$0xff]
        %v1914 = vld [vmem:[#allocation2 + $0xf7] sm:$0xff]
        %v1915 = vld [vmem:[#allocation2 + $0xff] sm:$0xff]
        %v1916 = vld [vmem:[#allocation2 + $0x107] sm:$0xff]
        %v1917 = vld [vmem:[#allocation2 + $0x10f] sm:$0xff]
        %v1918 = vld [vmem:[#allocation2 + $0x117] sm:$0xff]
        %v1919 = vld [vmem:[#allocation2 + $0x11f] sm:$0xff]
        %v1920 = vld [vmem:[#allocation2 + $0x127] sm:$0xff]
        %v1921 = vld [vmem:[#allocation2 + $0x12f] sm:$0xff]
        %v1922 = vld [vmem:[#allocation2 + $0x137] sm:$0xff]
        %v1923 = vld [vmem:[#allocation2 + $0x13f] sm:$0xff]
        %v1924 = vld [vmem:[#allocation2 + $0x147] sm:$0xff]
        %v1925 = vpack.c.bf16 %v1885, %v1884
        %v1926 = vpack.c.bf16 %v1887, %v1886
        %v1927 = vpack.c.bf16 %v1889, %v1888
        %v1928 = vpack.c.bf16 %v1891, %v1890
        %v1929 = vpack.c.bf16 %v1893, %v1892
        %v1930 = vpack.c.bf16 %v1895, %v1894
        %v1931 = vpack.c.bf16 %v1897, %v1896
        %v1932 = vpack.c.bf16 %v1899, %v1898
        %v1933 = vpack.c.bf16 %v1901, %v1900
        %v1934 = vpack.c.bf16 %v1903, %v1902
        %v1935 = vpack.c.bf16 %v1905, %v1904
        %v1936 = vpack.c.bf16 %v1907, %v1906
        %v1937 = vpack.c.bf16 %v1909, %v1908
        %v1938 = vpack.c.bf16 %v1911, %v1910
        %v1939 = vpack.c.bf16 %v1913, %v1912
        %v1940 = vpack.c.bf16 %v1915, %v1914
        %v1941 = vpack.c.bf16 %v1917, %v1916
        %v1942 = vpack.c.bf16 %v1919, %v1918
        %v1943 = vpack.c.bf16 %v1921, %v1920
        %v1944 = vpack.c.bf16 %v1923, %v1922
        %v1945 = vpack.c.bf16 %v1924, %v1924
        %v1946 = vld [vmem:[#allocation11 + $0x80] sm:$0xf]
        %v1947 = vld [vmem:[#allocation11 + $0x84] sm:$0xf]
        %v1948 = vld [vmem:[#allocation11 + $0x88] sm:$0xf]
        %v1949 = vld [vmem:[#allocation11 + $0x8c] sm:$0xf]
        %v1950 = vld [vmem:[#allocation11 + $0x90] sm:$0xf]
        %v1951 = vld [vmem:[#allocation11 + $0x94] sm:$0xf]
        %v1952 = vld [vmem:[#allocation11 + $0x98] sm:$0xf]
        %v1953 = vld [vmem:[#allocation11 + $0x9c] sm:$0xf]
        %v1954 = vld [vmem:[#allocation11 + $0xa0] sm:$0xf]
        %v1955 = vld [vmem:[#allocation11 + $0xa4] sm:$0xf]
        %v1956 = vld [vmem:[#allocation11 + $0xa8] sm:$0xf]
        %v1957 = vld [vmem:[#allocation11 + $0xac] sm:$0xf]
        %v1958 = vld [vmem:[#allocation11 + $0xb0] sm:$0xf]
        %v1959 = vld [vmem:[#allocation11 + $0xb4] sm:$0xf]
        %v1960 = vld [vmem:[#allocation11 + $0xb8] sm:$0xf]
        %v1961 = vld [vmem:[#allocation11 + $0xbc] sm:$0xf]
        %v1978 = vunpack.c.l.b16 %v1946
        %v1979 = vunpack.c.l.b16 %v1947
        %v1980 = vunpack.c.l.b16 %v1948
        %v1981 = vunpack.c.l.b16 %v1949
        %v1982 = vunpack.c.l.b16 %v1950
        %v1983 = vunpack.c.l.b16 %v1951
        %v1984 = vunpack.c.l.b16 %v1952
        %v1985 = vunpack.c.l.b16 %v1953
        %v1986 = vunpack.c.l.b16 %v1954
        %v1987 = vunpack.c.l.b16 %v1955
        %v1988 = vunpack.c.l.b16 %v1956
        %v1989 = vunpack.c.l.b16 %v1957
        %v1990 = vunpack.c.l.b16 %v1958
        %v1991 = vunpack.c.l.b16 %v1959
        %v1992 = vunpack.c.l.b16 %v1960
        %v1993 = vunpack.c.l.b16 %v1961
        %v1994 = vpack.c.b16 %v1979, %v1978
        %v1995 = vpack.c.b16 %v1981, %v1980
        %v1996 = vpack.c.b16 %v1983, %v1982
        %v1997 = vpack.c.b16 %v1985, %v1984
        %v1998 = vpack.c.b16 %v1987, %v1986
        %v1999 = vpack.c.b16 %v1989, %v1988
        %v2000 = vpack.c.b16 %v1991, %v1990
        %v2001 = vpack.c.b16 %v1993, %v1992
        %2010 = vmatprep.subr.bf16.mxu0 0
        %2011 = vmatpush1.bf16.msra.mxu0 %v1994
        %2012 = vmatprep.subr.bf16.mxu0 0
        %2013 = vmatpush1.bf16.msra.mxu0 %v1995
        %2014 = vmatprep.subr.bf16.mxu0 0
        %2015 = vmatpush1.bf16.msra.mxu0 %v1996
        %2016 = vmatprep.subr.bf16.mxu0 0
        %2017 = vmatpush1.bf16.msra.mxu0 %v1997
        %2018 = vmatprep.subr.bf16.mxu0 0
        %2019 = vmatpush1.bf16.msra.mxu0 %v1998
        %2020 = vmatprep.subr.bf16.mxu0 0
        %2021 = vmatpush1.bf16.msra.mxu0 %v1999
        %2022 = vmatprep.subr.bf16.mxu0 0
        %2023 = vmatpush1.bf16.msra.mxu0 %v2000
        %2024 = vmatprep.subr.bf16.mxu0 0
        %2025 = vmatpush1.bf16.msra.mxu0 %v2001
        %2026 = vmatprep.subr.bf16.mxu0 0
        %2027 = vmatpush1.bf16.msra.mxu0 0
        %2028 = vmatprep.subr.bf16.mxu0 0
        %2029 = vmatpush1.bf16.msra.mxu0 0
        %2030 = vmatprep.subr.bf16.mxu0 0
        %2031 = vmatpush1.bf16.msra.mxu0 0
        %2032 = vmatprep.subr.bf16.mxu0 0
        %2033 = vmatpush1.bf16.msra.mxu0 0
        %2034 = vmatprep.subr.bf16.mxu0 0
        %2035 = vmatpush1.bf16.msra.mxu0 0
        %2036 = vmatprep.subr.bf16.mxu0 0
        %2037 = vmatpush1.bf16.msra.mxu0 0
        %2038 = vmatprep.subr.bf16.mxu0 0
        %2039 = vmatpush1.bf16.msra.mxu0 0
        %2040 = vmatprep.subr.bf16.mxu0 0
        %2041 = vmatpush1.bf16.msra.mxu0 0
        %2042 = vmatprep.mubr.bf16.mxu0 0
        %2043 = vmatmul.mubr.bf16.gmra.mrb[0].mxu0 %v1925
        %v2044 = vpop.f32.mrb[0].mxu0
        %v2045 = vadd.f32 0.0, %v2044
        %v2046 = vpop.f32.mrb[0].mxu0
        %v2047 = vpop.f32.mrb[0].mxu0
        %v2048 = vadd.f32 0.0, %v2047
        %v2049 = vpop.f32.mrb[0].mxu0
        %2050 = vmatprep.mubr.bf16.mxu0 0
        %2051 = vmatmul.mubr.bf16.gmra.mrb[0].mxu0 %v1926
        %v2052 = vpop.f32.mrb[0].mxu0
        %v2053 = vadd.f32 0.0, %v2052
        %v2054 = vpop.f32.mrb[0].mxu0
        %v2055 = vpop.f32.mrb[0].mxu0
        %v2056 = vadd.f32 0.0, %v2055
        %v2057 = vpop.f32.mrb[0].mxu0
        %2058 = vmatprep.mubr.bf16.mxu0 0
        %2059 = vmatmul.mubr.bf16.gmra.mrb[0].mxu0 %v1927
        %v2060 = vpop.f32.mrb[0].mxu0
        %v2061 = vadd.f32 0.0, %v2060
        %v2062 = vpop.f32.mrb[0].mxu0
        %v2063 = vpop.f32.mrb[0].mxu0
        %v2064 = vadd.f32 0.0, %v2063
        %v2065 = vpop.f32.mrb[0].mxu0
        %2066 = vmatprep.mubr.bf16.mxu0 0
        %2067 = vmatmul.mubr.bf16.gmra.mrb[0].mxu0 %v1928
        %v2068 = vpop.f32.mrb[0].mxu0
        %v2069 = vadd.f32 0.0, %v2068
        %v2070 = vpop.f32.mrb[0].mxu0
        %v2071 = vpop.f32.mrb[0].mxu0
        %v2072 = vadd.f32 0.0, %v2071
        %v2073 = vpop.f32.mrb[0].mxu0
        %2074 = vmatprep.mubr.bf16.mxu0 0
        %2075 = vmatmul.mubr.bf16.gmra.mrb[0].mxu0 %v1929
        %v2076 = vpop.f32.mrb[0].mxu0
        %v2077 = vadd.f32 0.0, %v2076
        %v2078 = vpop.f32.mrb[0].mxu0
        %v2079 = vpop.f32.mrb[0].mxu0
        %v2080 = vadd.f32 0.0, %v2079
        %v2081 = vpop.f32.mrb[0].mxu0
        %2082 = vmatprep.mubr.bf16.mxu0 0
        %2083 = vmatmul.mubr.bf16.gmra.mrb[0].mxu0 %v1930
        %v2084 = vpop.f32.mrb[0].mxu0
        %v2085 = vadd.f32 0.0, %v2084
        %v2086 = vpop.f32.mrb[0].mxu0
        %v2087 = vpop.f32.mrb[0].mxu0
        %v2088 = vadd.f32 0.0, %v2087
        %v2089 = vpop.f32.mrb[0].mxu0
        %2090 = vmatprep.mubr.bf16.mxu0 0
        %2091 = vmatmul.mubr.bf16.gmra.mrb[0].mxu0 %v1931
        %v2092 = vpop.f32.mrb[0].mxu0
        %v2093 = vadd.f32 0.0, %v2092
        %v2094 = vpop.f32.mrb[0].mxu0
        %v2095 = vpop.f32.mrb[0].mxu0
        %v2096 = vadd.f32 0.0, %v2095
        %v2097 = vpop.f32.mrb[0].mxu0
        %2098 = vmatprep.mubr.bf16.mxu0 0
        %2099 = vmatmul.mubr.bf16.gmra.mrb[0].mxu0 %v1932
        %v2100 = vpop.f32.mrb[0].mxu0
        %v2101 = vadd.f32 0.0, %v2100
        %v2102 = vpop.f32.mrb[0].mxu0
        %v2103 = vpop.f32.mrb[0].mxu0
        %v2104 = vadd.f32 0.0, %v2103
        %v2105 = vpop.f32.mrb[0].mxu0
        %2106 = vmatprep.mubr.bf16.mxu0 0
        %2107 = vmatmul.mubr.bf16.gmra.mrb[0].mxu0 %v1933
        %v2108 = vpop.f32.mrb[0].mxu0
        %v2109 = vadd.f32 0.0, %v2108
        %v2110 = vpop.f32.mrb[0].mxu0
        %v2111 = vpop.f32.mrb[0].mxu0
        %v2112 = vadd.f32 0.0, %v2111
        %v2113 = vpop.f32.mrb[0].mxu0
        %2114 = vmatprep.mubr.bf16.mxu0 0
        %2115 = vmatmul.mubr.bf16.gmra.mrb[0].mxu0 %v1934
        %v2116 = vpop.f32.mrb[0].mxu0
        %v2117 = vadd.f32 0.0, %v2116
        %v2118 = vpop.f32.mrb[0].mxu0
        %v2119 = vpop.f32.mrb[0].mxu0
        %v2120 = vadd.f32 0.0, %v2119
        %v2121 = vpop.f32.mrb[0].mxu0
        %2122 = vmatprep.mubr.bf16.mxu0 0
        %2123 = vmatmul.mubr.bf16.gmra.mrb[0].mxu0 %v1935
        %v2124 = vpop.f32.mrb[0].mxu0
        %v2125 = vadd.f32 0.0, %v2124
        %v2126 = vpop.f32.mrb[0].mxu0
        %v2127 = vpop.f32.mrb[0].mxu0
        %v2128 = vadd.f32 0.0, %v2127
        %v2129 = vpop.f32.mrb[0].mxu0
        %2130 = vmatprep.mubr.bf16.mxu0 0
        %2131 = vmatmul.mubr.bf16.gmra.mrb[0].mxu0 %v1936
        %v2132 = vpop.f32.mrb[0].mxu0
        %v2133 = vadd.f32 0.0, %v2132
        %v2134 = vpop.f32.mrb[0].mxu0
        %v2135 = vpop.f32.mrb[0].mxu0
        %v2136 = vadd.f32 0.0, %v2135
        %v2137 = vpop.f32.mrb[0].mxu0
        %2138 = vmatprep.mubr.bf16.mxu0 0
        %2139 = vmatmul.mubr.bf16.gmra.mrb[0].mxu0 %v1937
        %v2140 = vpop.f32.mrb[0].mxu0
        %v2141 = vadd.f32 0.0, %v2140
        %v2142 = vpop.f32.mrb[0].mxu0
        %v2143 = vpop.f32.mrb[0].mxu0
        %v2144 = vadd.f32 0.0, %v2143
        %v2145 = vpop.f32.mrb[0].mxu0
        %2146 = vmatprep.mubr.bf16.mxu0 0
        %2147 = vmatmul.mubr.bf16.gmra.mrb[0].mxu0 %v1938
        %v2148 = vpop.f32.mrb[0].mxu0
        %v2149 = vadd.f32 0.0, %v2148
        %v2150 = vpop.f32.mrb[0].mxu0
        %v2151 = vpop.f32.mrb[0].mxu0
        %v2152 = vadd.f32 0.0, %v2151
        %v2153 = vpop.f32.mrb[0].mxu0
        %2154 = vmatprep.mubr.bf16.mxu0 0
        %2155 = vmatmul.mubr.bf16.gmra.mrb[0].mxu0 %v1939
        %v2156 = vpop.f32.mrb[0].mxu0
        %v2157 = vadd.f32 0.0, %v2156
        %v2158 = vpop.f32.mrb[0].mxu0
        %v2159 = vpop.f32.mrb[0].mxu0
        %v2160 = vadd.f32 0.0, %v2159
        %v2161 = vpop.f32.mrb[0].mxu0
        %2162 = vmatprep.mubr.bf16.mxu0 0
        %2163 = vmatmul.mubr.bf16.gmra.mrb[0].mxu0 %v1940
        %v2164 = vpop.f32.mrb[0].mxu0
        %v2165 = vadd.f32 0.0, %v2164
        %v2166 = vpop.f32.mrb[0].mxu0
        %v2167 = vpop.f32.mrb[0].mxu0
        %v2168 = vadd.f32 0.0, %v2167
        %v2169 = vpop.f32.mrb[0].mxu0
        %2170 = vmatprep.mubr.bf16.mxu0 0
        %2171 = vmatmul.mubr.bf16.gmra.mrb[0].mxu0 %v1941
        %v2172 = vpop.f32.mrb[0].mxu0
        %v2173 = vadd.f32 0.0, %v2172
        %v2174 = vpop.f32.mrb[0].mxu0
        %v2175 = vpop.f32.mrb[0].mxu0
        %v2176 = vadd.f32 0.0, %v2175
        %v2177 = vpop.f32.mrb[0].mxu0
        %2178 = vmatprep.mubr.bf16.mxu0 0
        %2179 = vmatmul.mubr.bf16.gmra.mrb[0].mxu0 %v1942
        %v2180 = vpop.f32.mrb[0].mxu0
        %v2181 = vadd.f32 0.0, %v2180
        %v2182 = vpop.f32.mrb[0].mxu0
        %v2183 = vpop.f32.mrb[0].mxu0
        %v2184 = vadd.f32 0.0, %v2183
        %v2185 = vpop.f32.mrb[0].mxu0
        %2186 = vmatprep.mubr.bf16.mxu0 0
        %2187 = vmatmul.mubr.bf16.gmra.mrb[0].mxu0 %v1943
        %v2188 = vpop.f32.mrb[0].mxu0
        %v2189 = vadd.f32 0.0, %v2188
        %v2190 = vpop.f32.mrb[0].mxu0
        %v2191 = vpop.f32.mrb[0].mxu0
        %v2192 = vadd.f32 0.0, %v2191
        %v2193 = vpop.f32.mrb[0].mxu0
        %2194 = vmatprep.mubr.bf16.mxu0 0
        %2195 = vmatmul.mubr.bf16.gmra.mrb[0].mxu0 %v1944
        %v2196 = vpop.f32.mrb[0].mxu0
        %v2197 = vadd.f32 0.0, %v2196
        %v2198 = vpop.f32.mrb[0].mxu0
        %v2199 = vpop.f32.mrb[0].mxu0
        %v2200 = vadd.f32 0.0, %v2199
        %v2201 = vpop.f32.mrb[0].mxu0
        %2202 = vmatprep.mubr.bf16.mxu0 0
        %2203 = vmatmul.mubr.bf16.gmra.mrb[0].mxu0 %v1945
        %v2204 = vpop.f32.mrb[0].mxu0
        %v2205 = vadd.f32 0.0, %v2204
        %v2206 = vpop.f32.mrb[0].mxu0
        %v2207 = vpop.f32.mrb[0].mxu0
        %v2208 = vpop.f32.mrb[0].mxu0
        %2209 = vdwg.mxu0
        %v2210 = vadd.f32 %v1719, %v2045
        %v2211 = vadd.f32 %v1722, %v2048
        %v2212 = vadd.f32 %v1727, %v2053
        %v2213 = vadd.f32 %v1730, %v2056
        %v2214 = vadd.f32 %v1735, %v2061
        %v2215 = vadd.f32 %v1738, %v2064
        %v2216 = vadd.f32 %v1743, %v2069
        %v2217 = vadd.f32 %v1746, %v2072
        %v2218 = vadd.f32 %v1751, %v2077
        %v2219 = vadd.f32 %v1754, %v2080
        %v2220 = vadd.f32 %v1759, %v2085
        %v2221 = vadd.f32 %v1762, %v2088
        %v2222 = vadd.f32 %v1767, %v2093
        %v2223 = vadd.f32 %v1770, %v2096
        %v2224 = vadd.f32 %v1775, %v2101
        %v2225 = vadd.f32 %v1778, %v2104
        %v2226 = vadd.f32 %v1783, %v2109
        %v2227 = vadd.f32 %v1786, %v2112
        %v2228 = vadd.f32 %v1791, %v2117
        %v2229 = vadd.f32 %v1794, %v2120
        %v2230 = vadd.f32 %v1799, %v2125
        %v2231 = vadd.f32 %v1802, %v2128
        %v2232 = vadd.f32 %v1807, %v2133
        %v2233 = vadd.f32 %v1810, %v2136
        %v2234 = vadd.f32 %v1815, %v2141
        %v2235 = vadd.f32 %v1818, %v2144
        %v2236 = vadd.f32 %v1823, %v2149
        %v2237 = vadd.f32 %v1826, %v2152
        %v2238 = vadd.f32 %v1831, %v2157
        %v2239 = vadd.f32 %v1834, %v2160
        %v2240 = vadd.f32 %v1839, %v2165
        %v2241 = vadd.f32 %v1842, %v2168
        %v2242 = vadd.f32 %v1847, %v2173
        %v2243 = vadd.f32 %v1850, %v2176
        %v2244 = vadd.f32 %v1855, %v2181
        %v2245 = vadd.f32 %v1858, %v2184
        %v2246 = vadd.f32 %v1863, %v2189
        %v2247 = vadd.f32 %v1866, %v2192
        %v2248 = vadd.f32 %v1871, %v2197
        %v2249 = vadd.f32 %v1874, %v2200
        %v2250 = vadd.f32 %v1879, %v2205
        %v2251 = vld [vmem:[#allocation2 + $0x17] sm:$0xff]
        %v2252 = vld [vmem:[#allocation2 + $0x1f] sm:$0xff]
        %v2253 = vld [vmem:[#allocation2 + $0x27] sm:$0xff]
        %v2254 = vld [vmem:[#allocation2 + $0x2f] sm:$0xff]
        %v2255 = vld [vmem:[#allocation2 + $0x37] sm:$0xff]
        %v2256 = vld [vmem:[#allocation2 + $0x3f] sm:$0xff]
        %v2257 = vld [vmem:[#allocation2 + $0x47] sm:$0xff]
        %v2258 = vld [vmem:[#allocation2 + $0x4f] sm:$0xff]
        %v2259 = vld [vmem:[#allocation2 + $0x57] sm:$0xff]
        %v2260 = vld [vmem:[#allocation2 + $0x5f] sm:$0xff]
        %v2261 = vld [vmem:[#allocation2 + $0x67] sm:$0xff]
        %v2262 = vld [vmem:[#allocation2 + $0x6f] sm:$0xff]
        %v2263 = vld [vmem:[#allocation2 + $0x77] sm:$0xff]
        %v2264 = vld [vmem:[#allocation2 + $0x7f] sm:$0xff]
        %v2265 = vld [vmem:[#allocation2 + $0x87] sm:$0xff]
        %v2266 = vld [vmem:[#allocation2 + $0x8f] sm:$0xff]
        %v2267 = vld [vmem:[#allocation2 + $0x97] sm:$0xff]
        %v2268 = vld [vmem:[#allocation2 + $0x9f] sm:$0xff]
        %v2269 = vld [vmem:[#allocation2 + $0xa7] sm:$0xff]
        %v2270 = vld [vmem:[#allocation2 + $0xaf] sm:$0xff]
        %v2271 = vld [vmem:[#allocation2 + $0xb7] sm:$0xff]
        %v2272 = vld [vmem:[#allocation2 + $0xbf] sm:$0xff]
        %v2273 = vld [vmem:[#allocation2 + $0xc7] sm:$0xff]
        %v2274 = vld [vmem:[#allocation2 + $0xcf] sm:$0xff]
        %v2275 = vld [vmem:[#allocation2 + $0xd7] sm:$0xff]
        %v2276 = vld [vmem:[#allocation2 + $0xdf] sm:$0xff]
        %v2277 = vld [vmem:[#allocation2 + $0xe7] sm:$0xff]
        %v2278 = vld [vmem:[#allocation2 + $0xef] sm:$0xff]
        %v2279 = vld [vmem:[#allocation2 + $0xf7] sm:$0xff]
        %v2280 = vld [vmem:[#allocation2 + $0xff] sm:$0xff]
        %v2281 = vld [vmem:[#allocation2 + $0x107] sm:$0xff]
        %v2282 = vld [vmem:[#allocation2 + $0x10f] sm:$0xff]
        %v2283 = vld [vmem:[#allocation2 + $0x117] sm:$0xff]
        %v2284 = vld [vmem:[#allocation2 + $0x11f] sm:$0xff]
        %v2285 = vld [vmem:[#allocation2 + $0x127] sm:$0xff]
        %v2286 = vld [vmem:[#allocation2 + $0x12f] sm:$0xff]
        %v2287 = vld [vmem:[#allocation2 + $0x137] sm:$0xff]
        %v2288 = vld [vmem:[#allocation2 + $0x13f] sm:$0xff]
        %v2289 = vld [vmem:[#allocation2 + $0x147] sm:$0xff]
        %v2290 = vld [vmem:[#allocation2 + $0x14f] sm:$0xff]
        %v2291 = vld [vmem:[#allocation2 + $0x157] sm:$0xff]
        %v2292 = vpack.c.bf16 %v2252, %v2251
        %v2293 = vpack.c.bf16 %v2254, %v2253
        %v2294 = vpack.c.bf16 %v2256, %v2255
        %v2295 = vpack.c.bf16 %v2258, %v2257
        %v2296 = vpack.c.bf16 %v2260, %v2259
        %v2297 = vpack.c.bf16 %v2262, %v2261
        %v2298 = vpack.c.bf16 %v2264, %v2263
        %v2299 = vpack.c.bf16 %v2266, %v2265
        %v2300 = vpack.c.bf16 %v2268, %v2267
        %v2301 = vpack.c.bf16 %v2270, %v2269
        %v2302 = vpack.c.bf16 %v2272, %v2271
        %v2303 = vpack.c.bf16 %v2274, %v2273
        %v2304 = vpack.c.bf16 %v2276, %v2275
        %v2305 = vpack.c.bf16 %v2278, %v2277
        %v2306 = vpack.c.bf16 %v2280, %v2279
        %v2307 = vpack.c.bf16 %v2282, %v2281
        %v2308 = vpack.c.bf16 %v2284, %v2283
        %v2309 = vpack.c.bf16 %v2286, %v2285
        %v2310 = vpack.c.bf16 %v2288, %v2287
        %v2311 = vpack.c.bf16 %v2290, %v2289
        %v2312 = vpack.c.bf16 %v2291, %v2291
        %v2313 = vld [vmem:[#allocation11 + $0xc0] sm:$0xf]
        %v2314 = vld [vmem:[#allocation11 + $0xc4] sm:$0xf]
        %v2315 = vld [vmem:[#allocation11 + $0xc8] sm:$0xf]
        %v2316 = vld [vmem:[#allocation11 + $0xcc] sm:$0xf]
        %v2317 = vld [vmem:[#allocation11 + $0xd0] sm:$0xf]
        %v2318 = vld [vmem:[#allocation11 + $0xd4] sm:$0xf]
        %v2319 = vld [vmem:[#allocation11 + $0xd8] sm:$0xf]
        %v2320 = vld [vmem:[#allocation11 + $0xdc] sm:$0xf]
        %v2321 = vld [vmem:[#allocation11 + $0xe0] sm:$0xf]
        %v2322 = vld [vmem:[#allocation11 + $0xe4] sm:$0xf]
        %v2323 = vld [vmem:[#allocation11 + $0xe8] sm:$0xf]
        %v2324 = vld [vmem:[#allocation11 + $0xec] sm:$0xf]
        %v2325 = vld [vmem:[#allocation11 + $0xf0] sm:$0xf]
        %v2326 = vld [vmem:[#allocation11 + $0xf4] sm:$0xf]
        %v2327 = vld [vmem:[#allocation11 + $0xf8] sm:$0xf]
        %v2328 = vld [vmem:[#allocation11 + $0xfc] sm:$0xf]
        %v2345 = vunpack.c.l.b16 %v2313
        %v2346 = vunpack.c.l.b16 %v2314
        %v2347 = vunpack.c.l.b16 %v2315
        %v2348 = vunpack.c.l.b16 %v2316
        %v2349 = vunpack.c.l.b16 %v2317
        %v2350 = vunpack.c.l.b16 %v2318
        %v2351 = vunpack.c.l.b16 %v2319
        %v2352 = vunpack.c.l.b16 %v2320
        %v2353 = vunpack.c.l.b16 %v2321
        %v2354 = vunpack.c.l.b16 %v2322
        %v2355 = vunpack.c.l.b16 %v2323
        %v2356 = vunpack.c.l.b16 %v2324
        %v2357 = vunpack.c.l.b16 %v2325
        %v2358 = vunpack.c.l.b16 %v2326
        %v2359 = vunpack.c.l.b16 %v2327
        %v2360 = vunpack.c.l.b16 %v2328
        %v2361 = vpack.c.b16 %v2346, %v2345
        %v2362 = vpack.c.b16 %v2348, %v2347
        %v2363 = vpack.c.b16 %v2350, %v2349
        %v2364 = vpack.c.b16 %v2352, %v2351
        %v2365 = vpack.c.b16 %v2354, %v2353
        %v2366 = vpack.c.b16 %v2356, %v2355
        %v2367 = vpack.c.b16 %v2358, %v2357
        %v2368 = vpack.c.b16 %v2360, %v2359
        %2377 = vmatprep.subr.bf16.mxu0 0
        %2378 = vmatpush1.bf16.msra.mxu0 %v2361
        %2379 = vmatprep.subr.bf16.mxu0 0
        %2380 = vmatpush1.bf16.msra.mxu0 %v2362
        %2381 = vmatprep.subr.bf16.mxu0 0
        %2382 = vmatpush1.bf16.msra.mxu0 %v2363
        %2383 = vmatprep.subr.bf16.mxu0 0
        %2384 = vmatpush1.bf16.msra.mxu0 %v2364
        %2385 = vmatprep.subr.bf16.mxu0 0
        %2386 = vmatpush1.bf16.msra.mxu0 %v2365
        %2387 = vmatprep.subr.bf16.mxu0 0
        %2388 = vmatpush1.bf16.msra.mxu0 %v2366
        %2389 = vmatprep.subr.bf16.mxu0 0
        %2390 = vmatpush1.bf16.msra.mxu0 %v2367
        %2391 = vmatprep.subr.bf16.mxu0 0
        %2392 = vmatpush1.bf16.msra.mxu0 %v2368
        %2393 = vmatprep.subr.bf16.mxu0 0
        %2394 = vmatpush1.bf16.msra.mxu0 0
        %2395 = vmatprep.subr.bf16.mxu0 0
        %2396 = vmatpush1.bf16.msra.mxu0 0
        %2397 = vmatprep.subr.bf16.mxu0 0
        %2398 = vmatpush1.bf16.msra.mxu0 0
        %2399 = vmatprep.subr.bf16.mxu0 0
        %2400 = vmatpush1.bf16.msra.mxu0 0
        %2401 = vmatprep.subr.bf16.mxu0 0
        %2402 = vmatpush1.bf16.msra.mxu0 0
        %2403 = vmatprep.subr.bf16.mxu0 0
        %2404 = vmatpush1.bf16.msra.mxu0 0
        %2405 = vmatprep.subr.bf16.mxu0 0
        %2406 = vmatpush1.bf16.msra.mxu0 0
        %2407 = vmatprep.subr.bf16.mxu0 0
        %2408 = vmatpush1.bf16.msra.mxu0 0
        %2409 = vmatprep.mubr.bf16.mxu0 0
        %2410 = vmatmul.mubr.bf16.gmra.mrb[0].mxu0 %v2292
        %v2411 = vpop.f32.mrb[0].mxu0
        %v2412 = vadd.f32 0.0, %v2411
        %v2413 = vpop.f32.mrb[0].mxu0
        %v2414 = vpop.f32.mrb[0].mxu0
        %v2415 = vadd.f32 0.0, %v2414
        %v2416 = vpop.f32.mrb[0].mxu0
        %2417 = vmatprep.mubr.bf16.mxu0 0
        %2418 = vmatmul.mubr.bf16.gmra.mrb[0].mxu0 %v2293
        %v2419 = vpop.f32.mrb[0].mxu0
        %v2420 = vadd.f32 0.0, %v2419
        %v2421 = vpop.f32.mrb[0].mxu0
        %v2422 = vpop.f32.mrb[0].mxu0
        %v2423 = vadd.f32 0.0, %v2422
        %v2424 = vpop.f32.mrb[0].mxu0
        %2425 = vmatprep.mubr.bf16.mxu0 0
        %2426 = vmatmul.mubr.bf16.gmra.mrb[0].mxu0 %v2294
        %v2427 = vpop.f32.mrb[0].mxu0
        %v2428 = vadd.f32 0.0, %v2427
        %v2429 = vpop.f32.mrb[0].mxu0
        %v2430 = vpop.f32.mrb[0].mxu0
        %v2431 = vadd.f32 0.0, %v2430
        %v2432 = vpop.f32.mrb[0].mxu0
        %2433 = vmatprep.mubr.bf16.mxu0 0
        %2434 = vmatmul.mubr.bf16.gmra.mrb[0].mxu0 %v2295
        %v2435 = vpop.f32.mrb[0].mxu0
        %v2436 = vadd.f32 0.0, %v2435
        %v2437 = vpop.f32.mrb[0].mxu0
        %v2438 = vpop.f32.mrb[0].mxu0
        %v2439 = vadd.f32 0.0, %v2438
        %v2440 = vpop.f32.mrb[0].mxu0
        %2441 = vmatprep.mubr.bf16.mxu0 0
        %2442 = vmatmul.mubr.bf16.gmra.mrb[0].mxu0 %v2296
        %v2443 = vpop.f32.mrb[0].mxu0
        %v2444 = vadd.f32 0.0, %v2443
        %v2445 = vpop.f32.mrb[0].mxu0
        %v2446 = vpop.f32.mrb[0].mxu0
        %v2447 = vadd.f32 0.0, %v2446
        %v2448 = vpop.f32.mrb[0].mxu0
        %2449 = vmatprep.mubr.bf16.mxu0 0
        %2450 = vmatmul.mubr.bf16.gmra.mrb[0].mxu0 %v2297
        %v2451 = vpop.f32.mrb[0].mxu0
        %v2452 = vadd.f32 0.0, %v2451
        %v2453 = vpop.f32.mrb[0].mxu0
        %v2454 = vpop.f32.mrb[0].mxu0
        %v2455 = vadd.f32 0.0, %v2454
        %v2456 = vpop.f32.mrb[0].mxu0
        %2457 = vmatprep.mubr.bf16.mxu0 0
        %2458 = vmatmul.mubr.bf16.gmra.mrb[0].mxu0 %v2298
        %v2459 = vpop.f32.mrb[0].mxu0
        %v2460 = vadd.f32 0.0, %v2459
        %v2461 = vpop.f32.mrb[0].mxu0
        %v2462 = vpop.f32.mrb[0].mxu0
        %v2463 = vadd.f32 0.0, %v2462
        %v2464 = vpop.f32.mrb[0].mxu0
        %2465 = vmatprep.mubr.bf16.mxu0 0
        %2466 = vmatmul.mubr.bf16.gmra.mrb[0].mxu0 %v2299
        %v2467 = vpop.f32.mrb[0].mxu0
        %v2468 = vadd.f32 0.0, %v2467
        %v2469 = vpop.f32.mrb[0].mxu0
        %v2470 = vpop.f32.mrb[0].mxu0
        %v2471 = vadd.f32 0.0, %v2470
        %v2472 = vpop.f32.mrb[0].mxu0
        %2473 = vmatprep.mubr.bf16.mxu0 0
        %2474 = vmatmul.mubr.bf16.gmra.mrb[0].mxu0 %v2300
        %v2475 = vpop.f32.mrb[0].mxu0
        %v2476 = vadd.f32 0.0, %v2475
        %v2477 = vpop.f32.mrb[0].mxu0
        %v2478 = vpop.f32.mrb[0].mxu0
        %v2479 = vadd.f32 0.0, %v2478
        %v2480 = vpop.f32.mrb[0].mxu0
        %2481 = vmatprep.mubr.bf16.mxu0 0
        %2482 = vmatmul.mubr.bf16.gmra.mrb[0].mxu0 %v2301
        %v2483 = vpop.f32.mrb[0].mxu0
        %v2484 = vadd.f32 0.0, %v2483
        %v2485 = vpop.f32.mrb[0].mxu0
        %v2486 = vpop.f32.mrb[0].mxu0
        %v2487 = vadd.f32 0.0, %v2486
        %v2488 = vpop.f32.mrb[0].mxu0
        %2489 = vmatprep.mubr.bf16.mxu0 0
        %2490 = vmatmul.mubr.bf16.gmra.mrb[0].mxu0 %v2302
        %v2491 = vpop.f32.mrb[0].mxu0
        %v2492 = vadd.f32 0.0, %v2491
        %v2493 = vpop.f32.mrb[0].mxu0
        %v2494 = vpop.f32.mrb[0].mxu0
        %v2495 = vadd.f32 0.0, %v2494
        %v2496 = vpop.f32.mrb[0].mxu0
        %2497 = vmatprep.mubr.bf16.mxu0 0
        %2498 = vmatmul.mubr.bf16.gmra.mrb[0].mxu0 %v2303
        %v2499 = vpop.f32.mrb[0].mxu0
        %v2500 = vadd.f32 0.0, %v2499
        %v2501 = vpop.f32.mrb[0].mxu0
        %v2502 = vpop.f32.mrb[0].mxu0
        %v2503 = vadd.f32 0.0, %v2502
        %v2504 = vpop.f32.mrb[0].mxu0
        %2505 = vmatprep.mubr.bf16.mxu0 0
        %2506 = vmatmul.mubr.bf16.gmra.mrb[0].mxu0 %v2304
        %v2507 = vpop.f32.mrb[0].mxu0
        %v2508 = vadd.f32 0.0, %v2507
        %v2509 = vpop.f32.mrb[0].mxu0
        %v2510 = vpop.f32.mrb[0].mxu0
        %v2511 = vadd.f32 0.0, %v2510
        %v2512 = vpop.f32.mrb[0].mxu0
        %2513 = vmatprep.mubr.bf16.mxu0 0
        %2514 = vmatmul.mubr.bf16.gmra.mrb[0].mxu0 %v2305
        %v2515 = vpop.f32.mrb[0].mxu0
        %v2516 = vadd.f32 0.0, %v2515
        %v2517 = vpop.f32.mrb[0].mxu0
        %v2518 = vpop.f32.mrb[0].mxu0
        %v2519 = vadd.f32 0.0, %v2518
        %v2520 = vpop.f32.mrb[0].mxu0
        %2521 = vmatprep.mubr.bf16.mxu0 0
        %2522 = vmatmul.mubr.bf16.gmra.mrb[0].mxu0 %v2306
        %v2523 = vpop.f32.mrb[0].mxu0
        %v2524 = vadd.f32 0.0, %v2523
        %v2525 = vpop.f32.mrb[0].mxu0
        %v2526 = vpop.f32.mrb[0].mxu0
        %v2527 = vadd.f32 0.0, %v2526
        %v2528 = vpop.f32.mrb[0].mxu0
        %2529 = vmatprep.mubr.bf16.mxu0 0
        %2530 = vmatmul.mubr.bf16.gmra.mrb[0].mxu0 %v2307
        %v2531 = vpop.f32.mrb[0].mxu0
        %v2532 = vadd.f32 0.0, %v2531
        %v2533 = vpop.f32.mrb[0].mxu0
        %v2534 = vpop.f32.mrb[0].mxu0
        %v2535 = vadd.f32 0.0, %v2534
        %v2536 = vpop.f32.mrb[0].mxu0
        %2537 = vmatprep.mubr.bf16.mxu0 0
        %2538 = vmatmul.mubr.bf16.gmra.mrb[0].mxu0 %v2308
        %v2539 = vpop.f32.mrb[0].mxu0
        %v2540 = vadd.f32 0.0, %v2539
        %v2541 = vpop.f32.mrb[0].mxu0
        %v2542 = vpop.f32.mrb[0].mxu0
        %v2543 = vadd.f32 0.0, %v2542
        %v2544 = vpop.f32.mrb[0].mxu0
        %2545 = vmatprep.mubr.bf16.mxu0 0
        %2546 = vmatmul.mubr.bf16.gmra.mrb[0].mxu0 %v2309
        %v2547 = vpop.f32.mrb[0].mxu0
        %v2548 = vadd.f32 0.0, %v2547
        %v2549 = vpop.f32.mrb[0].mxu0
        %v2550 = vpop.f32.mrb[0].mxu0
        %v2551 = vadd.f32 0.0, %v2550
        %v2552 = vpop.f32.mrb[0].mxu0
        %2553 = vmatprep.mubr.bf16.mxu0 0
        %2554 = vmatmul.mubr.bf16.gmra.mrb[0].mxu0 %v2310
        %v2555 = vpop.f32.mrb[0].mxu0
        %v2556 = vadd.f32 0.0, %v2555
        %v2557 = vpop.f32.mrb[0].mxu0
        %v2558 = vpop.f32.mrb[0].mxu0
        %v2559 = vadd.f32 0.0, %v2558
        %v2560 = vpop.f32.mrb[0].mxu0
        %2561 = vmatprep.mubr.bf16.mxu0 0
        %2562 = vmatmul.mubr.bf16.gmra.mrb[0].mxu0 %v2311
        %v2563 = vpop.f32.mrb[0].mxu0
        %v2564 = vadd.f32 0.0, %v2563
        %v2565 = vpop.f32.mrb[0].mxu0
        %v2566 = vpop.f32.mrb[0].mxu0
        %v2567 = vadd.f32 0.0, %v2566
        %v2568 = vpop.f32.mrb[0].mxu0
        %2569 = vmatprep.mubr.bf16.mxu0 0
        %2570 = vmatmul.mubr.bf16.gmra.mrb[0].mxu0 %v2312
        %v2571 = vpop.f32.mrb[0].mxu0
        %v2572 = vadd.f32 0.0, %v2571
        %v2573 = vpop.f32.mrb[0].mxu0
        %v2574 = vpop.f32.mrb[0].mxu0
        %v2575 = vpop.f32.mrb[0].mxu0
        %2576 = vdwg.mxu0
        %v2577 = vadd.f32 %v2210, %v2412
        %v2578 = vadd.f32 %v2211, %v2415
        %v2579 = vadd.f32 %v2212, %v2420
        %v2580 = vadd.f32 %v2213, %v2423
        %v2581 = vadd.f32 %v2214, %v2428
        %v2582 = vadd.f32 %v2215, %v2431
        %v2583 = vadd.f32 %v2216, %v2436
        %v2584 = vadd.f32 %v2217, %v2439
        %v2585 = vadd.f32 %v2218, %v2444
        %v2586 = vadd.f32 %v2219, %v2447
        %v2587 = vadd.f32 %v2220, %v2452
        %v2588 = vadd.f32 %v2221, %v2455
        %v2589 = vadd.f32 %v2222, %v2460
        %v2590 = vadd.f32 %v2223, %v2463
        %v2591 = vadd.f32 %v2224, %v2468
        %v2592 = vadd.f32 %v2225, %v2471
        %v2593 = vadd.f32 %v2226, %v2476
        %v2594 = vadd.f32 %v2227, %v2479
        %v2595 = vadd.f32 %v2228, %v2484
        %v2596 = vadd.f32 %v2229, %v2487
        %v2597 = vadd.f32 %v2230, %v2492
        %v2598 = vadd.f32 %v2231, %v2495
        %v2599 = vadd.f32 %v2232, %v2500
        %v2600 = vadd.f32 %v2233, %v2503
        %v2601 = vadd.f32 %v2234, %v2508
        %v2602 = vadd.f32 %v2235, %v2511
        %v2603 = vadd.f32 %v2236, %v2516
        %v2604 = vadd.f32 %v2237, %v2519
        %v2605 = vadd.f32 %v2238, %v2524
        %v2606 = vadd.f32 %v2239, %v2527
        %v2607 = vadd.f32 %v2240, %v2532
        %v2608 = vadd.f32 %v2241, %v2535
        %v2609 = vadd.f32 %v2242, %v2540
        %v2610 = vadd.f32 %v2243, %v2543
        %v2611 = vadd.f32 %v2244, %v2548
        %v2612 = vadd.f32 %v2245, %v2551
        %v2613 = vadd.f32 %v2246, %v2556
        %v2614 = vadd.f32 %v2247, %v2559
        %v2615 = vadd.f32 %v2248, %v2564
        %v2616 = vadd.f32 %v2249, %v2567
        %v2617 = vadd.f32 %v2250, %v2572
        %v2618 = vld [vmem:[#allocation2 + $0x18] sm:$0xff]
        %v2619 = vld [vmem:[#allocation2 + $0x20] sm:$0xff]
        %v2620 = vld [vmem:[#allocation2 + $0x28] sm:$0xff]
        %v2621 = vld [vmem:[#allocation2 + $0x30] sm:$0xff]
        %v2622 = vld [vmem:[#allocation2 + $0x38] sm:$0xff]
        %v2623 = vld [vmem:[#allocation2 + $0x40] sm:$0xff]
        %v2624 = vld [vmem:[#allocation2 + $0x48] sm:$0xff]
        %v2625 = vld [vmem:[#allocation2 + $0x50] sm:$0xff]
        %v2626 = vld [vmem:[#allocation2 + $0x58] sm:$0xff]
        %v2627 = vld [vmem:[#allocation2 + $0x60] sm:$0xff]
        %v2628 = vld [vmem:[#allocation2 + $0x68] sm:$0xff]
        %v2629 = vld [vmem:[#allocation2 + $0x70] sm:$0xff]
        %v2630 = vld [vmem:[#allocation2 + $0x78] sm:$0xff]
        %v2631 = vld [vmem:[#allocation2 + $0x80] sm:$0xff]
        %v2632 = vld [vmem:[#allocation2 + $0x88] sm:$0xff]
        %v2633 = vld [vmem:[#allocation2 + $0x90] sm:$0xff]
        %v2634 = vld [vmem:[#allocation2 + $0x98] sm:$0xff]
        %v2635 = vld [vmem:[#allocation2 + $0xa0] sm:$0xff]
        %v2636 = vld [vmem:[#allocation2 + $0xa8] sm:$0xff]
        %v2637 = vld [vmem:[#allocation2 + $0xb0] sm:$0xff]
        %v2638 = vld [vmem:[#allocation2 + $0xb8] sm:$0xff]
        %v2639 = vld [vmem:[#allocation2 + $0xc0] sm:$0xff]
        %v2640 = vld [vmem:[#allocation2 + $0xc8] sm:$0xff]
        %v2641 = vld [vmem:[#allocation2 + $0xd0] sm:$0xff]
        %v2642 = vld [vmem:[#allocation2 + $0xd8] sm:$0xff]
        %v2643 = vld [vmem:[#allocation2 + $0xe0] sm:$0xff]
        %v2644 = vld [vmem:[#allocation2 + $0xe8] sm:$0xff]
        %v2645 = vld [vmem:[#allocation2 + $0xf0] sm:$0xff]
        %v2646 = vld [vmem:[#allocation2 + $0xf8] sm:$0xff]
        %v2647 = vld [vmem:[#allocation2 + $0x100] sm:$0xff]
        %v2648 = vld [vmem:[#allocation2 + $0x108] sm:$0xff]
        %v2649 = vld [vmem:[#allocation2 + $0x110] sm:$0xff]
        %v2650 = vld [vmem:[#allocation2 + $0x118] sm:$0xff]
        %v2651 = vld [vmem:[#allocation2 + $0x120] sm:$0xff]
        %v2652 = vld [vmem:[#allocation2 + $0x128] sm:$0xff]
        %v2653 = vld [vmem:[#allocation2 + $0x130] sm:$0xff]
        %v2654 = vld [vmem:[#allocation2 + $0x138] sm:$0xff]
        %v2655 = vld [vmem:[#allocation2 + $0x140] sm:$0xff]
        %v2656 = vld [vmem:[#allocation2 + $0x148] sm:$0xff]
        %v2657 = vld [vmem:[#allocation2 + $0x150] sm:$0xff]
        %v2658 = vld [vmem:[#allocation2 + $0x158] sm:$0xff]
        %v2659 = vpack.c.bf16 %v2619, %v2618
        %v2660 = vpack.c.bf16 %v2621, %v2620
        %v2661 = vpack.c.bf16 %v2623, %v2622
        %v2662 = vpack.c.bf16 %v2625, %v2624
        %v2663 = vpack.c.bf16 %v2627, %v2626
        %v2664 = vpack.c.bf16 %v2629, %v2628
        %v2665 = vpack.c.bf16 %v2631, %v2630
        %v2666 = vpack.c.bf16 %v2633, %v2632
        %v2667 = vpack.c.bf16 %v2635, %v2634
        %v2668 = vpack.c.bf16 %v2637, %v2636
        %v2669 = vpack.c.bf16 %v2639, %v2638
        %v2670 = vpack.c.bf16 %v2641, %v2640
        %v2671 = vpack.c.bf16 %v2643, %v2642
        %v2672 = vpack.c.bf16 %v2645, %v2644
        %v2673 = vpack.c.bf16 %v2647, %v2646
        %v2674 = vpack.c.bf16 %v2649, %v2648
        %v2675 = vpack.c.bf16 %v2651, %v2650
        %v2676 = vpack.c.bf16 %v2653, %v2652
        %v2677 = vpack.c.bf16 %v2655, %v2654
        %v2678 = vpack.c.bf16 %v2657, %v2656
        %v2679 = vpack.c.bf16 %v2658, %v2658
        %v2680 = vld [vmem:[#allocation11 + $0x100] sm:$0xf]
        %v2681 = vld [vmem:[#allocation11 + $0x104] sm:$0xf]
        %v2682 = vld [vmem:[#allocation11 + $0x108] sm:$0xf]
        %v2683 = vld [vmem:[#allocation11 + $0x10c] sm:$0xf]
        %v2684 = vld [vmem:[#allocation11 + $0x110] sm:$0xf]
        %v2685 = vld [vmem:[#allocation11 + $0x114] sm:$0xf]
        %v2686 = vld [vmem:[#allocation11 + $0x118] sm:$0xf]
        %v2687 = vld [vmem:[#allocation11 + $0x11c] sm:$0xf]
        %v2688 = vld [vmem:[#allocation11 + $0x120] sm:$0xf]
        %v2689 = vld [vmem:[#allocation11 + $0x124] sm:$0xf]
        %v2690 = vld [vmem:[#allocation11 + $0x128] sm:$0xf]
        %v2691 = vld [vmem:[#allocation11 + $0x12c] sm:$0xf]
        %v2692 = vld [vmem:[#allocation11 + $0x130] sm:$0xf]
        %v2693 = vld [vmem:[#allocation11 + $0x134] sm:$0xf]
        %v2694 = vld [vmem:[#allocation11 + $0x138] sm:$0xf]
        %v2695 = vld [vmem:[#allocation11 + $0x13c] sm:$0xf]
        %v2712 = vunpack.c.l.b16 %v2680
        %v2713 = vunpack.c.l.b16 %v2681
        %v2714 = vunpack.c.l.b16 %v2682
        %v2715 = vunpack.c.l.b16 %v2683
        %v2716 = vunpack.c.l.b16 %v2684
        %v2717 = vunpack.c.l.b16 %v2685
        %v2718 = vunpack.c.l.b16 %v2686
        %v2719 = vunpack.c.l.b16 %v2687
        %v2720 = vunpack.c.l.b16 %v2688
        %v2721 = vunpack.c.l.b16 %v2689
        %v2722 = vunpack.c.l.b16 %v2690
        %v2723 = vunpack.c.l.b16 %v2691
        %v2724 = vunpack.c.l.b16 %v2692
        %v2725 = vunpack.c.l.b16 %v2693
        %v2726 = vunpack.c.l.b16 %v2694
        %v2727 = vunpack.c.l.b16 %v2695
        %v2728 = vpack.c.b16 %v2713, %v2712
        %v2729 = vpack.c.b16 %v2715, %v2714
        %v2730 = vpack.c.b16 %v2717, %v2716
        %v2731 = vpack.c.b16 %v2719, %v2718
        %v2732 = vpack.c.b16 %v2721, %v2720
        %v2733 = vpack.c.b16 %v2723, %v2722
        %v2734 = vpack.c.b16 %v2725, %v2724
        %v2735 = vpack.c.b16 %v2727, %v2726
        %2744 = vmatprep.subr.bf16.mxu0 0
        %2745 = vmatpush1.bf16.msra.mxu0 %v2728
        %2746 = vmatprep.subr.bf16.mxu0 0
        %2747 = vmatpush1.bf16.msra.mxu0 %v2729
        %2748 = vmatprep.subr.bf16.mxu0 0
        %2749 = vmatpush1.bf16.msra.mxu0 %v2730
        %2750 = vmatprep.subr.bf16.mxu0 0
        %2751 = vmatpush1.bf16.msra.mxu0 %v2731
        %2752 = vmatprep.subr.bf16.mxu0 0
        %2753 = vmatpush1.bf16.msra.mxu0 %v2732
        %2754 = vmatprep.subr.bf16.mxu0 0
        %2755 = vmatpush1.bf16.msra.mxu0 %v2733
        %2756 = vmatprep.subr.bf16.mxu0 0
        %2757 = vmatpush1.bf16.msra.mxu0 %v2734
        %2758 = vmatprep.subr.bf16.mxu0 0
        %2759 = vmatpush1.bf16.msra.mxu0 %v2735
        %2760 = vmatprep.subr.bf16.mxu0 0
        %2761 = vmatpush1.bf16.msra.mxu0 0
        %2762 = vmatprep.subr.bf16.mxu0 0
        %2763 = vmatpush1.bf16.msra.mxu0 0
        %2764 = vmatprep.subr.bf16.mxu0 0
        %2765 = vmatpush1.bf16.msra.mxu0 0
        %2766 = vmatprep.subr.bf16.mxu0 0
        %2767 = vmatpush1.bf16.msra.mxu0 0
        %2768 = vmatprep.subr.bf16.mxu0 0
        %2769 = vmatpush1.bf16.msra.mxu0 0
        %2770 = vmatprep.subr.bf16.mxu0 0
        %2771 = vmatpush1.bf16.msra.mxu0 0
        %2772 = vmatprep.subr.bf16.mxu0 0
        %2773 = vmatpush1.bf16.msra.mxu0 0
        %2774 = vmatprep.subr.bf16.mxu0 0
        %2775 = vmatpush1.bf16.msra.mxu0 0
        %2776 = vmatprep.mubr.bf16.mxu0 0
        %2777 = vmatmul.mubr.bf16.gmra.mrb[0].mxu0 %v2659
        %v2778 = vpop.f32.mrb[0].mxu0
        %v2779 = vadd.f32 0.0, %v2778
        %v2780 = vpop.f32.mrb[0].mxu0
        %v2781 = vpop.f32.mrb[0].mxu0
        %v2782 = vadd.f32 0.0, %v2781
        %v2783 = vpop.f32.mrb[0].mxu0
        %2784 = vmatprep.mubr.bf16.mxu0 0
        %2785 = vmatmul.mubr.bf16.gmra.mrb[0].mxu0 %v2660
        %v2786 = vpop.f32.mrb[0].mxu0
        %v2787 = vadd.f32 0.0, %v2786
        %v2788 = vpop.f32.mrb[0].mxu0
        %v2789 = vpop.f32.mrb[0].mxu0
        %v2790 = vadd.f32 0.0, %v2789
        %v2791 = vpop.f32.mrb[0].mxu0
        %2792 = vmatprep.mubr.bf16.mxu0 0
        %2793 = vmatmul.mubr.bf16.gmra.mrb[0].mxu0 %v2661
        %v2794 = vpop.f32.mrb[0].mxu0
        %v2795 = vadd.f32 0.0, %v2794
        %v2796 = vpop.f32.mrb[0].mxu0
        %v2797 = vpop.f32.mrb[0].mxu0
        %v2798 = vadd.f32 0.0, %v2797
        %v2799 = vpop.f32.mrb[0].mxu0
        %2800 = vmatprep.mubr.bf16.mxu0 0
        %2801 = vmatmul.mubr.bf16.gmra.mrb[0].mxu0 %v2662
        %v2802 = vpop.f32.mrb[0].mxu0
        %v2803 = vadd.f32 0.0, %v2802
        %v2804 = vpop.f32.mrb[0].mxu0
        %v2805 = vpop.f32.mrb[0].mxu0
        %v2806 = vadd.f32 0.0, %v2805
        %v2807 = vpop.f32.mrb[0].mxu0
        %2808 = vmatprep.mubr.bf16.mxu0 0
        %2809 = vmatmul.mubr.bf16.gmra.mrb[0].mxu0 %v2663
        %v2810 = vpop.f32.mrb[0].mxu0
        %v2811 = vadd.f32 0.0, %v2810
        %v2812 = vpop.f32.mrb[0].mxu0
        %v2813 = vpop.f32.mrb[0].mxu0
        %v2814 = vadd.f32 0.0, %v2813
        %v2815 = vpop.f32.mrb[0].mxu0
        %2816 = vmatprep.mubr.bf16.mxu0 0
        %2817 = vmatmul.mubr.bf16.gmra.mrb[0].mxu0 %v2664
        %v2818 = vpop.f32.mrb[0].mxu0
        %v2819 = vadd.f32 0.0, %v2818
        %v2820 = vpop.f32.mrb[0].mxu0
        %v2821 = vpop.f32.mrb[0].mxu0
        %v2822 = vadd.f32 0.0, %v2821
        %v2823 = vpop.f32.mrb[0].mxu0
        %2824 = vmatprep.mubr.bf16.mxu0 0
        %2825 = vmatmul.mubr.bf16.gmra.mrb[0].mxu0 %v2665
        %v2826 = vpop.f32.mrb[0].mxu0
        %v2827 = vadd.f32 0.0, %v2826
        %v2828 = vpop.f32.mrb[0].mxu0
        %v2829 = vpop.f32.mrb[0].mxu0
        %v2830 = vadd.f32 0.0, %v2829
        %v2831 = vpop.f32.mrb[0].mxu0
        %2832 = vmatprep.mubr.bf16.mxu0 0
        %2833 = vmatmul.mubr.bf16.gmra.mrb[0].mxu0 %v2666
        %v2834 = vpop.f32.mrb[0].mxu0
        %v2835 = vadd.f32 0.0, %v2834
        %v2836 = vpop.f32.mrb[0].mxu0
        %v2837 = vpop.f32.mrb[0].mxu0
        %v2838 = vadd.f32 0.0, %v2837
        %v2839 = vpop.f32.mrb[0].mxu0
        %2840 = vmatprep.mubr.bf16.mxu0 0
        %2841 = vmatmul.mubr.bf16.gmra.mrb[0].mxu0 %v2667
        %v2842 = vpop.f32.mrb[0].mxu0
        %v2843 = vadd.f32 0.0, %v2842
        %v2844 = vpop.f32.mrb[0].mxu0
        %v2845 = vpop.f32.mrb[0].mxu0
        %v2846 = vadd.f32 0.0, %v2845
        %v2847 = vpop.f32.mrb[0].mxu0
        %2848 = vmatprep.mubr.bf16.mxu0 0
        %2849 = vmatmul.mubr.bf16.gmra.mrb[0].mxu0 %v2668
        %v2850 = vpop.f32.mrb[0].mxu0
        %v2851 = vadd.f32 0.0, %v2850
        %v2852 = vpop.f32.mrb[0].mxu0
        %v2853 = vpop.f32.mrb[0].mxu0
        %v2854 = vadd.f32 0.0, %v2853
        %v2855 = vpop.f32.mrb[0].mxu0
        %2856 = vmatprep.mubr.bf16.mxu0 0
        %2857 = vmatmul.mubr.bf16.gmra.mrb[0].mxu0 %v2669
        %v2858 = vpop.f32.mrb[0].mxu0
        %v2859 = vadd.f32 0.0, %v2858
        %v2860 = vpop.f32.mrb[0].mxu0
        %v2861 = vpop.f32.mrb[0].mxu0
        %v2862 = vadd.f32 0.0, %v2861
        %v2863 = vpop.f32.mrb[0].mxu0
        %2864 = vmatprep.mubr.bf16.mxu0 0
        %2865 = vmatmul.mubr.bf16.gmra.mrb[0].mxu0 %v2670
        %v2866 = vpop.f32.mrb[0].mxu0
        %v2867 = vadd.f32 0.0, %v2866
        %v2868 = vpop.f32.mrb[0].mxu0
        %v2869 = vpop.f32.mrb[0].mxu0
        %v2870 = vadd.f32 0.0, %v2869
        %v2871 = vpop.f32.mrb[0].mxu0
        %2872 = vmatprep.mubr.bf16.mxu0 0
        %2873 = vmatmul.mubr.bf16.gmra.mrb[0].mxu0 %v2671
        %v2874 = vpop.f32.mrb[0].mxu0
        %v2875 = vadd.f32 0.0, %v2874
        %v2876 = vpop.f32.mrb[0].mxu0
        %v2877 = vpop.f32.mrb[0].mxu0
        %v2878 = vadd.f32 0.0, %v2877
        %v2879 = vpop.f32.mrb[0].mxu0
        %2880 = vmatprep.mubr.bf16.mxu0 0
        %2881 = vmatmul.mubr.bf16.gmra.mrb[0].mxu0 %v2672
        %v2882 = vpop.f32.mrb[0].mxu0
        %v2883 = vadd.f32 0.0, %v2882
        %v2884 = vpop.f32.mrb[0].mxu0
        %v2885 = vpop.f32.mrb[0].mxu0
        %v2886 = vadd.f32 0.0, %v2885
        %v2887 = vpop.f32.mrb[0].mxu0
        %2888 = vmatprep.mubr.bf16.mxu0 0
        %2889 = vmatmul.mubr.bf16.gmra.mrb[0].mxu0 %v2673
        %v2890 = vpop.f32.mrb[0].mxu0
        %v2891 = vadd.f32 0.0, %v2890
        %v2892 = vpop.f32.mrb[0].mxu0
        %v2893 = vpop.f32.mrb[0].mxu0
        %v2894 = vadd.f32 0.0, %v2893
        %v2895 = vpop.f32.mrb[0].mxu0
        %2896 = vmatprep.mubr.bf16.mxu0 0
        %2897 = vmatmul.mubr.bf16.gmra.mrb[0].mxu0 %v2674
        %v2898 = vpop.f32.mrb[0].mxu0
        %v2899 = vadd.f32 0.0, %v2898
        %v2900 = vpop.f32.mrb[0].mxu0
        %v2901 = vpop.f32.mrb[0].mxu0
        %v2902 = vadd.f32 0.0, %v2901
        %v2903 = vpop.f32.mrb[0].mxu0
        %2904 = vmatprep.mubr.bf16.mxu0 0
        %2905 = vmatmul.mubr.bf16.gmra.mrb[0].mxu0 %v2675
        %v2906 = vpop.f32.mrb[0].mxu0
        %v2907 = vadd.f32 0.0, %v2906
        %v2908 = vpop.f32.mrb[0].mxu0
        %v2909 = vpop.f32.mrb[0].mxu0
        %v2910 = vadd.f32 0.0, %v2909
        %v2911 = vpop.f32.mrb[0].mxu0
        %2912 = vmatprep.mubr.bf16.mxu0 0
        %2913 = vmatmul.mubr.bf16.gmra.mrb[0].mxu0 %v2676
        %v2914 = vpop.f32.mrb[0].mxu0
        %v2915 = vadd.f32 0.0, %v2914
        %v2916 = vpop.f32.mrb[0].mxu0
        %v2917 = vpop.f32.mrb[0].mxu0
        %v2918 = vadd.f32 0.0, %v2917
        %v2919 = vpop.f32.mrb[0].mxu0
        %2920 = vmatprep.mubr.bf16.mxu0 0
        %2921 = vmatmul.mubr.bf16.gmra.mrb[0].mxu0 %v2677
        %v2922 = vpop.f32.mrb[0].mxu0
        %v2923 = vadd.f32 0.0, %v2922
        %v2924 = vpop.f32.mrb[0].mxu0
        %v2925 = vpop.f32.mrb[0].mxu0
        %v2926 = vadd.f32 0.0, %v2925
        %v2927 = vpop.f32.mrb[0].mxu0
        %2928 = vmatprep.mubr.bf16.mxu0 0
        %2929 = vmatmul.mubr.bf16.gmra.mrb[0].mxu0 %v2678
        %v2930 = vpop.f32.mrb[0].mxu0
        %v2931 = vadd.f32 0.0, %v2930
        %v2932 = vpop.f32.mrb[0].mxu0
        %v2933 = vpop.f32.mrb[0].mxu0
        %v2934 = vadd.f32 0.0, %v2933
        %v2935 = vpop.f32.mrb[0].mxu0
        %2936 = vmatprep.mubr.bf16.mxu0 0
        %2937 = vmatmul.mubr.bf16.gmra.mrb[0].mxu0 %v2679
        %v2938 = vpop.f32.mrb[0].mxu0
        %v2939 = vadd.f32 0.0, %v2938
        %v2940 = vpop.f32.mrb[0].mxu0
        %v2941 = vpop.f32.mrb[0].mxu0
        %v2942 = vpop.f32.mrb[0].mxu0
        %2943 = vdwg.mxu0
        %v2944 = vadd.f32 %v2577, %v2779
        %v2945 = vadd.f32 %v2578, %v2782
        %v2946 = vadd.f32 %v2579, %v2787
        %v2947 = vadd.f32 %v2580, %v2790
        %v2948 = vadd.f32 %v2581, %v2795
        %v2949 = vadd.f32 %v2582, %v2798
        %v2950 = vadd.f32 %v2583, %v2803
        %v2951 = vadd.f32 %v2584, %v2806
        %v2952 = vadd.f32 %v2585, %v2811
        %v2953 = vadd.f32 %v2586, %v2814
        %v2954 = vadd.f32 %v2587, %v2819
        %v2955 = vadd.f32 %v2588, %v2822
        %v2956 = vadd.f32 %v2589, %v2827
        %v2957 = vadd.f32 %v2590, %v2830
        %v2958 = vadd.f32 %v2591, %v2835
        %v2959 = vadd.f32 %v2592, %v2838
        %v2960 = vadd.f32 %v2593, %v2843
        %v2961 = vadd.f32 %v2594, %v2846
        %v2962 = vadd.f32 %v2595, %v2851
        %v2963 = vadd.f32 %v2596, %v2854
        %v2964 = vadd.f32 %v2597, %v2859
        %v2965 = vadd.f32 %v2598, %v2862
        %v2966 = vadd.f32 %v2599, %v2867
        %v2967 = vadd.f32 %v2600, %v2870
        %v2968 = vadd.f32 %v2601, %v2875
        %v2969 = vadd.f32 %v2602, %v2878
        %v2970 = vadd.f32 %v2603, %v2883
        %v2971 = vadd.f32 %v2604, %v2886
        %v2972 = vadd.f32 %v2605, %v2891
        %v2973 = vadd.f32 %v2606, %v2894
        %v2974 = vadd.f32 %v2607, %v2899
        %v2975 = vadd.f32 %v2608, %v2902
        %v2976 = vadd.f32 %v2609, %v2907
        %v2977 = vadd.f32 %v2610, %v2910
        %v2978 = vadd.f32 %v2611, %v2915
        %v2979 = vadd.f32 %v2612, %v2918
        %v2980 = vadd.f32 %v2613, %v2923
        %v2981 = vadd.f32 %v2614, %v2926
        %v2982 = vadd.f32 %v2615, %v2931
        %v2983 = vadd.f32 %v2616, %v2934
        %v2984 = vadd.f32 %v2617, %v2939
        %v2985 = vld [vmem:[#allocation2 + $0x19] sm:$0xff]
        %v2986 = vld [vmem:[#allocation2 + $0x21] sm:$0xff]
        %v2987 = vld [vmem:[#allocation2 + $0x29] sm:$0xff]
        %v2988 = vld [vmem:[#allocation2 + $0x31] sm:$0xff]
        %v2989 = vld [vmem:[#allocation2 + $0x39] sm:$0xff]
        %v2990 = vld [vmem:[#allocation2 + $0x41] sm:$0xff]
        %v2991 = vld [vmem:[#allocation2 + $0x49] sm:$0xff]
        %v2992 = vld [vmem:[#allocation2 + $0x51] sm:$0xff]
        %v2993 = vld [vmem:[#allocation2 + $0x59] sm:$0xff]
        %v2994 = vld [vmem:[#allocation2 + $0x61] sm:$0xff]
        %v2995 = vld [vmem:[#allocation2 + $0x69] sm:$0xff]
        %v2996 = vld [vmem:[#allocation2 + $0x71] sm:$0xff]
        %v2997 = vld [vmem:[#allocation2 + $0x79] sm:$0xff]
        %v2998 = vld [vmem:[#allocation2 + $0x81] sm:$0xff]
        %v2999 = vld [vmem:[#allocation2 + $0x89] sm:$0xff]
        %v3000 = vld [vmem:[#allocation2 + $0x91] sm:$0xff]
        %v3001 = vld [vmem:[#allocation2 + $0x99] sm:$0xff]
        %v3002 = vld [vmem:[#allocation2 + $0xa1] sm:$0xff]
        %v3003 = vld [vmem:[#allocation2 + $0xa9] sm:$0xff]
        %v3004 = vld [vmem:[#allocation2 + $0xb1] sm:$0xff]
        %v3005 = vld [vmem:[#allocation2 + $0xb9] sm:$0xff]
        %v3006 = vld [vmem:[#allocation2 + $0xc1] sm:$0xff]
        %v3007 = vld [vmem:[#allocation2 + $0xc9] sm:$0xff]
        %v3008 = vld [vmem:[#allocation2 + $0xd1] sm:$0xff]
        %v3009 = vld [vmem:[#allocation2 + $0xd9] sm:$0xff]
        %v3010 = vld [vmem:[#allocation2 + $0xe1] sm:$0xff]
        %v3011 = vld [vmem:[#allocation2 + $0xe9] sm:$0xff]
        %v3012 = vld [vmem:[#allocation2 + $0xf1] sm:$0xff]
        %v3013 = vld [vmem:[#allocation2 + $0xf9] sm:$0xff]
        %v3014 = vld [vmem:[#allocation2 + $0x101] sm:$0xff]
        %v3015 = vld [vmem:[#allocation2 + $0x109] sm:$0xff]
        %v3016 = vld [vmem:[#allocation2 + $0x111] sm:$0xff]
        %v3017 = vld [vmem:[#allocation2 + $0x119] sm:$0xff]
        %v3018 = vld [vmem:[#allocation2 + $0x121] sm:$0xff]
        %v3019 = vld [vmem:[#allocation2 + $0x129] sm:$0xff]
        %v3020 = vld [vmem:[#allocation2 + $0x131] sm:$0xff]
        %v3021 = vld [vmem:[#allocation2 + $0x139] sm:$0xff]
        %v3022 = vld [vmem:[#allocation2 + $0x141] sm:$0xff]
        %v3023 = vld [vmem:[#allocation2 + $0x149] sm:$0xff]
        %v3024 = vld [vmem:[#allocation2 + $0x151] sm:$0xff]
        %v3025 = vld [vmem:[#allocation2 + $0x159] sm:$0xff]
        %v3026 = vpack.c.bf16 %v2986, %v2985
        %v3027 = vpack.c.bf16 %v2988, %v2987
        %v3028 = vpack.c.bf16 %v2990, %v2989
        %v3029 = vpack.c.bf16 %v2992, %v2991
        %v3030 = vpack.c.bf16 %v2994, %v2993
        %v3031 = vpack.c.bf16 %v2996, %v2995
        %v3032 = vpack.c.bf16 %v2998, %v2997
        %v3033 = vpack.c.bf16 %v3000, %v2999
        %v3034 = vpack.c.bf16 %v3002, %v3001
        %v3035 = vpack.c.bf16 %v3004, %v3003
        %v3036 = vpack.c.bf16 %v3006, %v3005
        %v3037 = vpack.c.bf16 %v3008, %v3007
        %v3038 = vpack.c.bf16 %v3010, %v3009
        %v3039 = vpack.c.bf16 %v3012, %v3011
        %v3040 = vpack.c.bf16 %v3014, %v3013
        %v3041 = vpack.c.bf16 %v3016, %v3015
        %v3042 = vpack.c.bf16 %v3018, %v3017
        %v3043 = vpack.c.bf16 %v3020, %v3019
        %v3044 = vpack.c.bf16 %v3022, %v3021
        %v3045 = vpack.c.bf16 %v3024, %v3023
        %v3046 = vpack.c.bf16 %v3025, %v3025
        %v3047 = vld [vmem:[#allocation11 + $0x140] sm:$0xf]
        %v3048 = vld [vmem:[#allocation11 + $0x144] sm:$0xf]
        %v3049 = vld [vmem:[#allocation11 + $0x148] sm:$0xf]
        %v3050 = vld [vmem:[#allocation11 + $0x14c] sm:$0xf]
        %v3051 = vld [vmem:[#allocation11 + $0x150] sm:$0xf]
        %v3052 = vld [vmem:[#allocation11 + $0x154] sm:$0xf]
        %v3053 = vld [vmem:[#allocation11 + $0x158] sm:$0xf]
        %v3054 = vld [vmem:[#allocation11 + $0x15c] sm:$0xf]
        %v3055 = vld [vmem:[#allocation11 + $0x160] sm:$0xf]
        %v3056 = vld [vmem:[#allocation11 + $0x164] sm:$0xf]
        %v3057 = vld [vmem:[#allocation11 + $0x168] sm:$0xf]
        %v3058 = vld [vmem:[#allocation11 + $0x16c] sm:$0xf]
        %v3059 = vld [vmem:[#allocation11 + $0x170] sm:$0xf]
        %v3060 = vld [vmem:[#allocation11 + $0x174] sm:$0xf]
        %v3061 = vld [vmem:[#allocation11 + $0x178] sm:$0xf]
        %v3062 = vld [vmem:[#allocation11 + $0x17c] sm:$0xf]
        %v3079 = vunpack.c.l.b16 %v3047
        %v3080 = vunpack.c.l.b16 %v3048
        %v3081 = vunpack.c.l.b16 %v3049
        %v3082 = vunpack.c.l.b16 %v3050
        %v3083 = vunpack.c.l.b16 %v3051
        %v3084 = vunpack.c.l.b16 %v3052
        %v3085 = vunpack.c.l.b16 %v3053
        %v3086 = vunpack.c.l.b16 %v3054
        %v3087 = vunpack.c.l.b16 %v3055
        %v3088 = vunpack.c.l.b16 %v3056
        %v3089 = vunpack.c.l.b16 %v3057
        %v3090 = vunpack.c.l.b16 %v3058
        %v3091 = vunpack.c.l.b16 %v3059
        %v3092 = vunpack.c.l.b16 %v3060
        %v3093 = vunpack.c.l.b16 %v3061
        %v3094 = vunpack.c.l.b16 %v3062
        %v3095 = vpack.c.b16 %v3080, %v3079
        %v3096 = vpack.c.b16 %v3082, %v3081
        %v3097 = vpack.c.b16 %v3084, %v3083
        %v3098 = vpack.c.b16 %v3086, %v3085
        %v3099 = vpack.c.b16 %v3088, %v3087
        %v3100 = vpack.c.b16 %v3090, %v3089
        %v3101 = vpack.c.b16 %v3092, %v3091
        %v3102 = vpack.c.b16 %v3094, %v3093
        %3111 = vmatprep.subr.bf16.mxu0 0
        %3112 = vmatpush1.bf16.msra.mxu0 %v3095
        %3113 = vmatprep.subr.bf16.mxu0 0
        %3114 = vmatpush1.bf16.msra.mxu0 %v3096
        %3115 = vmatprep.subr.bf16.mxu0 0
        %3116 = vmatpush1.bf16.msra.mxu0 %v3097
        %3117 = vmatprep.subr.bf16.mxu0 0
        %3118 = vmatpush1.bf16.msra.mxu0 %v3098
        %3119 = vmatprep.subr.bf16.mxu0 0
        %3120 = vmatpush1.bf16.msra.mxu0 %v3099
        %3121 = vmatprep.subr.bf16.mxu0 0
        %3122 = vmatpush1.bf16.msra.mxu0 %v3100
        %3123 = vmatprep.subr.bf16.mxu0 0
        %3124 = vmatpush1.bf16.msra.mxu0 %v3101
        %3125 = vmatprep.subr.bf16.mxu0 0
        %3126 = vmatpush1.bf16.msra.mxu0 %v3102
        %3127 = vmatprep.subr.bf16.mxu0 0
        %3128 = vmatpush1.bf16.msra.mxu0 0
        %3129 = vmatprep.subr.bf16.mxu0 0
        %3130 = vmatpush1.bf16.msra.mxu0 0
        %3131 = vmatprep.subr.bf16.mxu0 0
        %3132 = vmatpush1.bf16.msra.mxu0 0
        %3133 = vmatprep.subr.bf16.mxu0 0
        %3134 = vmatpush1.bf16.msra.mxu0 0
        %3135 = vmatprep.subr.bf16.mxu0 0
        %3136 = vmatpush1.bf16.msra.mxu0 0
        %3137 = vmatprep.subr.bf16.mxu0 0
        %3138 = vmatpush1.bf16.msra.mxu0 0
        %3139 = vmatprep.subr.bf16.mxu0 0
        %3140 = vmatpush1.bf16.msra.mxu0 0
        %3141 = vmatprep.subr.bf16.mxu0 0
        %3142 = vmatpush1.bf16.msra.mxu0 0
        %3143 = vmatprep.mubr.bf16.mxu0 0
        %3144 = vmatmul.mubr.bf16.gmra.mrb[0].mxu0 %v3026
        %v3145 = vpop.f32.mrb[0].mxu0
        %v3146 = vadd.f32 0.0, %v3145
        %v3147 = vpop.f32.mrb[0].mxu0
        %v3148 = vpop.f32.mrb[0].mxu0
        %v3149 = vadd.f32 0.0, %v3148
        %v3150 = vpop.f32.mrb[0].mxu0
        %3151 = vmatprep.mubr.bf16.mxu0 0
        %3152 = vmatmul.mubr.bf16.gmra.mrb[0].mxu0 %v3027
        %v3153 = vpop.f32.mrb[0].mxu0
        %v3154 = vadd.f32 0.0, %v3153
        %v3155 = vpop.f32.mrb[0].mxu0
        %v3156 = vpop.f32.mrb[0].mxu0
        %v3157 = vadd.f32 0.0, %v3156
        %v3158 = vpop.f32.mrb[0].mxu0
        %3159 = vmatprep.mubr.bf16.mxu0 0
        %3160 = vmatmul.mubr.bf16.gmra.mrb[0].mxu0 %v3028
        %v3161 = vpop.f32.mrb[0].mxu0
        %v3162 = vadd.f32 0.0, %v3161
        %v3163 = vpop.f32.mrb[0].mxu0
        %v3164 = vpop.f32.mrb[0].mxu0
        %v3165 = vadd.f32 0.0, %v3164
        %v3166 = vpop.f32.mrb[0].mxu0
        %3167 = vmatprep.mubr.bf16.mxu0 0
        %3168 = vmatmul.mubr.bf16.gmra.mrb[0].mxu0 %v3029
        %v3169 = vpop.f32.mrb[0].mxu0
        %v3170 = vadd.f32 0.0, %v3169
        %v3171 = vpop.f32.mrb[0].mxu0
        %v3172 = vpop.f32.mrb[0].mxu0
        %v3173 = vadd.f32 0.0, %v3172
        %v3174 = vpop.f32.mrb[0].mxu0
        %3175 = vmatprep.mubr.bf16.mxu0 0
        %3176 = vmatmul.mubr.bf16.gmra.mrb[0].mxu0 %v3030
        %v3177 = vpop.f32.mrb[0].mxu0
        %v3178 = vadd.f32 0.0, %v3177
        %v3179 = vpop.f32.mrb[0].mxu0
        %v3180 = vpop.f32.mrb[0].mxu0
        %v3181 = vadd.f32 0.0, %v3180
        %v3182 = vpop.f32.mrb[0].mxu0
        %3183 = vmatprep.mubr.bf16.mxu0 0
        %3184 = vmatmul.mubr.bf16.gmra.mrb[0].mxu0 %v3031
        %v3185 = vpop.f32.mrb[0].mxu0
        %v3186 = vadd.f32 0.0, %v3185
        %v3187 = vpop.f32.mrb[0].mxu0
        %v3188 = vpop.f32.mrb[0].mxu0
        %v3189 = vadd.f32 0.0, %v3188
        %v3190 = vpop.f32.mrb[0].mxu0
        %3191 = vmatprep.mubr.bf16.mxu0 0
        %3192 = vmatmul.mubr.bf16.gmra.mrb[0].mxu0 %v3032
        %v3193 = vpop.f32.mrb[0].mxu0
        %v3194 = vadd.f32 0.0, %v3193
        %v3195 = vpop.f32.mrb[0].mxu0
        %v3196 = vpop.f32.mrb[0].mxu0
        %v3197 = vadd.f32 0.0, %v3196
        %v3198 = vpop.f32.mrb[0].mxu0
        %3199 = vmatprep.mubr.bf16.mxu0 0
        %3200 = vmatmul.mubr.bf16.gmra.mrb[0].mxu0 %v3033
        %v3201 = vpop.f32.mrb[0].mxu0
        %v3202 = vadd.f32 0.0, %v3201
        %v3203 = vpop.f32.mrb[0].mxu0
        %v3204 = vpop.f32.mrb[0].mxu0
        %v3205 = vadd.f32 0.0, %v3204
        %v3206 = vpop.f32.mrb[0].mxu0
        %3207 = vmatprep.mubr.bf16.mxu0 0
        %3208 = vmatmul.mubr.bf16.gmra.mrb[0].mxu0 %v3034
        %v3209 = vpop.f32.mrb[0].mxu0
        %v3210 = vadd.f32 0.0, %v3209
        %v3211 = vpop.f32.mrb[0].mxu0
        %v3212 = vpop.f32.mrb[0].mxu0
        %v3213 = vadd.f32 0.0, %v3212
        %v3214 = vpop.f32.mrb[0].mxu0
        %3215 = vmatprep.mubr.bf16.mxu0 0
        %3216 = vmatmul.mubr.bf16.gmra.mrb[0].mxu0 %v3035
        %v3217 = vpop.f32.mrb[0].mxu0
        %v3218 = vadd.f32 0.0, %v3217
        %v3219 = vpop.f32.mrb[0].mxu0
        %v3220 = vpop.f32.mrb[0].mxu0
        %v3221 = vadd.f32 0.0, %v3220
        %v3222 = vpop.f32.mrb[0].mxu0
        %3223 = vmatprep.mubr.bf16.mxu0 0
        %3224 = vmatmul.mubr.bf16.gmra.mrb[0].mxu0 %v3036
        %v3225 = vpop.f32.mrb[0].mxu0
        %v3226 = vadd.f32 0.0, %v3225
        %v3227 = vpop.f32.mrb[0].mxu0
        %v3228 = vpop.f32.mrb[0].mxu0
        %v3229 = vadd.f32 0.0, %v3228
        %v3230 = vpop.f32.mrb[0].mxu0
        %3231 = vmatprep.mubr.bf16.mxu0 0
        %3232 = vmatmul.mubr.bf16.gmra.mrb[0].mxu0 %v3037
        %v3233 = vpop.f32.mrb[0].mxu0
        %v3234 = vadd.f32 0.0, %v3233
        %v3235 = vpop.f32.mrb[0].mxu0
        %v3236 = vpop.f32.mrb[0].mxu0
        %v3237 = vadd.f32 0.0, %v3236
        %v3238 = vpop.f32.mrb[0].mxu0
        %3239 = vmatprep.mubr.bf16.mxu0 0
        %3240 = vmatmul.mubr.bf16.gmra.mrb[0].mxu0 %v3038
        %v3241 = vpop.f32.mrb[0].mxu0
        %v3242 = vadd.f32 0.0, %v3241
        %v3243 = vpop.f32.mrb[0].mxu0
        %v3244 = vpop.f32.mrb[0].mxu0
        %v3245 = vadd.f32 0.0, %v3244
        %v3246 = vpop.f32.mrb[0].mxu0
        %3247 = vmatprep.mubr.bf16.mxu0 0
        %3248 = vmatmul.mubr.bf16.gmra.mrb[0].mxu0 %v3039
        %v3249 = vpop.f32.mrb[0].mxu0
        %v3250 = vadd.f32 0.0, %v3249
        %v3251 = vpop.f32.mrb[0].mxu0
        %v3252 = vpop.f32.mrb[0].mxu0
        %v3253 = vadd.f32 0.0, %v3252
        %v3254 = vpop.f32.mrb[0].mxu0
        %3255 = vmatprep.mubr.bf16.mxu0 0
        %3256 = vmatmul.mubr.bf16.gmra.mrb[0].mxu0 %v3040
        %v3257 = vpop.f32.mrb[0].mxu0
        %v3258 = vadd.f32 0.0, %v3257
        %v3259 = vpop.f32.mrb[0].mxu0
        %v3260 = vpop.f32.mrb[0].mxu0
        %v3261 = vadd.f32 0.0, %v3260
        %v3262 = vpop.f32.mrb[0].mxu0
        %3263 = vmatprep.mubr.bf16.mxu0 0
        %3264 = vmatmul.mubr.bf16.gmra.mrb[0].mxu0 %v3041
        %v3265 = vpop.f32.mrb[0].mxu0
        %v3266 = vadd.f32 0.0, %v3265
        %v3267 = vpop.f32.mrb[0].mxu0
        %v3268 = vpop.f32.mrb[0].mxu0
        %v3269 = vadd.f32 0.0, %v3268
        %v3270 = vpop.f32.mrb[0].mxu0
        %3271 = vmatprep.mubr.bf16.mxu0 0
        %3272 = vmatmul.mubr.bf16.gmra.mrb[0].mxu0 %v3042
        %v3273 = vpop.f32.mrb[0].mxu0
        %v3274 = vadd.f32 0.0, %v3273
        %v3275 = vpop.f32.mrb[0].mxu0
        %v3276 = vpop.f32.mrb[0].mxu0
        %v3277 = vadd.f32 0.0, %v3276
        %v3278 = vpop.f32.mrb[0].mxu0
        %3279 = vmatprep.mubr.bf16.mxu0 0
        %3280 = vmatmul.mubr.bf16.gmra.mrb[0].mxu0 %v3043
        %v3281 = vpop.f32.mrb[0].mxu0
        %v3282 = vadd.f32 0.0, %v3281
        %v3283 = vpop.f32.mrb[0].mxu0
        %v3284 = vpop.f32.mrb[0].mxu0
        %v3285 = vadd.f32 0.0, %v3284
        %v3286 = vpop.f32.mrb[0].mxu0
        %3287 = vmatprep.mubr.bf16.mxu0 0
        %3288 = vmatmul.mubr.bf16.gmra.mrb[0].mxu0 %v3044
        %v3289 = vpop.f32.mrb[0].mxu0
        %v3290 = vadd.f32 0.0, %v3289
        %v3291 = vpop.f32.mrb[0].mxu0
        %v3292 = vpop.f32.mrb[0].mxu0
        %v3293 = vadd.f32 0.0, %v3292
        %v3294 = vpop.f32.mrb[0].mxu0
        %3295 = vmatprep.mubr.bf16.mxu0 0
        %3296 = vmatmul.mubr.bf16.gmra.mrb[0].mxu0 %v3045
        %v3297 = vpop.f32.mrb[0].mxu0
        %v3298 = vadd.f32 0.0, %v3297
        %v3299 = vpop.f32.mrb[0].mxu0
        %v3300 = vpop.f32.mrb[0].mxu0
        %v3301 = vadd.f32 0.0, %v3300
        %v3302 = vpop.f32.mrb[0].mxu0
        %3303 = vmatprep.mubr.bf16.mxu0 0
        %3304 = vmatmul.mubr.bf16.gmra.mrb[0].mxu0 %v3046
        %v3305 = vpop.f32.mrb[0].mxu0
        %v3306 = vadd.f32 0.0, %v3305
        %v3307 = vpop.f32.mrb[0].mxu0
        %v3308 = vpop.f32.mrb[0].mxu0
        %v3309 = vpop.f32.mrb[0].mxu0
        %3310 = vdwg.mxu0
        %v3311 = vadd.f32 %v2944, %v3146
        %v3312 = vadd.f32 %v2945, %v3149
        %v3313 = vadd.f32 %v2946, %v3154
        %v3314 = vadd.f32 %v2947, %v3157
        %v3315 = vadd.f32 %v2948, %v3162
        %v3316 = vadd.f32 %v2949, %v3165
        %v3317 = vadd.f32 %v2950, %v3170
        %v3318 = vadd.f32 %v2951, %v3173
        %v3319 = vadd.f32 %v2952, %v3178
        %v3320 = vadd.f32 %v2953, %v3181
        %v3321 = vadd.f32 %v2954, %v3186
        %v3322 = vadd.f32 %v2955, %v3189
        %v3323 = vadd.f32 %v2956, %v3194
        %v3324 = vadd.f32 %v2957, %v3197
        %v3325 = vadd.f32 %v2958, %v3202
        %v3326 = vadd.f32 %v2959, %v3205
        %v3327 = vadd.f32 %v2960, %v3210
        %v3328 = vadd.f32 %v2961, %v3213
        %v3329 = vadd.f32 %v2962, %v3218
        %v3330 = vadd.f32 %v2963, %v3221
        %v3331 = vadd.f32 %v2964, %v3226
        %v3332 = vadd.f32 %v2965, %v3229
        %v3333 = vadd.f32 %v2966, %v3234
        %v3334 = vadd.f32 %v2967, %v3237
        %v3335 = vadd.f32 %v2968, %v3242
        %v3336 = vadd.f32 %v2969, %v3245
        %v3337 = vadd.f32 %v2970, %v3250
        %v3338 = vadd.f32 %v2971, %v3253
        %v3339 = vadd.f32 %v2972, %v3258
        %v3340 = vadd.f32 %v2973, %v3261
        %v3341 = vadd.f32 %v2974, %v3266
        %v3342 = vadd.f32 %v2975, %v3269
        %v3343 = vadd.f32 %v2976, %v3274
        %v3344 = vadd.f32 %v2977, %v3277
        %v3345 = vadd.f32 %v2978, %v3282
        %v3346 = vadd.f32 %v2979, %v3285
        %v3347 = vadd.f32 %v2980, %v3290
        %v3348 = vadd.f32 %v2981, %v3293
        %v3349 = vadd.f32 %v2982, %v3298
        %v3350 = vadd.f32 %v2983, %v3301
        %v3351 = vadd.f32 %v2984, %v3306
        %v3352 = vld [vmem:[#allocation2 + $0x29] sm:$0xff]
        %v3353 = vld [vmem:[#allocation2 + $0x31] sm:$0xff]
        %v3354 = vld [vmem:[#allocation2 + $0x39] sm:$0xff]
        %v3355 = vld [vmem:[#allocation2 + $0x41] sm:$0xff]
        %v3356 = vld [vmem:[#allocation2 + $0x49] sm:$0xff]
        %v3357 = vld [vmem:[#allocation2 + $0x51] sm:$0xff]
        %v3358 = vld [vmem:[#allocation2 + $0x59] sm:$0xff]
        %v3359 = vld [vmem:[#allocation2 + $0x61] sm:$0xff]
        %v3360 = vld [vmem:[#allocation2 + $0x69] sm:$0xff]
        %v3361 = vld [vmem:[#allocation2 + $0x71] sm:$0xff]
        %v3362 = vld [vmem:[#allocation2 + $0x79] sm:$0xff]
        %v3363 = vld [vmem:[#allocation2 + $0x81] sm:$0xff]
        %v3364 = vld [vmem:[#allocation2 + $0x89] sm:$0xff]
        %v3365 = vld [vmem:[#allocation2 + $0x91] sm:$0xff]
        %v3366 = vld [vmem:[#allocation2 + $0x99] sm:$0xff]
        %v3367 = vld [vmem:[#allocation2 + $0xa1] sm:$0xff]
        %v3368 = vld [vmem:[#allocation2 + $0xa9] sm:$0xff]
        %v3369 = vld [vmem:[#allocation2 + $0xb1] sm:$0xff]
        %v3370 = vld [vmem:[#allocation2 + $0xb9] sm:$0xff]
        %v3371 = vld [vmem:[#allocation2 + $0xc1] sm:$0xff]
        %v3372 = vld [vmem:[#allocation2 + $0xc9] sm:$0xff]
        %v3373 = vld [vmem:[#allocation2 + $0xd1] sm:$0xff]
        %v3374 = vld [vmem:[#allocation2 + $0xd9] sm:$0xff]
        %v3375 = vld [vmem:[#allocation2 + $0xe1] sm:$0xff]
        %v3376 = vld [vmem:[#allocation2 + $0xe9] sm:$0xff]
        %v3377 = vld [vmem:[#allocation2 + $0xf1] sm:$0xff]
        %v3378 = vld [vmem:[#allocation2 + $0xf9] sm:$0xff]
        %v3379 = vld [vmem:[#allocation2 + $0x101] sm:$0xff]
        %v3380 = vld [vmem:[#allocation2 + $0x109] sm:$0xff]
        %v3381 = vld [vmem:[#allocation2 + $0x111] sm:$0xff]
        %v3382 = vld [vmem:[#allocation2 + $0x119] sm:$0xff]
        %v3383 = vld [vmem:[#allocation2 + $0x121] sm:$0xff]
        %v3384 = vld [vmem:[#allocation2 + $0x129] sm:$0xff]
        %v3385 = vld [vmem:[#allocation2 + $0x131] sm:$0xff]
        %v3386 = vld [vmem:[#allocation2 + $0x139] sm:$0xff]
        %v3387 = vld [vmem:[#allocation2 + $0x141] sm:$0xff]
        %v3388 = vld [vmem:[#allocation2 + $0x149] sm:$0xff]
        %v3389 = vld [vmem:[#allocation2 + $0x151] sm:$0xff]
        %v3390 = vld [vmem:[#allocation2 + $0x159] sm:$0xff]
        %v3391 = vld [vmem:[#allocation2 + $0x161] sm:$0xff]
        %v3392 = vld [vmem:[#allocation2 + $0x169] sm:$0xff]
        %v3393 = vpack.c.bf16 %v3353, %v3352
        %v3394 = vpack.c.bf16 %v3355, %v3354
        %v3395 = vpack.c.bf16 %v3357, %v3356
        %v3396 = vpack.c.bf16 %v3359, %v3358
        %v3397 = vpack.c.bf16 %v3361, %v3360
        %v3398 = vpack.c.bf16 %v3363, %v3362
        %v3399 = vpack.c.bf16 %v3365, %v3364
        %v3400 = vpack.c.bf16 %v3367, %v3366
        %v3401 = vpack.c.bf16 %v3369, %v3368
        %v3402 = vpack.c.bf16 %v3371, %v3370
        %v3403 = vpack.c.bf16 %v3373, %v3372
        %v3404 = vpack.c.bf16 %v3375, %v3374
        %v3405 = vpack.c.bf16 %v3377, %v3376
        %v3406 = vpack.c.bf16 %v3379, %v3378
        %v3407 = vpack.c.bf16 %v3381, %v3380
        %v3408 = vpack.c.bf16 %v3383, %v3382
        %v3409 = vpack.c.bf16 %v3385, %v3384
        %v3410 = vpack.c.bf16 %v3387, %v3386
        %v3411 = vpack.c.bf16 %v3389, %v3388
        %v3412 = vpack.c.bf16 %v3391, %v3390
        %v3413 = vpack.c.bf16 %v3392, %v3392
        %v3414 = vld [vmem:[#allocation11 + $0x180] sm:$0xf]
        %v3415 = vld [vmem:[#allocation11 + $0x184] sm:$0xf]
        %v3416 = vld [vmem:[#allocation11 + $0x188] sm:$0xf]
        %v3417 = vld [vmem:[#allocation11 + $0x18c] sm:$0xf]
        %v3418 = vld [vmem:[#allocation11 + $0x190] sm:$0xf]
        %v3419 = vld [vmem:[#allocation11 + $0x194] sm:$0xf]
        %v3420 = vld [vmem:[#allocation11 + $0x198] sm:$0xf]
        %v3421 = vld [vmem:[#allocation11 + $0x19c] sm:$0xf]
        %v3422 = vld [vmem:[#allocation11 + $0x1a0] sm:$0xf]
        %v3423 = vld [vmem:[#allocation11 + $0x1a4] sm:$0xf]
        %v3424 = vld [vmem:[#allocation11 + $0x1a8] sm:$0xf]
        %v3425 = vld [vmem:[#allocation11 + $0x1ac] sm:$0xf]
        %v3426 = vld [vmem:[#allocation11 + $0x1b0] sm:$0xf]
        %v3427 = vld [vmem:[#allocation11 + $0x1b4] sm:$0xf]
        %v3428 = vld [vmem:[#allocation11 + $0x1b8] sm:$0xf]
        %v3429 = vld [vmem:[#allocation11 + $0x1bc] sm:$0xf]
        %v3446 = vunpack.c.l.b16 %v3414
        %v3447 = vunpack.c.l.b16 %v3415
        %v3448 = vunpack.c.l.b16 %v3416
        %v3449 = vunpack.c.l.b16 %v3417
        %v3450 = vunpack.c.l.b16 %v3418
        %v3451 = vunpack.c.l.b16 %v3419
        %v3452 = vunpack.c.l.b16 %v3420
        %v3453 = vunpack.c.l.b16 %v3421
        %v3454 = vunpack.c.l.b16 %v3422
        %v3455 = vunpack.c.l.b16 %v3423
        %v3456 = vunpack.c.l.b16 %v3424
        %v3457 = vunpack.c.l.b16 %v3425
        %v3458 = vunpack.c.l.b16 %v3426
        %v3459 = vunpack.c.l.b16 %v3427
        %v3460 = vunpack.c.l.b16 %v3428
        %v3461 = vunpack.c.l.b16 %v3429
        %v3462 = vpack.c.b16 %v3447, %v3446
        %v3463 = vpack.c.b16 %v3449, %v3448
        %v3464 = vpack.c.b16 %v3451, %v3450
        %v3465 = vpack.c.b16 %v3453, %v3452
        %v3466 = vpack.c.b16 %v3455, %v3454
        %v3467 = vpack.c.b16 %v3457, %v3456
        %v3468 = vpack.c.b16 %v3459, %v3458
        %v3469 = vpack.c.b16 %v3461, %v3460
        %3478 = vmatprep.subr.bf16.mxu0 0
        %3479 = vmatpush1.bf16.msra.mxu0 %v3462
        %3480 = vmatprep.subr.bf16.mxu0 0
        %3481 = vmatpush1.bf16.msra.mxu0 %v3463
        %3482 = vmatprep.subr.bf16.mxu0 0
        %3483 = vmatpush1.bf16.msra.mxu0 %v3464
        %3484 = vmatprep.subr.bf16.mxu0 0
        %3485 = vmatpush1.bf16.msra.mxu0 %v3465
        %3486 = vmatprep.subr.bf16.mxu0 0
        %3487 = vmatpush1.bf16.msra.mxu0 %v3466
        %3488 = vmatprep.subr.bf16.mxu0 0
        %3489 = vmatpush1.bf16.msra.mxu0 %v3467
        %3490 = vmatprep.subr.bf16.mxu0 0
        %3491 = vmatpush1.bf16.msra.mxu0 %v3468
        %3492 = vmatprep.subr.bf16.mxu0 0
        %3493 = vmatpush1.bf16.msra.mxu0 %v3469
        %3494 = vmatprep.subr.bf16.mxu0 0
        %3495 = vmatpush1.bf16.msra.mxu0 0
        %3496 = vmatprep.subr.bf16.mxu0 0
        %3497 = vmatpush1.bf16.msra.mxu0 0
        %3498 = vmatprep.subr.bf16.mxu0 0
        %3499 = vmatpush1.bf16.msra.mxu0 0
        %3500 = vmatprep.subr.bf16.mxu0 0
        %3501 = vmatpush1.bf16.msra.mxu0 0
        %3502 = vmatprep.subr.bf16.mxu0 0
        %3503 = vmatpush1.bf16.msra.mxu0 0
        %3504 = vmatprep.subr.bf16.mxu0 0
        %3505 = vmatpush1.bf16.msra.mxu0 0
        %3506 = vmatprep.subr.bf16.mxu0 0
        %3507 = vmatpush1.bf16.msra.mxu0 0
        %3508 = vmatprep.subr.bf16.mxu0 0
        %3509 = vmatpush1.bf16.msra.mxu0 0
        %3510 = vmatprep.mubr.bf16.mxu0 0
        %3511 = vmatmul.mubr.bf16.gmra.mrb[0].mxu0 %v3393
        %v3512 = vpop.f32.mrb[0].mxu0
        %v3513 = vadd.f32 0.0, %v3512
        %v3514 = vpop.f32.mrb[0].mxu0
        %v3515 = vpop.f32.mrb[0].mxu0
        %v3516 = vadd.f32 0.0, %v3515
        %v3517 = vpop.f32.mrb[0].mxu0
        %3518 = vmatprep.mubr.bf16.mxu0 0
        %3519 = vmatmul.mubr.bf16.gmra.mrb[0].mxu0 %v3394
        %v3520 = vpop.f32.mrb[0].mxu0
        %v3521 = vadd.f32 0.0, %v3520
        %v3522 = vpop.f32.mrb[0].mxu0
        %v3523 = vpop.f32.mrb[0].mxu0
        %v3524 = vadd.f32 0.0, %v3523
        %v3525 = vpop.f32.mrb[0].mxu0
        %3526 = vmatprep.mubr.bf16.mxu0 0
        %3527 = vmatmul.mubr.bf16.gmra.mrb[0].mxu0 %v3395
        %v3528 = vpop.f32.mrb[0].mxu0
        %v3529 = vadd.f32 0.0, %v3528
        %v3530 = vpop.f32.mrb[0].mxu0
        %v3531 = vpop.f32.mrb[0].mxu0
        %v3532 = vadd.f32 0.0, %v3531
        %v3533 = vpop.f32.mrb[0].mxu0
        %3534 = vmatprep.mubr.bf16.mxu0 0
        %3535 = vmatmul.mubr.bf16.gmra.mrb[0].mxu0 %v3396
        %v3536 = vpop.f32.mrb[0].mxu0
        %v3537 = vadd.f32 0.0, %v3536
        %v3538 = vpop.f32.mrb[0].mxu0
        %v3539 = vpop.f32.mrb[0].mxu0
        %v3540 = vadd.f32 0.0, %v3539
        %v3541 = vpop.f32.mrb[0].mxu0
        %3542 = vmatprep.mubr.bf16.mxu0 0
        %3543 = vmatmul.mubr.bf16.gmra.mrb[0].mxu0 %v3397
        %v3544 = vpop.f32.mrb[0].mxu0
        %v3545 = vadd.f32 0.0, %v3544
        %v3546 = vpop.f32.mrb[0].mxu0
        %v3547 = vpop.f32.mrb[0].mxu0
        %v3548 = vadd.f32 0.0, %v3547
        %v3549 = vpop.f32.mrb[0].mxu0
        %3550 = vmatprep.mubr.bf16.mxu0 0
        %3551 = vmatmul.mubr.bf16.gmra.mrb[0].mxu0 %v3398
        %v3552 = vpop.f32.mrb[0].mxu0
        %v3553 = vadd.f32 0.0, %v3552
        %v3554 = vpop.f32.mrb[0].mxu0
        %v3555 = vpop.f32.mrb[0].mxu0
        %v3556 = vadd.f32 0.0, %v3555
        %v3557 = vpop.f32.mrb[0].mxu0
        %3558 = vmatprep.mubr.bf16.mxu0 0
        %3559 = vmatmul.mubr.bf16.gmra.mrb[0].mxu0 %v3399
        %v3560 = vpop.f32.mrb[0].mxu0
        %v3561 = vadd.f32 0.0, %v3560
        %v3562 = vpop.f32.mrb[0].mxu0
        %v3563 = vpop.f32.mrb[0].mxu0
        %v3564 = vadd.f32 0.0, %v3563
        %v3565 = vpop.f32.mrb[0].mxu0
        %3566 = vmatprep.mubr.bf16.mxu0 0
        %3567 = vmatmul.mubr.bf16.gmra.mrb[0].mxu0 %v3400
        %v3568 = vpop.f32.mrb[0].mxu0
        %v3569 = vadd.f32 0.0, %v3568
        %v3570 = vpop.f32.mrb[0].mxu0
        %v3571 = vpop.f32.mrb[0].mxu0
        %v3572 = vadd.f32 0.0, %v3571
        %v3573 = vpop.f32.mrb[0].mxu0
        %3574 = vmatprep.mubr.bf16.mxu0 0
        %3575 = vmatmul.mubr.bf16.gmra.mrb[0].mxu0 %v3401
        %v3576 = vpop.f32.mrb[0].mxu0
        %v3577 = vadd.f32 0.0, %v3576
        %v3578 = vpop.f32.mrb[0].mxu0
        %v3579 = vpop.f32.mrb[0].mxu0
        %v3580 = vadd.f32 0.0, %v3579
        %v3581 = vpop.f32.mrb[0].mxu0
        %3582 = vmatprep.mubr.bf16.mxu0 0
        %3583 = vmatmul.mubr.bf16.gmra.mrb[0].mxu0 %v3402
        %v3584 = vpop.f32.mrb[0].mxu0
        %v3585 = vadd.f32 0.0, %v3584
        %v3586 = vpop.f32.mrb[0].mxu0
        %v3587 = vpop.f32.mrb[0].mxu0
        %v3588 = vadd.f32 0.0, %v3587
        %v3589 = vpop.f32.mrb[0].mxu0
        %3590 = vmatprep.mubr.bf16.mxu0 0
        %3591 = vmatmul.mubr.bf16.gmra.mrb[0].mxu0 %v3403
        %v3592 = vpop.f32.mrb[0].mxu0
        %v3593 = vadd.f32 0.0, %v3592
        %v3594 = vpop.f32.mrb[0].mxu0
        %v3595 = vpop.f32.mrb[0].mxu0
        %v3596 = vadd.f32 0.0, %v3595
        %v3597 = vpop.f32.mrb[0].mxu0
        %3598 = vmatprep.mubr.bf16.mxu0 0
        %3599 = vmatmul.mubr.bf16.gmra.mrb[0].mxu0 %v3404
        %v3600 = vpop.f32.mrb[0].mxu0
        %v3601 = vadd.f32 0.0, %v3600
        %v3602 = vpop.f32.mrb[0].mxu0
        %v3603 = vpop.f32.mrb[0].mxu0
        %v3604 = vadd.f32 0.0, %v3603
        %v3605 = vpop.f32.mrb[0].mxu0
        %3606 = vmatprep.mubr.bf16.mxu0 0
        %3607 = vmatmul.mubr.bf16.gmra.mrb[0].mxu0 %v3405
        %v3608 = vpop.f32.mrb[0].mxu0
        %v3609 = vadd.f32 0.0, %v3608
        %v3610 = vpop.f32.mrb[0].mxu0
        %v3611 = vpop.f32.mrb[0].mxu0
        %v3612 = vadd.f32 0.0, %v3611
        %v3613 = vpop.f32.mrb[0].mxu0
        %3614 = vmatprep.mubr.bf16.mxu0 0
        %3615 = vmatmul.mubr.bf16.gmra.mrb[0].mxu0 %v3406
        %v3616 = vpop.f32.mrb[0].mxu0
        %v3617 = vadd.f32 0.0, %v3616
        %v3618 = vpop.f32.mrb[0].mxu0
        %v3619 = vpop.f32.mrb[0].mxu0
        %v3620 = vadd.f32 0.0, %v3619
        %v3621 = vpop.f32.mrb[0].mxu0
        %3622 = vmatprep.mubr.bf16.mxu0 0
        %3623 = vmatmul.mubr.bf16.gmra.mrb[0].mxu0 %v3407
        %v3624 = vpop.f32.mrb[0].mxu0
        %v3625 = vadd.f32 0.0, %v3624
        %v3626 = vpop.f32.mrb[0].mxu0
        %v3627 = vpop.f32.mrb[0].mxu0
        %v3628 = vadd.f32 0.0, %v3627
        %v3629 = vpop.f32.mrb[0].mxu0
        %3630 = vmatprep.mubr.bf16.mxu0 0
        %3631 = vmatmul.mubr.bf16.gmra.mrb[0].mxu0 %v3408
        %v3632 = vpop.f32.mrb[0].mxu0
        %v3633 = vadd.f32 0.0, %v3632
        %v3634 = vpop.f32.mrb[0].mxu0
        %v3635 = vpop.f32.mrb[0].mxu0
        %v3636 = vadd.f32 0.0, %v3635
        %v3637 = vpop.f32.mrb[0].mxu0
        %3638 = vmatprep.mubr.bf16.mxu0 0
        %3639 = vmatmul.mubr.bf16.gmra.mrb[0].mxu0 %v3409
        %v3640 = vpop.f32.mrb[0].mxu0
        %v3641 = vadd.f32 0.0, %v3640
        %v3642 = vpop.f32.mrb[0].mxu0
        %v3643 = vpop.f32.mrb[0].mxu0
        %v3644 = vadd.f32 0.0, %v3643
        %v3645 = vpop.f32.mrb[0].mxu0
        %3646 = vmatprep.mubr.bf16.mxu0 0
        %3647 = vmatmul.mubr.bf16.gmra.mrb[0].mxu0 %v3410
        %v3648 = vpop.f32.mrb[0].mxu0
        %v3649 = vadd.f32 0.0, %v3648
        %v3650 = vpop.f32.mrb[0].mxu0
        %v3651 = vpop.f32.mrb[0].mxu0
        %v3652 = vadd.f32 0.0, %v3651
        %v3653 = vpop.f32.mrb[0].mxu0
        %3654 = vmatprep.mubr.bf16.mxu0 0
        %3655 = vmatmul.mubr.bf16.gmra.mrb[0].mxu0 %v3411
        %v3656 = vpop.f32.mrb[0].mxu0
        %v3657 = vadd.f32 0.0, %v3656
        %v3658 = vpop.f32.mrb[0].mxu0
        %v3659 = vpop.f32.mrb[0].mxu0
        %v3660 = vadd.f32 0.0, %v3659
        %v3661 = vpop.f32.mrb[0].mxu0
        %3662 = vmatprep.mubr.bf16.mxu0 0
        %3663 = vmatmul.mubr.bf16.gmra.mrb[0].mxu0 %v3412
        %v3664 = vpop.f32.mrb[0].mxu0
        %v3665 = vadd.f32 0.0, %v3664
        %v3666 = vpop.f32.mrb[0].mxu0
        %v3667 = vpop.f32.mrb[0].mxu0
        %v3668 = vadd.f32 0.0, %v3667
        %v3669 = vpop.f32.mrb[0].mxu0
        %3670 = vmatprep.mubr.bf16.mxu0 0
        %3671 = vmatmul.mubr.bf16.gmra.mrb[0].mxu0 %v3413
        %v3672 = vpop.f32.mrb[0].mxu0
        %v3673 = vadd.f32 0.0, %v3672
        %v3674 = vpop.f32.mrb[0].mxu0
        %v3675 = vpop.f32.mrb[0].mxu0
        %v3676 = vpop.f32.mrb[0].mxu0
        %3677 = vdwg.mxu0
        %v3678 = vadd.f32 %v3311, %v3513
        %v3679 = vadd.f32 %v3312, %v3516
        %v3680 = vadd.f32 %v3313, %v3521
        %v3681 = vadd.f32 %v3314, %v3524
        %v3682 = vadd.f32 %v3315, %v3529
        %v3683 = vadd.f32 %v3316, %v3532
        %v3684 = vadd.f32 %v3317, %v3537
        %v3685 = vadd.f32 %v3318, %v3540
        %v3686 = vadd.f32 %v3319, %v3545
        %v3687 = vadd.f32 %v3320, %v3548
        %v3688 = vadd.f32 %v3321, %v3553
        %v3689 = vadd.f32 %v3322, %v3556
        %v3690 = vadd.f32 %v3323, %v3561
        %v3691 = vadd.f32 %v3324, %v3564
        %v3692 = vadd.f32 %v3325, %v3569
        %v3693 = vadd.f32 %v3326, %v3572
        %v3694 = vadd.f32 %v3327, %v3577
        %v3695 = vadd.f32 %v3328, %v3580
        %v3696 = vadd.f32 %v3329, %v3585
        %v3697 = vadd.f32 %v3330, %v3588
        %v3698 = vadd.f32 %v3331, %v3593
        %v3699 = vadd.f32 %v3332, %v3596
        %v3700 = vadd.f32 %v3333, %v3601
        %v3701 = vadd.f32 %v3334, %v3604
        %v3702 = vadd.f32 %v3335, %v3609
        %v3703 = vadd.f32 %v3336, %v3612
        %v3704 = vadd.f32 %v3337, %v3617
        %v3705 = vadd.f32 %v3338, %v3620
        %v3706 = vadd.f32 %v3339, %v3625
        %v3707 = vadd.f32 %v3340, %v3628
        %v3708 = vadd.f32 %v3341, %v3633
        %v3709 = vadd.f32 %v3342, %v3636
        %v3710 = vadd.f32 %v3343, %v3641
        %v3711 = vadd.f32 %v3344, %v3644
        %v3712 = vadd.f32 %v3345, %v3649
        %v3713 = vadd.f32 %v3346, %v3652
        %v3714 = vadd.f32 %v3347, %v3657
        %v3715 = vadd.f32 %v3348, %v3660
        %v3716 = vadd.f32 %v3349, %v3665
        %v3717 = vadd.f32 %v3350, %v3668
        %v3718 = vadd.f32 %v3351, %v3673
        %v3719 = vld [vmem:[#allocation2 + $0x2a] sm:$0xff]
        %v3720 = vld [vmem:[#allocation2 + $0x32] sm:$0xff]
        %v3721 = vld [vmem:[#allocation2 + $0x3a] sm:$0xff]
        %v3722 = vld [vmem:[#allocation2 + $0x42] sm:$0xff]
        %v3723 = vld [vmem:[#allocation2 + $0x4a] sm:$0xff]
        %v3724 = vld [vmem:[#allocation2 + $0x52] sm:$0xff]
        %v3725 = vld [vmem:[#allocation2 + $0x5a] sm:$0xff]
        %v3726 = vld [vmem:[#allocation2 + $0x62] sm:$0xff]
        %v3727 = vld [vmem:[#allocation2 + $0x6a] sm:$0xff]
        %v3728 = vld [vmem:[#allocation2 + $0x72] sm:$0xff]
        %v3729 = vld [vmem:[#allocation2 + $0x7a] sm:$0xff]
        %v3730 = vld [vmem:[#allocation2 + $0x82] sm:$0xff]
        %v3731 = vld [vmem:[#allocation2 + $0x8a] sm:$0xff]
        %v3732 = vld [vmem:[#allocation2 + $0x92] sm:$0xff]
        %v3733 = vld [vmem:[#allocation2 + $0x9a] sm:$0xff]
        %v3734 = vld [vmem:[#allocation2 + $0xa2] sm:$0xff]
        %v3735 = vld [vmem:[#allocation2 + $0xaa] sm:$0xff]
        %v3736 = vld [vmem:[#allocation2 + $0xb2] sm:$0xff]
        %v3737 = vld [vmem:[#allocation2 + $0xba] sm:$0xff]
        %v3738 = vld [vmem:[#allocation2 + $0xc2] sm:$0xff]
        %v3739 = vld [vmem:[#allocation2 + $0xca] sm:$0xff]
        %v3740 = vld [vmem:[#allocation2 + $0xd2] sm:$0xff]
        %v3741 = vld [vmem:[#allocation2 + $0xda] sm:$0xff]
        %v3742 = vld [vmem:[#allocation2 + $0xe2] sm:$0xff]
        %v3743 = vld [vmem:[#allocation2 + $0xea] sm:$0xff]
        %v3744 = vld [vmem:[#allocation2 + $0xf2] sm:$0xff]
        %v3745 = vld [vmem:[#allocation2 + $0xfa] sm:$0xff]
        %v3746 = vld [vmem:[#allocation2 + $0x102] sm:$0xff]
        %v3747 = vld [vmem:[#allocation2 + $0x10a] sm:$0xff]
        %v3748 = vld [vmem:[#allocation2 + $0x112] sm:$0xff]
        %v3749 = vld [vmem:[#allocation2 + $0x11a] sm:$0xff]
        %v3750 = vld [vmem:[#allocation2 + $0x122] sm:$0xff]
        %v3751 = vld [vmem:[#allocation2 + $0x12a] sm:$0xff]
        %v3752 = vld [vmem:[#allocation2 + $0x132] sm:$0xff]
        %v3753 = vld [vmem:[#allocation2 + $0x13a] sm:$0xff]
        %v3754 = vld [vmem:[#allocation2 + $0x142] sm:$0xff]
        %v3755 = vld [vmem:[#allocation2 + $0x14a] sm:$0xff]
        %v3756 = vld [vmem:[#allocation2 + $0x152] sm:$0xff]
        %v3757 = vld [vmem:[#allocation2 + $0x15a] sm:$0xff]
        %v3758 = vld [vmem:[#allocation2 + $0x162] sm:$0xff]
        %v3759 = vld [vmem:[#allocation2 + $0x16a] sm:$0xff]
        %v3760 = vpack.c.bf16 %v3720, %v3719
        %v3761 = vpack.c.bf16 %v3722, %v3721
        %v3762 = vpack.c.bf16 %v3724, %v3723
        %v3763 = vpack.c.bf16 %v3726, %v3725
        %v3764 = vpack.c.bf16 %v3728, %v3727
        %v3765 = vpack.c.bf16 %v3730, %v3729
        %v3766 = vpack.c.bf16 %v3732, %v3731
        %v3767 = vpack.c.bf16 %v3734, %v3733
        %v3768 = vpack.c.bf16 %v3736, %v3735
        %v3769 = vpack.c.bf16 %v3738, %v3737
        %v3770 = vpack.c.bf16 %v3740, %v3739
        %v3771 = vpack.c.bf16 %v3742, %v3741
        %v3772 = vpack.c.bf16 %v3744, %v3743
        %v3773 = vpack.c.bf16 %v3746, %v3745
        %v3774 = vpack.c.bf16 %v3748, %v3747
        %v3775 = vpack.c.bf16 %v3750, %v3749
        %v3776 = vpack.c.bf16 %v3752, %v3751
        %v3777 = vpack.c.bf16 %v3754, %v3753
        %v3778 = vpack.c.bf16 %v3756, %v3755
        %v3779 = vpack.c.bf16 %v3758, %v3757
        %v3780 = vpack.c.bf16 %v3759, %v3759
        %v3781 = vld [vmem:[#allocation11 + $0x1c0] sm:$0xf]
        %v3782 = vld [vmem:[#allocation11 + $0x1c4] sm:$0xf]
        %v3783 = vld [vmem:[#allocation11 + $0x1c8] sm:$0xf]
        %v3784 = vld [vmem:[#allocation11 + $0x1cc] sm:$0xf]
        %v3785 = vld [vmem:[#allocation11 + $0x1d0] sm:$0xf]
        %v3786 = vld [vmem:[#allocation11 + $0x1d4] sm:$0xf]
        %v3787 = vld [vmem:[#allocation11 + $0x1d8] sm:$0xf]
        %v3788 = vld [vmem:[#allocation11 + $0x1dc] sm:$0xf]
        %v3789 = vld [vmem:[#allocation11 + $0x1e0] sm:$0xf]
        %v3790 = vld [vmem:[#allocation11 + $0x1e4] sm:$0xf]
        %v3791 = vld [vmem:[#allocation11 + $0x1e8] sm:$0xf]
        %v3792 = vld [vmem:[#allocation11 + $0x1ec] sm:$0xf]
        %v3793 = vld [vmem:[#allocation11 + $0x1f0] sm:$0xf]
        %v3794 = vld [vmem:[#allocation11 + $0x1f4] sm:$0xf]
        %v3795 = vld [vmem:[#allocation11 + $0x1f8] sm:$0xf]
        %v3796 = vld [vmem:[#allocation11 + $0x1fc] sm:$0xf]
        %v3813 = vunpack.c.l.b16 %v3781
        %v3814 = vunpack.c.l.b16 %v3782
        %v3815 = vunpack.c.l.b16 %v3783
        %v3816 = vunpack.c.l.b16 %v3784
        %v3817 = vunpack.c.l.b16 %v3785
        %v3818 = vunpack.c.l.b16 %v3786
        %v3819 = vunpack.c.l.b16 %v3787
        %v3820 = vunpack.c.l.b16 %v3788
        %v3821 = vunpack.c.l.b16 %v3789
        %v3822 = vunpack.c.l.b16 %v3790
        %v3823 = vunpack.c.l.b16 %v3791
        %v3824 = vunpack.c.l.b16 %v3792
        %v3825 = vunpack.c.l.b16 %v3793
        %v3826 = vunpack.c.l.b16 %v3794
        %v3827 = vunpack.c.l.b16 %v3795
        %v3828 = vunpack.c.l.b16 %v3796
        %v3829 = vpack.c.b16 %v3814, %v3813
        %v3830 = vpack.c.b16 %v3816, %v3815
        %v3831 = vpack.c.b16 %v3818, %v3817
        %v3832 = vpack.c.b16 %v3820, %v3819
        %v3833 = vpack.c.b16 %v3822, %v3821
        %v3834 = vpack.c.b16 %v3824, %v3823
        %v3835 = vpack.c.b16 %v3826, %v3825
        %v3836 = vpack.c.b16 %v3828, %v3827
        %3845 = vmatprep.subr.bf16.mxu0 0
        %3846 = vmatpush1.bf16.msra.mxu0 %v3829
        %3847 = vmatprep.subr.bf16.mxu0 0
        %3848 = vmatpush1.bf16.msra.mxu0 %v3830
        %3849 = vmatprep.subr.bf16.mxu0 0
        %3850 = vmatpush1.bf16.msra.mxu0 %v3831
        %3851 = vmatprep.subr.bf16.mxu0 0
        %3852 = vmatpush1.bf16.msra.mxu0 %v3832
        %3853 = vmatprep.subr.bf16.mxu0 0
        %3854 = vmatpush1.bf16.msra.mxu0 %v3833
        %3855 = vmatprep.subr.bf16.mxu0 0
        %3856 = vmatpush1.bf16.msra.mxu0 %v3834
        %3857 = vmatprep.subr.bf16.mxu0 0
        %3858 = vmatpush1.bf16.msra.mxu0 %v3835
        %3859 = vmatprep.subr.bf16.mxu0 0
        %3860 = vmatpush1.bf16.msra.mxu0 %v3836
        %3861 = vmatprep.subr.bf16.mxu0 0
        %3862 = vmatpush1.bf16.msra.mxu0 0
        %3863 = vmatprep.subr.bf16.mxu0 0
        %3864 = vmatpush1.bf16.msra.mxu0 0
        %3865 = vmatprep.subr.bf16.mxu0 0
        %3866 = vmatpush1.bf16.msra.mxu0 0
        %3867 = vmatprep.subr.bf16.mxu0 0
        %3868 = vmatpush1.bf16.msra.mxu0 0
        %3869 = vmatprep.subr.bf16.mxu0 0
        %3870 = vmatpush1.bf16.msra.mxu0 0
        %3871 = vmatprep.subr.bf16.mxu0 0
        %3872 = vmatpush1.bf16.msra.mxu0 0
        %3873 = vmatprep.subr.bf16.mxu0 0
        %3874 = vmatpush1.bf16.msra.mxu0 0
        %3875 = vmatprep.subr.bf16.mxu0 0
        %3876 = vmatpush1.bf16.msra.mxu0 0
        %3877 = vmatprep.mubr.bf16.mxu0 0
        %3878 = vmatmul.mubr.bf16.gmra.mrb[0].mxu0 %v3760
        %v3879 = vpop.f32.mrb[0].mxu0
        %v3880 = vadd.f32 0.0, %v3879
        %v3881 = vpop.f32.mrb[0].mxu0
        %v3882 = vpop.f32.mrb[0].mxu0
        %v3883 = vadd.f32 0.0, %v3882
        %v3884 = vpop.f32.mrb[0].mxu0
        %3885 = vmatprep.mubr.bf16.mxu0 0
        %3886 = vmatmul.mubr.bf16.gmra.mrb[0].mxu0 %v3761
        %v3887 = vpop.f32.mrb[0].mxu0
        %v3888 = vadd.f32 0.0, %v3887
        %v3889 = vpop.f32.mrb[0].mxu0
        %v3890 = vpop.f32.mrb[0].mxu0
        %v3891 = vadd.f32 0.0, %v3890
        %v3892 = vpop.f32.mrb[0].mxu0
        %3893 = vmatprep.mubr.bf16.mxu0 0
        %3894 = vmatmul.mubr.bf16.gmra.mrb[0].mxu0 %v3762
        %v3895 = vpop.f32.mrb[0].mxu0
        %v3896 = vadd.f32 0.0, %v3895
        %v3897 = vpop.f32.mrb[0].mxu0
        %v3898 = vpop.f32.mrb[0].mxu0
        %v3899 = vadd.f32 0.0, %v3898
        %v3900 = vpop.f32.mrb[0].mxu0
        %3901 = vmatprep.mubr.bf16.mxu0 0
        %3902 = vmatmul.mubr.bf16.gmra.mrb[0].mxu0 %v3763
        %v3903 = vpop.f32.mrb[0].mxu0
        %v3904 = vadd.f32 0.0, %v3903
        %v3905 = vpop.f32.mrb[0].mxu0
        %v3906 = vpop.f32.mrb[0].mxu0
        %v3907 = vadd.f32 0.0, %v3906
        %v3908 = vpop.f32.mrb[0].mxu0
        %3909 = vmatprep.mubr.bf16.mxu0 0
        %3910 = vmatmul.mubr.bf16.gmra.mrb[0].mxu0 %v3764
        %v3911 = vpop.f32.mrb[0].mxu0
        %v3912 = vadd.f32 0.0, %v3911
        %v3913 = vpop.f32.mrb[0].mxu0
        %v3914 = vpop.f32.mrb[0].mxu0
        %v3915 = vadd.f32 0.0, %v3914
        %v3916 = vpop.f32.mrb[0].mxu0
        %3917 = vmatprep.mubr.bf16.mxu0 0
        %3918 = vmatmul.mubr.bf16.gmra.mrb[0].mxu0 %v3765
        %v3919 = vpop.f32.mrb[0].mxu0
        %v3920 = vadd.f32 0.0, %v3919
        %v3921 = vpop.f32.mrb[0].mxu0
        %v3922 = vpop.f32.mrb[0].mxu0
        %v3923 = vadd.f32 0.0, %v3922
        %v3924 = vpop.f32.mrb[0].mxu0
        %3925 = vmatprep.mubr.bf16.mxu0 0
        %3926 = vmatmul.mubr.bf16.gmra.mrb[0].mxu0 %v3766
        %v3927 = vpop.f32.mrb[0].mxu0
        %v3928 = vadd.f32 0.0, %v3927
        %v3929 = vpop.f32.mrb[0].mxu0
        %v3930 = vpop.f32.mrb[0].mxu0
        %v3931 = vadd.f32 0.0, %v3930
        %v3932 = vpop.f32.mrb[0].mxu0
        %3933 = vmatprep.mubr.bf16.mxu0 0
        %3934 = vmatmul.mubr.bf16.gmra.mrb[0].mxu0 %v3767
        %v3935 = vpop.f32.mrb[0].mxu0
        %v3936 = vadd.f32 0.0, %v3935
        %v3937 = vpop.f32.mrb[0].mxu0
        %v3938 = vpop.f32.mrb[0].mxu0
        %v3939 = vadd.f32 0.0, %v3938
        %v3940 = vpop.f32.mrb[0].mxu0
        %3941 = vmatprep.mubr.bf16.mxu0 0
        %3942 = vmatmul.mubr.bf16.gmra.mrb[0].mxu0 %v3768
        %v3943 = vpop.f32.mrb[0].mxu0
        %v3944 = vadd.f32 0.0, %v3943
        %v3945 = vpop.f32.mrb[0].mxu0
        %v3946 = vpop.f32.mrb[0].mxu0
        %v3947 = vadd.f32 0.0, %v3946
        %v3948 = vpop.f32.mrb[0].mxu0
        %3949 = vmatprep.mubr.bf16.mxu0 0
        %3950 = vmatmul.mubr.bf16.gmra.mrb[0].mxu0 %v3769
        %v3951 = vpop.f32.mrb[0].mxu0
        %v3952 = vadd.f32 0.0, %v3951
        %v3953 = vpop.f32.mrb[0].mxu0
        %v3954 = vpop.f32.mrb[0].mxu0
        %v3955 = vadd.f32 0.0, %v3954
        %v3956 = vpop.f32.mrb[0].mxu0
        %3957 = vmatprep.mubr.bf16.mxu0 0
        %3958 = vmatmul.mubr.bf16.gmra.mrb[0].mxu0 %v3770
        %v3959 = vpop.f32.mrb[0].mxu0
        %v3960 = vadd.f32 0.0, %v3959
        %v3961 = vpop.f32.mrb[0].mxu0
        %v3962 = vpop.f32.mrb[0].mxu0
        %v3963 = vadd.f32 0.0, %v3962
        %v3964 = vpop.f32.mrb[0].mxu0
        %3965 = vmatprep.mubr.bf16.mxu0 0
        %3966 = vmatmul.mubr.bf16.gmra.mrb[0].mxu0 %v3771
        %v3967 = vpop.f32.mrb[0].mxu0
        %v3968 = vadd.f32 0.0, %v3967
        %v3969 = vpop.f32.mrb[0].mxu0
        %v3970 = vpop.f32.mrb[0].mxu0
        %v3971 = vadd.f32 0.0, %v3970
        %v3972 = vpop.f32.mrb[0].mxu0
        %3973 = vmatprep.mubr.bf16.mxu0 0
        %3974 = vmatmul.mubr.bf16.gmra.mrb[0].mxu0 %v3772
        %v3975 = vpop.f32.mrb[0].mxu0
        %v3976 = vadd.f32 0.0, %v3975
        %v3977 = vpop.f32.mrb[0].mxu0
        %v3978 = vpop.f32.mrb[0].mxu0
        %v3979 = vadd.f32 0.0, %v3978
        %v3980 = vpop.f32.mrb[0].mxu0
        %3981 = vmatprep.mubr.bf16.mxu0 0
        %3982 = vmatmul.mubr.bf16.gmra.mrb[0].mxu0 %v3773
        %v3983 = vpop.f32.mrb[0].mxu0
        %v3984 = vadd.f32 0.0, %v3983
        %v3985 = vpop.f32.mrb[0].mxu0
        %v3986 = vpop.f32.mrb[0].mxu0
        %v3987 = vadd.f32 0.0, %v3986
        %v3988 = vpop.f32.mrb[0].mxu0
        %3989 = vmatprep.mubr.bf16.mxu0 0
        %3990 = vmatmul.mubr.bf16.gmra.mrb[0].mxu0 %v3774
        %v3991 = vpop.f32.mrb[0].mxu0
        %v3992 = vadd.f32 0.0, %v3991
        %v3993 = vpop.f32.mrb[0].mxu0
        %v3994 = vpop.f32.mrb[0].mxu0
        %v3995 = vadd.f32 0.0, %v3994
        %v3996 = vpop.f32.mrb[0].mxu0
        %3997 = vmatprep.mubr.bf16.mxu0 0
        %3998 = vmatmul.mubr.bf16.gmra.mrb[0].mxu0 %v3775
        %v3999 = vpop.f32.mrb[0].mxu0
        %v4000 = vadd.f32 0.0, %v3999
        %v4001 = vpop.f32.mrb[0].mxu0
        %v4002 = vpop.f32.mrb[0].mxu0
        %v4003 = vadd.f32 0.0, %v4002
        %v4004 = vpop.f32.mrb[0].mxu0
        %4005 = vmatprep.mubr.bf16.mxu0 0
        %4006 = vmatmul.mubr.bf16.gmra.mrb[0].mxu0 %v3776
        %v4007 = vpop.f32.mrb[0].mxu0
        %v4008 = vadd.f32 0.0, %v4007
        %v4009 = vpop.f32.mrb[0].mxu0
        %v4010 = vpop.f32.mrb[0].mxu0
        %v4011 = vadd.f32 0.0, %v4010
        %v4012 = vpop.f32.mrb[0].mxu0
        %4013 = vmatprep.mubr.bf16.mxu0 0
        %4014 = vmatmul.mubr.bf16.gmra.mrb[0].mxu0 %v3777
        %v4015 = vpop.f32.mrb[0].mxu0
        %v4016 = vadd.f32 0.0, %v4015
        %v4017 = vpop.f32.mrb[0].mxu0
        %v4018 = vpop.f32.mrb[0].mxu0
        %v4019 = vadd.f32 0.0, %v4018
        %v4020 = vpop.f32.mrb[0].mxu0
        %4021 = vmatprep.mubr.bf16.mxu0 0
        %4022 = vmatmul.mubr.bf16.gmra.mrb[0].mxu0 %v3778
        %v4023 = vpop.f32.mrb[0].mxu0
        %v4024 = vadd.f32 0.0, %v4023
        %v4025 = vpop.f32.mrb[0].mxu0
        %v4026 = vpop.f32.mrb[0].mxu0
        %v4027 = vadd.f32 0.0, %v4026
        %v4028 = vpop.f32.mrb[0].mxu0
        %4029 = vmatprep.mubr.bf16.mxu0 0
        %4030 = vmatmul.mubr.bf16.gmra.mrb[0].mxu0 %v3779
        %v4031 = vpop.f32.mrb[0].mxu0
        %v4032 = vadd.f32 0.0, %v4031
        %v4033 = vpop.f32.mrb[0].mxu0
        %v4034 = vpop.f32.mrb[0].mxu0
        %v4035 = vadd.f32 0.0, %v4034
        %v4036 = vpop.f32.mrb[0].mxu0
        %4037 = vmatprep.mubr.bf16.mxu0 0
        %4038 = vmatmul.mubr.bf16.gmra.mrb[0].mxu0 %v3780
        %v4039 = vpop.f32.mrb[0].mxu0
        %v4040 = vadd.f32 0.0, %v4039
        %v4041 = vpop.f32.mrb[0].mxu0
        %v4042 = vpop.f32.mrb[0].mxu0
        %v4043 = vpop.f32.mrb[0].mxu0
        %4044 = vdwg.mxu0
        %v4045 = vadd.f32 %v3678, %v3880
        %v4046 = vadd.f32 %v3679, %v3883
        %v4047 = vadd.f32 %v3680, %v3888
        %v4048 = vadd.f32 %v3681, %v3891
        %v4049 = vadd.f32 %v3682, %v3896
        %v4050 = vadd.f32 %v3683, %v3899
        %v4051 = vadd.f32 %v3684, %v3904
        %v4052 = vadd.f32 %v3685, %v3907
        %v4053 = vadd.f32 %v3686, %v3912
        %v4054 = vadd.f32 %v3687, %v3915
        %v4055 = vadd.f32 %v3688, %v3920
        %v4056 = vadd.f32 %v3689, %v3923
        %v4057 = vadd.f32 %v3690, %v3928
        %v4058 = vadd.f32 %v3691, %v3931
        %v4059 = vadd.f32 %v3692, %v3936
        %v4060 = vadd.f32 %v3693, %v3939
        %v4061 = vadd.f32 %v3694, %v3944
        %v4062 = vadd.f32 %v3695, %v3947
        %v4063 = vadd.f32 %v3696, %v3952
        %v4064 = vadd.f32 %v3697, %v3955
        %v4065 = vadd.f32 %v3698, %v3960
        %v4066 = vadd.f32 %v3699, %v3963
        %v4067 = vadd.f32 %v3700, %v3968
        %v4068 = vadd.f32 %v3701, %v3971
        %v4069 = vadd.f32 %v3702, %v3976
        %v4070 = vadd.f32 %v3703, %v3979
        %v4071 = vadd.f32 %v3704, %v3984
        %v4072 = vadd.f32 %v3705, %v3987
        %v4073 = vadd.f32 %v3706, %v3992
        %v4074 = vadd.f32 %v3707, %v3995
        %v4075 = vadd.f32 %v3708, %v4000
        %v4076 = vadd.f32 %v3709, %v4003
        %v4077 = vadd.f32 %v3710, %v4008
        %v4078 = vadd.f32 %v3711, %v4011
        %v4079 = vadd.f32 %v3712, %v4016
        %v4080 = vadd.f32 %v3713, %v4019
        %v4081 = vadd.f32 %v3714, %v4024
        %v4082 = vadd.f32 %v3715, %v4027
        %v4083 = vadd.f32 %v3716, %v4032
        %v4084 = vadd.f32 %v3717, %v4035
        %v4085 = vadd.f32 %v3718, %v4040
        %v4086 = vld [vmem:[#allocation2 + $0x2b] sm:$0xff]
        %v4087 = vld [vmem:[#allocation2 + $0x33] sm:$0xff]
        %v4088 = vld [vmem:[#allocation2 + $0x3b] sm:$0xff]
        %v4089 = vld [vmem:[#allocation2 + $0x43] sm:$0xff]
        %v4090 = vld [vmem:[#allocation2 + $0x4b] sm:$0xff]
        %v4091 = vld [vmem:[#allocation2 + $0x53] sm:$0xff]
        %v4092 = vld [vmem:[#allocation2 + $0x5b] sm:$0xff]
        %v4093 = vld [vmem:[#allocation2 + $0x63] sm:$0xff]
        %v4094 = vld [vmem:[#allocation2 + $0x6b] sm:$0xff]
        %v4095 = vld [vmem:[#allocation2 + $0x73] sm:$0xff]
        %v4096 = vld [vmem:[#allocation2 + $0x7b] sm:$0xff]
        %v4097 = vld [vmem:[#allocation2 + $0x83] sm:$0xff]
        %v4098 = vld [vmem:[#allocation2 + $0x8b] sm:$0xff]
        %v4099 = vld [vmem:[#allocation2 + $0x93] sm:$0xff]
        %v4100 = vld [vmem:[#allocation2 + $0x9b] sm:$0xff]
        %v4101 = vld [vmem:[#allocation2 + $0xa3] sm:$0xff]
        %v4102 = vld [vmem:[#allocation2 + $0xab] sm:$0xff]
        %v4103 = vld [vmem:[#allocation2 + $0xb3] sm:$0xff]
        %v4104 = vld [vmem:[#allocation2 + $0xbb] sm:$0xff]
        %v4105 = vld [vmem:[#allocation2 + $0xc3] sm:$0xff]
        %v4106 = vld [vmem:[#allocation2 + $0xcb] sm:$0xff]
        %v4107 = vld [vmem:[#allocation2 + $0xd3] sm:$0xff]
        %v4108 = vld [vmem:[#allocation2 + $0xdb] sm:$0xff]
        %v4109 = vld [vmem:[#allocation2 + $0xe3] sm:$0xff]
        %v4110 = vld [vmem:[#allocation2 + $0xeb] sm:$0xff]
        %v4111 = vld [vmem:[#allocation2 + $0xf3] sm:$0xff]
        %v4112 = vld [vmem:[#allocation2 + $0xfb] sm:$0xff]
        %v4113 = vld [vmem:[#allocation2 + $0x103] sm:$0xff]
        %v4114 = vld [vmem:[#allocation2 + $0x10b] sm:$0xff]
        %v4115 = vld [vmem:[#allocation2 + $0x113] sm:$0xff]
        %v4116 = vld [vmem:[#allocation2 + $0x11b] sm:$0xff]
        %v4117 = vld [vmem:[#allocation2 + $0x123] sm:$0xff]
        %v4118 = vld [vmem:[#allocation2 + $0x12b] sm:$0xff]
        %v4119 = vld [vmem:[#allocation2 + $0x133] sm:$0xff]
        %v4120 = vld [vmem:[#allocation2 + $0x13b] sm:$0xff]
        %v4121 = vld [vmem:[#allocation2 + $0x143] sm:$0xff]
        %v4122 = vld [vmem:[#allocation2 + $0x14b] sm:$0xff]
        %v4123 = vld [vmem:[#allocation2 + $0x153] sm:$0xff]
        %v4124 = vld [vmem:[#allocation2 + $0x15b] sm:$0xff]
        %v4125 = vld [vmem:[#allocation2 + $0x163] sm:$0xff]
        %v4126 = vld [vmem:[#allocation2 + $0x16b] sm:$0xff]
        %v4127 = vpack.c.bf16 %v4087, %v4086
        %v4128 = vpack.c.bf16 %v4089, %v4088
        %v4129 = vpack.c.bf16 %v4091, %v4090
        %v4130 = vpack.c.bf16 %v4093, %v4092
        %v4131 = vpack.c.bf16 %v4095, %v4094
        %v4132 = vpack.c.bf16 %v4097, %v4096
        %v4133 = vpack.c.bf16 %v4099, %v4098
        %v4134 = vpack.c.bf16 %v4101, %v4100
        %v4135 = vpack.c.bf16 %v4103, %v4102
        %v4136 = vpack.c.bf16 %v4105, %v4104
        %v4137 = vpack.c.bf16 %v4107, %v4106
        %v4138 = vpack.c.bf16 %v4109, %v4108
        %v4139 = vpack.c.bf16 %v4111, %v4110
        %v4140 = vpack.c.bf16 %v4113, %v4112
        %v4141 = vpack.c.bf16 %v4115, %v4114
        %v4142 = vpack.c.bf16 %v4117, %v4116
        %v4143 = vpack.c.bf16 %v4119, %v4118
        %v4144 = vpack.c.bf16 %v4121, %v4120
        %v4145 = vpack.c.bf16 %v4123, %v4122
        %v4146 = vpack.c.bf16 %v4125, %v4124
        %v4147 = vpack.c.bf16 %v4126, %v4126
        %v4148 = vld [vmem:[#allocation11 + $0x200] sm:$0xf]
        %v4149 = vld [vmem:[#allocation11 + $0x204] sm:$0xf]
        %v4150 = vld [vmem:[#allocation11 + $0x208] sm:$0xf]
        %v4151 = vld [vmem:[#allocation11 + $0x20c] sm:$0xf]
        %v4152 = vld [vmem:[#allocation11 + $0x210] sm:$0xf]
        %v4153 = vld [vmem:[#allocation11 + $0x214] sm:$0xf]
        %v4154 = vld [vmem:[#allocation11 + $0x218] sm:$0xf]
        %v4155 = vld [vmem:[#allocation11 + $0x21c] sm:$0xf]
        %v4156 = vld [vmem:[#allocation11 + $0x220] sm:$0xf]
        %v4157 = vld [vmem:[#allocation11 + $0x224] sm:$0xf]
        %v4158 = vld [vmem:[#allocation11 + $0x228] sm:$0xf]
        %v4159 = vld [vmem:[#allocation11 + $0x22c] sm:$0xf]
        %v4160 = vld [vmem:[#allocation11 + $0x230] sm:$0xf]
        %v4161 = vld [vmem:[#allocation11 + $0x234] sm:$0xf]
        %v4162 = vld [vmem:[#allocation11 + $0x238] sm:$0xf]
        %v4163 = vld [vmem:[#allocation11 + $0x23c] sm:$0xf]
        %v4180 = vunpack.c.l.b16 %v4148
        %v4181 = vunpack.c.l.b16 %v4149
        %v4182 = vunpack.c.l.b16 %v4150
        %v4183 = vunpack.c.l.b16 %v4151
        %v4184 = vunpack.c.l.b16 %v4152
        %v4185 = vunpack.c.l.b16 %v4153
        %v4186 = vunpack.c.l.b16 %v4154
        %v4187 = vunpack.c.l.b16 %v4155
        %v4188 = vunpack.c.l.b16 %v4156
        %v4189 = vunpack.c.l.b16 %v4157
        %v4190 = vunpack.c.l.b16 %v4158
        %v4191 = vunpack.c.l.b16 %v4159
        %v4192 = vunpack.c.l.b16 %v4160
        %v4193 = vunpack.c.l.b16 %v4161
        %v4194 = vunpack.c.l.b16 %v4162
        %v4195 = vunpack.c.l.b16 %v4163
        %v4196 = vpack.c.b16 %v4181, %v4180
        %v4197 = vpack.c.b16 %v4183, %v4182
        %v4198 = vpack.c.b16 %v4185, %v4184
        %v4199 = vpack.c.b16 %v4187, %v4186
        %v4200 = vpack.c.b16 %v4189, %v4188
        %v4201 = vpack.c.b16 %v4191, %v4190
        %v4202 = vpack.c.b16 %v4193, %v4192
        %v4203 = vpack.c.b16 %v4195, %v4194
        %4212 = vmatprep.subr.bf16.mxu0 0
        %4213 = vmatpush1.bf16.msra.mxu0 %v4196
        %4214 = vmatprep.subr.bf16.mxu0 0
        %4215 = vmatpush1.bf16.msra.mxu0 %v4197
        %4216 = vmatprep.subr.bf16.mxu0 0
        %4217 = vmatpush1.bf16.msra.mxu0 %v4198
        %4218 = vmatprep.subr.bf16.mxu0 0
        %4219 = vmatpush1.bf16.msra.mxu0 %v4199
        %4220 = vmatprep.subr.bf16.mxu0 0
        %4221 = vmatpush1.bf16.msra.mxu0 %v4200
        %4222 = vmatprep.subr.bf16.mxu0 0
        %4223 = vmatpush1.bf16.msra.mxu0 %v4201
        %4224 = vmatprep.subr.bf16.mxu0 0
        %4225 = vmatpush1.bf16.msra.mxu0 %v4202
        %4226 = vmatprep.subr.bf16.mxu0 0
        %4227 = vmatpush1.bf16.msra.mxu0 %v4203
        %4228 = vmatprep.subr.bf16.mxu0 0
        %4229 = vmatpush1.bf16.msra.mxu0 0
        %4230 = vmatprep.subr.bf16.mxu0 0
        %4231 = vmatpush1.bf16.msra.mxu0 0
        %4232 = vmatprep.subr.bf16.mxu0 0
        %4233 = vmatpush1.bf16.msra.mxu0 0
        %4234 = vmatprep.subr.bf16.mxu0 0
        %4235 = vmatpush1.bf16.msra.mxu0 0
        %4236 = vmatprep.subr.bf16.mxu0 0
        %4237 = vmatpush1.bf16.msra.mxu0 0
        %4238 = vmatprep.subr.bf16.mxu0 0
        %4239 = vmatpush1.bf16.msra.mxu0 0
        %4240 = vmatprep.subr.bf16.mxu0 0
        %4241 = vmatpush1.bf16.msra.mxu0 0
        %4242 = vmatprep.subr.bf16.mxu0 0
        %4243 = vmatpush1.bf16.msra.mxu0 0
        %4244 = vmatprep.mubr.bf16.mxu0 0
        %4245 = vmatmul.mubr.bf16.gmra.mrb[0].mxu0 %v4127
        %v4246 = vpop.f32.mrb[0].mxu0
        %v4247 = vadd.f32 0.0, %v4246
        %v4248 = vpop.f32.mrb[0].mxu0
        %v4249 = vpop.f32.mrb[0].mxu0
        %v4250 = vadd.f32 0.0, %v4249
        %v4251 = vpop.f32.mrb[0].mxu0
        %4252 = vmatprep.mubr.bf16.mxu0 0
        %4253 = vmatmul.mubr.bf16.gmra.mrb[0].mxu0 %v4128
        %v4254 = vpop.f32.mrb[0].mxu0
        %v4255 = vadd.f32 0.0, %v4254
        %v4256 = vpop.f32.mrb[0].mxu0
        %v4257 = vpop.f32.mrb[0].mxu0
        %v4258 = vadd.f32 0.0, %v4257
        %v4259 = vpop.f32.mrb[0].mxu0
        %4260 = vmatprep.mubr.bf16.mxu0 0
        %4261 = vmatmul.mubr.bf16.gmra.mrb[0].mxu0 %v4129
        %v4262 = vpop.f32.mrb[0].mxu0
        %v4263 = vadd.f32 0.0, %v4262
        %v4264 = vpop.f32.mrb[0].mxu0
        %v4265 = vpop.f32.mrb[0].mxu0
        %v4266 = vadd.f32 0.0, %v4265
        %v4267 = vpop.f32.mrb[0].mxu0
        %4268 = vmatprep.mubr.bf16.mxu0 0
        %4269 = vmatmul.mubr.bf16.gmra.mrb[0].mxu0 %v4130
        %v4270 = vpop.f32.mrb[0].mxu0
        %v4271 = vadd.f32 0.0, %v4270
        %v4272 = vpop.f32.mrb[0].mxu0
        %v4273 = vpop.f32.mrb[0].mxu0
        %v4274 = vadd.f32 0.0, %v4273
        %v4275 = vpop.f32.mrb[0].mxu0
        %4276 = vmatprep.mubr.bf16.mxu0 0
        %4277 = vmatmul.mubr.bf16.gmra.mrb[0].mxu0 %v4131
        %v4278 = vpop.f32.mrb[0].mxu0
        %v4279 = vadd.f32 0.0, %v4278
        %v4280 = vpop.f32.mrb[0].mxu0
        %v4281 = vpop.f32.mrb[0].mxu0
        %v4282 = vadd.f32 0.0, %v4281
        %v4283 = vpop.f32.mrb[0].mxu0
        %4284 = vmatprep.mubr.bf16.mxu0 0
        %4285 = vmatmul.mubr.bf16.gmra.mrb[0].mxu0 %v4132
        %v4286 = vpop.f32.mrb[0].mxu0
        %v4287 = vadd.f32 0.0, %v4286
        %v4288 = vpop.f32.mrb[0].mxu0
        %v4289 = vpop.f32.mrb[0].mxu0
        %v4290 = vadd.f32 0.0, %v4289
        %v4291 = vpop.f32.mrb[0].mxu0
        %4292 = vmatprep.mubr.bf16.mxu0 0
        %4293 = vmatmul.mubr.bf16.gmra.mrb[0].mxu0 %v4133
        %v4294 = vpop.f32.mrb[0].mxu0
        %v4295 = vadd.f32 0.0, %v4294
        %v4296 = vpop.f32.mrb[0].mxu0
        %v4297 = vpop.f32.mrb[0].mxu0
        %v4298 = vadd.f32 0.0, %v4297
        %v4299 = vpop.f32.mrb[0].mxu0
        %4300 = vmatprep.mubr.bf16.mxu0 0
        %4301 = vmatmul.mubr.bf16.gmra.mrb[0].mxu0 %v4134
        %v4302 = vpop.f32.mrb[0].mxu0
        %v4303 = vadd.f32 0.0, %v4302
        %v4304 = vpop.f32.mrb[0].mxu0
        %v4305 = vpop.f32.mrb[0].mxu0
        %v4306 = vadd.f32 0.0, %v4305
        %v4307 = vpop.f32.mrb[0].mxu0
        %4308 = vmatprep.mubr.bf16.mxu0 0
        %4309 = vmatmul.mubr.bf16.gmra.mrb[0].mxu0 %v4135
        %v4310 = vpop.f32.mrb[0].mxu0
        %v4311 = vadd.f32 0.0, %v4310
        %v4312 = vpop.f32.mrb[0].mxu0
        %v4313 = vpop.f32.mrb[0].mxu0
        %v4314 = vadd.f32 0.0, %v4313
        %v4315 = vpop.f32.mrb[0].mxu0
        %4316 = vmatprep.mubr.bf16.mxu0 0
        %4317 = vmatmul.mubr.bf16.gmra.mrb[0].mxu0 %v4136
        %v4318 = vpop.f32.mrb[0].mxu0
        %v4319 = vadd.f32 0.0, %v4318
        %v4320 = vpop.f32.mrb[0].mxu0
        %v4321 = vpop.f32.mrb[0].mxu0
        %v4322 = vadd.f32 0.0, %v4321
        %v4323 = vpop.f32.mrb[0].mxu0
        %4324 = vmatprep.mubr.bf16.mxu0 0
        %4325 = vmatmul.mubr.bf16.gmra.mrb[0].mxu0 %v4137
        %v4326 = vpop.f32.mrb[0].mxu0
        %v4327 = vadd.f32 0.0, %v4326
        %v4328 = vpop.f32.mrb[0].mxu0
        %v4329 = vpop.f32.mrb[0].mxu0
        %v4330 = vadd.f32 0.0, %v4329
        %v4331 = vpop.f32.mrb[0].mxu0
        %4332 = vmatprep.mubr.bf16.mxu0 0
        %4333 = vmatmul.mubr.bf16.gmra.mrb[0].mxu0 %v4138
        %v4334 = vpop.f32.mrb[0].mxu0
        %v4335 = vadd.f32 0.0, %v4334
        %v4336 = vpop.f32.mrb[0].mxu0
        %v4337 = vpop.f32.mrb[0].mxu0
        %v4338 = vadd.f32 0.0, %v4337
        %v4339 = vpop.f32.mrb[0].mxu0
        %4340 = vmatprep.mubr.bf16.mxu0 0
        %4341 = vmatmul.mubr.bf16.gmra.mrb[0].mxu0 %v4139
        %v4342 = vpop.f32.mrb[0].mxu0
        %v4343 = vadd.f32 0.0, %v4342
        %v4344 = vpop.f32.mrb[0].mxu0
        %v4345 = vpop.f32.mrb[0].mxu0
        %v4346 = vadd.f32 0.0, %v4345
        %v4347 = vpop.f32.mrb[0].mxu0
        %4348 = vmatprep.mubr.bf16.mxu0 0
        %4349 = vmatmul.mubr.bf16.gmra.mrb[0].mxu0 %v4140
        %v4350 = vpop.f32.mrb[0].mxu0
        %v4351 = vadd.f32 0.0, %v4350
        %v4352 = vpop.f32.mrb[0].mxu0
        %v4353 = vpop.f32.mrb[0].mxu0
        %v4354 = vadd.f32 0.0, %v4353
        %v4355 = vpop.f32.mrb[0].mxu0
        %4356 = vmatprep.mubr.bf16.mxu0 0
        %4357 = vmatmul.mubr.bf16.gmra.mrb[0].mxu0 %v4141
        %v4358 = vpop.f32.mrb[0].mxu0
        %v4359 = vadd.f32 0.0, %v4358
        %v4360 = vpop.f32.mrb[0].mxu0
        %v4361 = vpop.f32.mrb[0].mxu0
        %v4362 = vadd.f32 0.0, %v4361
        %v4363 = vpop.f32.mrb[0].mxu0
        %4364 = vmatprep.mubr.bf16.mxu0 0
        %4365 = vmatmul.mubr.bf16.gmra.mrb[0].mxu0 %v4142
        %v4366 = vpop.f32.mrb[0].mxu0
        %v4367 = vadd.f32 0.0, %v4366
        %v4368 = vpop.f32.mrb[0].mxu0
        %v4369 = vpop.f32.mrb[0].mxu0
        %v4370 = vadd.f32 0.0, %v4369
        %v4371 = vpop.f32.mrb[0].mxu0
        %4372 = vmatprep.mubr.bf16.mxu0 0
        %4373 = vmatmul.mubr.bf16.gmra.mrb[0].mxu0 %v4143
        %v4374 = vpop.f32.mrb[0].mxu0
        %v4375 = vadd.f32 0.0, %v4374
        %v4376 = vpop.f32.mrb[0].mxu0
        %v4377 = vpop.f32.mrb[0].mxu0
        %v4378 = vadd.f32 0.0, %v4377
        %v4379 = vpop.f32.mrb[0].mxu0
        %4380 = vmatprep.mubr.bf16.mxu0 0
        %4381 = vmatmul.mubr.bf16.gmra.mrb[0].mxu0 %v4144
        %v4382 = vpop.f32.mrb[0].mxu0
        %v4383 = vadd.f32 0.0, %v4382
        %v4384 = vpop.f32.mrb[0].mxu0
        %v4385 = vpop.f32.mrb[0].mxu0
        %v4386 = vadd.f32 0.0, %v4385
        %v4387 = vpop.f32.mrb[0].mxu0
        %4388 = vmatprep.mubr.bf16.mxu0 0
        %4389 = vmatmul.mubr.bf16.gmra.mrb[0].mxu0 %v4145
        %v4390 = vpop.f32.mrb[0].mxu0
        %v4391 = vadd.f32 0.0, %v4390
        %v4392 = vpop.f32.mrb[0].mxu0
        %v4393 = vpop.f32.mrb[0].mxu0
        %v4394 = vadd.f32 0.0, %v4393
        %v4395 = vpop.f32.mrb[0].mxu0
        %4396 = vmatprep.mubr.bf16.mxu0 0
        %4397 = vmatmul.mubr.bf16.gmra.mrb[0].mxu0 %v4146
        %v4398 = vpop.f32.mrb[0].mxu0
        %v4399 = vadd.f32 0.0, %v4398
        %v4400 = vpop.f32.mrb[0].mxu0
        %v4401 = vpop.f32.mrb[0].mxu0
        %v4402 = vadd.f32 0.0, %v4401
        %v4403 = vpop.f32.mrb[0].mxu0
        %4404 = vmatprep.mubr.bf16.mxu0 0
        %4405 = vmatmul.mubr.bf16.gmra.mrb[0].mxu0 %v4147
        %v4406 = vpop.f32.mrb[0].mxu0
        %v4407 = vadd.f32 0.0, %v4406
        %v4408 = vpop.f32.mrb[0].mxu0
        %v4409 = vpop.f32.mrb[0].mxu0
        %v4410 = vpop.f32.mrb[0].mxu0
        %4411 = vdwg.mxu0
        %v4412 = vadd.f32 %v4045, %v4247
        %v4413 = vadd.f32 %v4046, %v4250
        %v4414 = vadd.f32 %v4047, %v4255
        %v4415 = vadd.f32 %v4048, %v4258
        %v4416 = vadd.f32 %v4049, %v4263
        %v4417 = vadd.f32 %v4050, %v4266
        %v4418 = vadd.f32 %v4051, %v4271
        %v4419 = vadd.f32 %v4052, %v4274
        %v4420 = vadd.f32 %v4053, %v4279
        %v4421 = vadd.f32 %v4054, %v4282
        %v4422 = vadd.f32 %v4055, %v4287
        %v4423 = vadd.f32 %v4056, %v4290
        %v4424 = vadd.f32 %v4057, %v4295
        %v4425 = vadd.f32 %v4058, %v4298
        %v4426 = vadd.f32 %v4059, %v4303
        %v4427 = vadd.f32 %v4060, %v4306
        %v4428 = vadd.f32 %v4061, %v4311
        %v4429 = vadd.f32 %v4062, %v4314
        %v4430 = vadd.f32 %v4063, %v4319
        %v4431 = vadd.f32 %v4064, %v4322
        %v4432 = vadd.f32 %v4065, %v4327
        %v4433 = vadd.f32 %v4066, %v4330
        %v4434 = vadd.f32 %v4067, %v4335
        %v4435 = vadd.f32 %v4068, %v4338
        %v4436 = vadd.f32 %v4069, %v4343
        %v4437 = vadd.f32 %v4070, %v4346
        %v4438 = vadd.f32 %v4071, %v4351
        %v4439 = vadd.f32 %v4072, %v4354
        %v4440 = vadd.f32 %v4073, %v4359
        %v4441 = vadd.f32 %v4074, %v4362
        %v4442 = vadd.f32 %v4075, %v4367
        %v4443 = vadd.f32 %v4076, %v4370
        %v4444 = vadd.f32 %v4077, %v4375
        %v4445 = vadd.f32 %v4078, %v4378
        %v4446 = vadd.f32 %v4079, %v4383
        %v4447 = vadd.f32 %v4080, %v4386
        %v4448 = vadd.f32 %v4081, %v4391
        %v4449 = vadd.f32 %v4082, %v4394
        %v4450 = vadd.f32 %v4083, %v4399
        %v4451 = vadd.f32 %v4084, %v4402
        %v4452 = vadd.f32 %v4085, %v4407
        %v4453 = vld [vmem:[#allocation12] sm:$0x1]
        %v4455 = vlaneseq
        %v4456 = vshrl.u32 %v4455, 7
        %v4457 = vsub.s32 0, %v4456
        %v4458 = vrot.slane %v4453, %v4457
        %v4460 = vadd.f32 %v4412, %v4458
        %v4461 = vadd.f32 %v4413, %v4458
        %v4462 = vadd.f32 %v4414, %v4458
        %v4463 = vadd.f32 %v4415, %v4458
        %v4464 = vadd.f32 %v4416, %v4458
        %v4465 = vadd.f32 %v4417, %v4458
        %v4466 = vadd.f32 %v4418, %v4458
        %v4467 = vadd.f32 %v4419, %v4458
        %v4468 = vadd.f32 %v4420, %v4458
        %v4469 = vadd.f32 %v4421, %v4458
        %v4470 = vadd.f32 %v4422, %v4458
        %v4471 = vadd.f32 %v4423, %v4458
        %v4472 = vadd.f32 %v4424, %v4458
        %v4473 = vadd.f32 %v4425, %v4458
        %v4474 = vadd.f32 %v4426, %v4458
        %v4475 = vadd.f32 %v4427, %v4458
        %v4476 = vadd.f32 %v4428, %v4458
        %v4477 = vadd.f32 %v4429, %v4458
        %v4478 = vadd.f32 %v4430, %v4458
        %v4479 = vadd.f32 %v4431, %v4458
        %v4480 = vadd.f32 %v4432, %v4458
        %v4481 = vadd.f32 %v4433, %v4458
        %v4482 = vadd.f32 %v4434, %v4458
        %v4483 = vadd.f32 %v4435, %v4458
        %v4484 = vadd.f32 %v4436, %v4458
        %v4485 = vadd.f32 %v4437, %v4458
        %v4486 = vadd.f32 %v4438, %v4458
        %v4487 = vadd.f32 %v4439, %v4458
        %v4488 = vadd.f32 %v4440, %v4458
        %v4489 = vadd.f32 %v4441, %v4458
        %v4490 = vadd.f32 %v4442, %v4458
        %v4491 = vadd.f32 %v4443, %v4458
        %v4492 = vadd.f32 %v4444, %v4458
        %v4493 = vadd.f32 %v4445, %v4458
        %v4494 = vadd.f32 %v4446, %v4458
        %v4495 = vadd.f32 %v4447, %v4458
        %v4496 = vadd.f32 %v4448, %v4458
        %v4497 = vadd.f32 %v4449, %v4458
        %v4498 = vadd.f32 %v4450, %v4458
        %v4499 = vadd.f32 %v4451, %v4458
        %v4500 = vadd.f32 %v4452, %v4458
        %v4501 = vmax.f32 %v4460, 0.0
        %v4502 = vmax.f32 %v4461, 0.0
        %v4503 = vmax.f32 %v4462, 0.0
        %v4504 = vmax.f32 %v4463, 0.0
        %v4505 = vmax.f32 %v4464, 0.0
        %v4506 = vmax.f32 %v4465, 0.0
        %v4507 = vmax.f32 %v4466, 0.0
        %v4508 = vmax.f32 %v4467, 0.0
        %v4509 = vmax.f32 %v4468, 0.0
        %v4510 = vmax.f32 %v4469, 0.0
        %v4511 = vmax.f32 %v4470, 0.0
        %v4512 = vmax.f32 %v4471, 0.0
        %v4513 = vmax.f32 %v4472, 0.0
        %v4514 = vmax.f32 %v4473, 0.0
        %v4515 = vmax.f32 %v4474, 0.0
        %v4516 = vmax.f32 %v4475, 0.0
        %v4517 = vmax.f32 %v4476, 0.0
        %v4518 = vmax.f32 %v4477, 0.0
        %v4519 = vmax.f32 %v4478, 0.0
        %v4520 = vmax.f32 %v4479, 0.0
        %v4521 = vmax.f32 %v4480, 0.0
        %v4522 = vmax.f32 %v4481, 0.0
        %v4523 = vmax.f32 %v4482, 0.0
        %v4524 = vmax.f32 %v4483, 0.0
        %v4525 = vmax.f32 %v4484, 0.0
        %v4526 = vmax.f32 %v4485, 0.0
        %v4527 = vmax.f32 %v4486, 0.0
        %v4528 = vmax.f32 %v4487, 0.0
        %v4529 = vmax.f32 %v4488, 0.0
        %v4530 = vmax.f32 %v4489, 0.0
        %v4531 = vmax.f32 %v4490, 0.0
        %v4532 = vmax.f32 %v4491, 0.0
        %v4533 = vmax.f32 %v4492, 0.0
        %v4534 = vmax.f32 %v4493, 0.0
        %v4535 = vmax.f32 %v4494, 0.0
        %v4536 = vmax.f32 %v4495, 0.0
        %v4537 = vmax.f32 %v4496, 0.0
        %v4538 = vmax.f32 %v4497, 0.0
        %v4539 = vmax.f32 %v4498, 0.0
        %v4540 = vmax.f32 %v4499, 0.0
        %v4541 = vmax.f32 %v4500, 0.0
        %v4542 = vpack.c.bf16 %v4502, %v4501
        %v4543 = vpack.c.bf16 %v4504, %v4503
        %v4544 = vpack.c.bf16 %v4506, %v4505
        %v4545 = vpack.c.bf16 %v4508, %v4507
        %v4546 = vpack.c.bf16 %v4510, %v4509
        %v4547 = vpack.c.bf16 %v4512, %v4511
        %v4548 = vpack.c.bf16 %v4514, %v4513
        %v4549 = vpack.c.bf16 %v4516, %v4515
        %v4550 = vpack.c.bf16 %v4518, %v4517
        %v4551 = vpack.c.bf16 %v4520, %v4519
        %v4552 = vpack.c.bf16 %v4522, %v4521
        %v4553 = vpack.c.bf16 %v4524, %v4523
        %v4554 = vpack.c.bf16 %v4526, %v4525
        %v4555 = vpack.c.bf16 %v4528, %v4527
        %v4556 = vpack.c.bf16 %v4530, %v4529
        %v4557 = vpack.c.bf16 %v4532, %v4531
        %v4558 = vpack.c.bf16 %v4534, %v4533
        %v4559 = vpack.c.bf16 %v4536, %v4535
        %v4560 = vpack.c.bf16 %v4538, %v4537
        %v4561 = vpack.c.bf16 %v4540, %v4539
        %v4562 = vpack.c.bf16 %v4541, %v4541
        %v4563 = vld [vmem:[#allocation14] sm:$0xf]
        %v4564 = vld [vmem:[#allocation14 + $0x4] sm:$0xf]
        %v4565 = vld [vmem:[#allocation14 + $0x8] sm:$0xf]
        %v4566 = vld [vmem:[#allocation14 + $0xc] sm:$0xf]
        %v4567 = vld [vmem:[#allocation14 + $0x10] sm:$0xf]
        %v4568 = vld [vmem:[#allocation14 + $0x14] sm:$0xf]
        %v4569 = vld [vmem:[#allocation14 + $0x18] sm:$0xf]
        %v4570 = vld [vmem:[#allocation14 + $0x1c] sm:$0xf]
        %v4571 = vld [vmem:[#allocation14 + $0x20] sm:$0xf]
        %v4572 = vld [vmem:[#allocation14 + $0x24] sm:$0xf]
        %v4573 = vld [vmem:[#allocation14 + $0x28] sm:$0xf]
        %v4574 = vld [vmem:[#allocation14 + $0x2c] sm:$0xf]
        %v4575 = vld [vmem:[#allocation14 + $0x30] sm:$0xf]
        %v4576 = vld [vmem:[#allocation14 + $0x34] sm:$0xf]
        %v4577 = vld [vmem:[#allocation14 + $0x38] sm:$0xf]
        %v4578 = vld [vmem:[#allocation14 + $0x3c] sm:$0xf]
        %v4579 = vld [vmem:[#allocation15] sm:$0x1]
        %v4581 = vlaneseq
        %v4582 = vshrl.u32 %v4581, 7
        %v4583 = vsub.s32 0, %v4582
        %v4584 = vrot.slane %v4579, %v4583
        %v4602 = vunpack.c.l.b16 %v4563
        %v4603 = vunpack.c.l.b16 %v4564
        %v4604 = vunpack.c.l.b16 %v4565
        %v4605 = vunpack.c.l.b16 %v4566
        %v4606 = vunpack.c.l.b16 %v4567
        %v4607 = vunpack.c.l.b16 %v4568
        %v4608 = vunpack.c.l.b16 %v4569
        %v4609 = vunpack.c.l.b16 %v4570
        %v4610 = vunpack.c.l.b16 %v4571
        %v4611 = vunpack.c.l.b16 %v4572
        %v4612 = vunpack.c.l.b16 %v4573
        %v4613 = vunpack.c.l.b16 %v4574
        %v4614 = vunpack.c.l.b16 %v4575
        %v4615 = vunpack.c.l.b16 %v4576
        %v4616 = vunpack.c.l.b16 %v4577
        %v4617 = vunpack.c.l.b16 %v4578
        %v4618 = vpack.c.b16 %v4603, %v4602
        %v4619 = vpack.c.b16 %v4605, %v4604
        %v4620 = vpack.c.b16 %v4607, %v4606
        %v4621 = vpack.c.b16 %v4609, %v4608
        %v4622 = vpack.c.b16 %v4611, %v4610
        %v4623 = vpack.c.b16 %v4613, %v4612
        %v4624 = vpack.c.b16 %v4615, %v4614
        %v4625 = vpack.c.b16 %v4617, %v4616
        %4634 = vmatprep.subr.bf16.mxu0 0
        %4635 = vmatpush1.bf16.msra.mxu0 %v4618
        %4636 = vmatprep.subr.bf16.mxu0 0
        %4637 = vmatpush1.bf16.msra.mxu0 %v4619
        %4638 = vmatprep.subr.bf16.mxu0 0
        %4639 = vmatpush1.bf16.msra.mxu0 %v4620
        %4640 = vmatprep.subr.bf16.mxu0 0
        %4641 = vmatpush1.bf16.msra.mxu0 %v4621
        %4642 = vmatprep.subr.bf16.mxu0 0
        %4643 = vmatpush1.bf16.msra.mxu0 %v4622
        %4644 = vmatprep.subr.bf16.mxu0 0
        %4645 = vmatpush1.bf16.msra.mxu0 %v4623
        %4646 = vmatprep.subr.bf16.mxu0 0
        %4647 = vmatpush1.bf16.msra.mxu0 %v4624
        %4648 = vmatprep.subr.bf16.mxu0 0
        %4649 = vmatpush1.bf16.msra.mxu0 %v4625
        %4650 = vmatprep.subr.bf16.mxu0 0
        %4651 = vmatpush1.bf16.msra.mxu0 0
        %4652 = vmatprep.subr.bf16.mxu0 0
        %4653 = vmatpush1.bf16.msra.mxu0 0
        %4654 = vmatprep.subr.bf16.mxu0 0
        %4655 = vmatpush1.bf16.msra.mxu0 0
        %4656 = vmatprep.subr.bf16.mxu0 0
        %4657 = vmatpush1.bf16.msra.mxu0 0
        %4658 = vmatprep.subr.bf16.mxu0 0
        %4659 = vmatpush1.bf16.msra.mxu0 0
        %4660 = vmatprep.subr.bf16.mxu0 0
        %4661 = vmatpush1.bf16.msra.mxu0 0
        %4662 = vmatprep.subr.bf16.mxu0 0
        %4663 = vmatpush1.bf16.msra.mxu0 0
        %4664 = vmatprep.subr.bf16.mxu0 0
        %4665 = vmatpush1.bf16.msra.mxu0 0
        %4666 = vmatprep.mubr.bf16.mxu0 0
        %4667 = vmatmul.mubr.bf16.gmra.mrb[0].mxu0 %v4542
        %v4668 = vpop.f32.mrb[0].mxu0
        %v4669 = vadd.f32 %v4584, %v4668
        %v4670 = vpop.f32.mrb[0].mxu0
        %v4671 = vpop.f32.mrb[0].mxu0
        %v4672 = vadd.f32 %v4584, %v4671
        %v4673 = vpop.f32.mrb[0].mxu0
        %4674 = vmatprep.mubr.bf16.mxu0 0
        %4675 = vmatmul.mubr.bf16.gmra.mrb[0].mxu0 %v4543
        %v4676 = vpop.f32.mrb[0].mxu0
        %v4677 = vadd.f32 %v4584, %v4676
        %v4678 = vpop.f32.mrb[0].mxu0
        %v4679 = vpop.f32.mrb[0].mxu0
        %v4680 = vadd.f32 %v4584, %v4679
        %v4681 = vpop.f32.mrb[0].mxu0
        %4682 = vmatprep.mubr.bf16.mxu0 0
        %4683 = vmatmul.mubr.bf16.gmra.mrb[0].mxu0 %v4544
        %v4684 = vpop.f32.mrb[0].mxu0
        %v4685 = vadd.f32 %v4584, %v4684
        %v4686 = vpop.f32.mrb[0].mxu0
        %v4687 = vpop.f32.mrb[0].mxu0
        %v4688 = vadd.f32 %v4584, %v4687
        %v4689 = vpop.f32.mrb[0].mxu0
        %4690 = vmatprep.mubr.bf16.mxu0 0
        %4691 = vmatmul.mubr.bf16.gmra.mrb[0].mxu0 %v4545
        %v4692 = vpop.f32.mrb[0].mxu0
        %v4693 = vadd.f32 %v4584, %v4692
        %v4694 = vpop.f32.mrb[0].mxu0
        %v4695 = vpop.f32.mrb[0].mxu0
        %v4696 = vadd.f32 %v4584, %v4695
        %v4697 = vpop.f32.mrb[0].mxu0
        %4698 = vmatprep.mubr.bf16.mxu0 0
        %4699 = vmatmul.mubr.bf16.gmra.mrb[0].mxu0 %v4546
        %v4700 = vpop.f32.mrb[0].mxu0
        %v4701 = vadd.f32 %v4584, %v4700
        %v4702 = vpop.f32.mrb[0].mxu0
        %v4703 = vpop.f32.mrb[0].mxu0
        %v4704 = vadd.f32 %v4584, %v4703
        %v4705 = vpop.f32.mrb[0].mxu0
        %4706 = vmatprep.mubr.bf16.mxu0 0
        %4707 = vmatmul.mubr.bf16.gmra.mrb[0].mxu0 %v4547
        %v4708 = vpop.f32.mrb[0].mxu0
        %v4709 = vadd.f32 %v4584, %v4708
        %v4710 = vpop.f32.mrb[0].mxu0
        %v4711 = vpop.f32.mrb[0].mxu0
        %v4712 = vadd.f32 %v4584, %v4711
        %v4713 = vpop.f32.mrb[0].mxu0
        %4714 = vmatprep.mubr.bf16.mxu0 0
        %4715 = vmatmul.mubr.bf16.gmra.mrb[0].mxu0 %v4548
        %v4716 = vpop.f32.mrb[0].mxu0
        %v4717 = vadd.f32 %v4584, %v4716
        %v4718 = vpop.f32.mrb[0].mxu0
        %v4719 = vpop.f32.mrb[0].mxu0
        %v4720 = vadd.f32 %v4584, %v4719
        %v4721 = vpop.f32.mrb[0].mxu0
        %4722 = vmatprep.mubr.bf16.mxu0 0
        %4723 = vmatmul.mubr.bf16.gmra.mrb[0].mxu0 %v4549
        %v4724 = vpop.f32.mrb[0].mxu0
        %v4725 = vadd.f32 %v4584, %v4724
        %v4726 = vpop.f32.mrb[0].mxu0
        %v4727 = vpop.f32.mrb[0].mxu0
        %v4728 = vadd.f32 %v4584, %v4727
        %v4729 = vpop.f32.mrb[0].mxu0
        %4730 = vmatprep.mubr.bf16.mxu0 0
        %4731 = vmatmul.mubr.bf16.gmra.mrb[0].mxu0 %v4550
        %v4732 = vpop.f32.mrb[0].mxu0
        %v4733 = vadd.f32 %v4584, %v4732
        %v4734 = vpop.f32.mrb[0].mxu0
        %v4735 = vpop.f32.mrb[0].mxu0
        %v4736 = vadd.f32 %v4584, %v4735
        %v4737 = vpop.f32.mrb[0].mxu0
        %4738 = vmatprep.mubr.bf16.mxu0 0
        %4739 = vmatmul.mubr.bf16.gmra.mrb[0].mxu0 %v4551
        %v4740 = vpop.f32.mrb[0].mxu0
        %v4741 = vadd.f32 %v4584, %v4740
        %v4742 = vpop.f32.mrb[0].mxu0
        %v4743 = vpop.f32.mrb[0].mxu0
        %v4744 = vadd.f32 %v4584, %v4743
        %v4745 = vpop.f32.mrb[0].mxu0
        %4746 = vmatprep.mubr.bf16.mxu0 0
        %4747 = vmatmul.mubr.bf16.gmra.mrb[0].mxu0 %v4552
        %v4748 = vpop.f32.mrb[0].mxu0
        %v4749 = vadd.f32 %v4584, %v4748
        %v4750 = vpop.f32.mrb[0].mxu0
        %v4751 = vpop.f32.mrb[0].mxu0
        %v4752 = vadd.f32 %v4584, %v4751
        %v4753 = vpop.f32.mrb[0].mxu0
        %4754 = vmatprep.mubr.bf16.mxu0 0
        %4755 = vmatmul.mubr.bf16.gmra.mrb[0].mxu0 %v4553
        %v4756 = vpop.f32.mrb[0].mxu0
        %v4757 = vadd.f32 %v4584, %v4756
        %v4758 = vpop.f32.mrb[0].mxu0
        %v4759 = vpop.f32.mrb[0].mxu0
        %v4760 = vadd.f32 %v4584, %v4759
        %v4761 = vpop.f32.mrb[0].mxu0
        %4762 = vmatprep.mubr.bf16.mxu0 0
        %4763 = vmatmul.mubr.bf16.gmra.mrb[0].mxu0 %v4554
        %v4764 = vpop.f32.mrb[0].mxu0
        %v4765 = vadd.f32 %v4584, %v4764
        %v4766 = vpop.f32.mrb[0].mxu0
        %v4767 = vpop.f32.mrb[0].mxu0
        %v4768 = vadd.f32 %v4584, %v4767
        %v4769 = vpop.f32.mrb[0].mxu0
        %4770 = vmatprep.mubr.bf16.mxu0 0
        %4771 = vmatmul.mubr.bf16.gmra.mrb[0].mxu0 %v4555
        %v4772 = vpop.f32.mrb[0].mxu0
        %v4773 = vadd.f32 %v4584, %v4772
        %v4774 = vpop.f32.mrb[0].mxu0
        %v4775 = vpop.f32.mrb[0].mxu0
        %v4776 = vadd.f32 %v4584, %v4775
        %v4777 = vpop.f32.mrb[0].mxu0
        %4778 = vmatprep.mubr.bf16.mxu0 0
        %4779 = vmatmul.mubr.bf16.gmra.mrb[0].mxu0 %v4556
        %v4780 = vpop.f32.mrb[0].mxu0
        %v4781 = vadd.f32 %v4584, %v4780
        %v4782 = vpop.f32.mrb[0].mxu0
        %v4783 = vpop.f32.mrb[0].mxu0
        %v4784 = vadd.f32 %v4584, %v4783
        %v4785 = vpop.f32.mrb[0].mxu0
        %4786 = vmatprep.mubr.bf16.mxu0 0
        %4787 = vmatmul.mubr.bf16.gmra.mrb[0].mxu0 %v4557
        %v4788 = vpop.f32.mrb[0].mxu0
        %v4789 = vadd.f32 %v4584, %v4788
        %v4790 = vpop.f32.mrb[0].mxu0
        %v4791 = vpop.f32.mrb[0].mxu0
        %v4792 = vadd.f32 %v4584, %v4791
        %v4793 = vpop.f32.mrb[0].mxu0
        %4794 = vmatprep.mubr.bf16.mxu0 0
        %4795 = vmatmul.mubr.bf16.gmra.mrb[0].mxu0 %v4558
        %v4796 = vpop.f32.mrb[0].mxu0
        %v4797 = vadd.f32 %v4584, %v4796
        %v4798 = vpop.f32.mrb[0].mxu0
        %v4799 = vpop.f32.mrb[0].mxu0
        %v4800 = vadd.f32 %v4584, %v4799
        %v4801 = vpop.f32.mrb[0].mxu0
        %4802 = vmatprep.mubr.bf16.mxu0 0
        %4803 = vmatmul.mubr.bf16.gmra.mrb[0].mxu0 %v4559
        %v4804 = vpop.f32.mrb[0].mxu0
        %v4805 = vadd.f32 %v4584, %v4804
        %v4806 = vpop.f32.mrb[0].mxu0
        %v4807 = vpop.f32.mrb[0].mxu0
        %v4808 = vadd.f32 %v4584, %v4807
        %v4809 = vpop.f32.mrb[0].mxu0
        %4810 = vmatprep.mubr.bf16.mxu0 0
        %4811 = vmatmul.mubr.bf16.gmra.mrb[0].mxu0 %v4560
        %v4812 = vpop.f32.mrb[0].mxu0
        %v4813 = vadd.f32 %v4584, %v4812
        %v4814 = vpop.f32.mrb[0].mxu0
        %v4815 = vpop.f32.mrb[0].mxu0
        %v4816 = vadd.f32 %v4584, %v4815
        %v4817 = vpop.f32.mrb[0].mxu0
        %4818 = vmatprep.mubr.bf16.mxu0 0
        %4819 = vmatmul.mubr.bf16.gmra.mrb[0].mxu0 %v4561
        %v4820 = vpop.f32.mrb[0].mxu0
        %v4821 = vadd.f32 %v4584, %v4820
        %v4822 = vpop.f32.mrb[0].mxu0
        %v4823 = vpop.f32.mrb[0].mxu0
        %v4824 = vadd.f32 %v4584, %v4823
        %v4825 = vpop.f32.mrb[0].mxu0
        %4826 = vmatprep.mubr.bf16.mxu0 0
        %4827 = vmatmul.mubr.bf16.gmra.mrb[0].mxu0 %v4562
        %v4828 = vpop.f32.mrb[0].mxu0
        %v4829 = vadd.f32 %v4584, %v4828
        %v4830 = vpop.f32.mrb[0].mxu0
        %v4831 = vpop.f32.mrb[0].mxu0
        %v4832 = vpop.f32.mrb[0].mxu0
        %4833 = vdwg.mxu0
        %v4834 = vmax.f32 %v4669, 0.0
        %v4835 = vmax.f32 %v4672, 0.0
        %v4836 = vmax.f32 %v4677, 0.0
        %v4837 = vmax.f32 %v4680, 0.0
        %v4838 = vmax.f32 %v4685, 0.0
        %v4839 = vmax.f32 %v4688, 0.0
        %v4840 = vmax.f32 %v4693, 0.0
        %v4841 = vmax.f32 %v4696, 0.0
        %v4842 = vmax.f32 %v4701, 0.0
        %v4843 = vmax.f32 %v4704, 0.0
        %v4844 = vmax.f32 %v4709, 0.0
        %v4845 = vmax.f32 %v4712, 0.0
        %v4846 = vmax.f32 %v4717, 0.0
        %v4847 = vmax.f32 %v4720, 0.0
        %v4848 = vmax.f32 %v4725, 0.0
        %v4849 = vmax.f32 %v4728, 0.0
        %v4850 = vmax.f32 %v4733, 0.0
        %v4851 = vmax.f32 %v4736, 0.0
        %v4852 = vmax.f32 %v4741, 0.0
        %v4853 = vmax.f32 %v4744, 0.0
        %v4854 = vmax.f32 %v4749, 0.0
        %v4855 = vmax.f32 %v4752, 0.0
        %v4856 = vmax.f32 %v4757, 0.0
        %v4857 = vmax.f32 %v4760, 0.0
        %v4858 = vmax.f32 %v4765, 0.0
        %v4859 = vmax.f32 %v4768, 0.0
        %v4860 = vmax.f32 %v4773, 0.0
        %v4861 = vmax.f32 %v4776, 0.0
        %v4862 = vmax.f32 %v4781, 0.0
        %v4863 = vmax.f32 %v4784, 0.0
        %v4864 = vmax.f32 %v4789, 0.0
        %v4865 = vmax.f32 %v4792, 0.0
        %v4866 = vmax.f32 %v4797, 0.0
        %v4867 = vmax.f32 %v4800, 0.0
        %v4868 = vmax.f32 %v4805, 0.0
        %v4869 = vmax.f32 %v4808, 0.0
        %v4870 = vmax.f32 %v4813, 0.0
        %v4871 = vmax.f32 %v4816, 0.0
        %v4872 = vmax.f32 %v4821, 0.0
        %v4873 = vmax.f32 %v4824, 0.0
        %v4874 = vmax.f32 %v4829, 0.0
        %v4875 = vld [vmem:[%s359] sm:$0xf]
        %v4876 = vld [vmem:[%s359 + $0x4] sm:$0xf]
        %v4877 = vld [vmem:[%s359 + $0x8] sm:$0xf]
        %v4878 = vld [vmem:[%s359 + $0xc] sm:$0xf]
        %v4879 = vld [vmem:[%s359 + $0x10] sm:$0xf]
        %v4880 = vld [vmem:[%s359 + $0x14] sm:$0xf]
        %v4881 = vld [vmem:[%s359 + $0x18] sm:$0xf]
        %v4882 = vld [vmem:[%s359 + $0x1c] sm:$0xf]
        %v4883 = vld [vmem:[%s359 + $0x20] sm:$0xf]
        %v4884 = vld [vmem:[%s359 + $0x24] sm:$0xf]
        %v4885 = vld [vmem:[%s359 + $0x28] sm:$0xf]
        %v4886 = vld [vmem:[%s359 + $0x2c] sm:$0xf]
        %v4887 = vld [vmem:[%s359 + $0x30] sm:$0xf]
        %v4888 = vld [vmem:[%s359 + $0x34] sm:$0xf]
        %v4889 = vld [vmem:[%s359 + $0x38] sm:$0xf]
        %v4890 = vld [vmem:[%s359 + $0x3c] sm:$0xf]
        %v4891 = vld [vmem:[%s359 + $0x40] sm:$0xf]
        %v4892 = vld [vmem:[%s359 + $0x44] sm:$0xf]
        %v4893 = vld [vmem:[%s359 + $0x48] sm:$0xf]
        %v4894 = vld [vmem:[%s359 + $0x4c] sm:$0xf]
        %v4895 = vld [vmem:[%s359 + $0x50] sm:$0xf]
        %v4896 = vld [vmem:[%s359 + $0x54] sm:$0xf]
        %v4897 = vld [vmem:[%s359 + $0x58] sm:$0xf]
        %v4898 = vld [vmem:[%s359 + $0x5c] sm:$0xf]
        %v4899 = vld [vmem:[%s359 + $0x60] sm:$0xf]
        %v4900 = vld [vmem:[%s359 + $0x64] sm:$0xf]
        %v4901 = vld [vmem:[%s359 + $0x68] sm:$0xf]
        %v4902 = vld [vmem:[%s359 + $0x6c] sm:$0xf]
        %v4903 = vld [vmem:[%s359 + $0x70] sm:$0xf]
        %v4904 = vld [vmem:[%s359 + $0x74] sm:$0xf]
        %v4905 = vld [vmem:[%s359 + $0x78] sm:$0xf]
        %v4906 = vld [vmem:[%s359 + $0x7c] sm:$0xf]
        %v4907 = vld [vmem:[%s359 + $0x80] sm:$0xf]
        %v4908 = vld [vmem:[%s359 + $0x84] sm:$0xf]
        %v4909 = vld [vmem:[%s359 + $0x88] sm:$0xf]
        %v4910 = vld [vmem:[%s359 + $0x8c] sm:$0xf]
        %v4911 = vld [vmem:[%s359 + $0x90] sm:$0xf]
        %v4912 = vld [vmem:[%s359 + $0x94] sm:$0xf]
        %v4913 = vld [vmem:[%s359 + $0x98] sm:$0xf]
        %v4914 = vld [vmem:[%s359 + $0x9c] sm:$0xf]
        %v4915 = vld [vmem:[%s359 + $0xa0] sm:$0xf]
        %v4916 = vunpack.c.l.bf16 %v4875
        %v4917 = vunpack.c.l.bf16 %v4876
        %v4918 = vunpack.c.l.bf16 %v4877
        %v4919 = vunpack.c.l.bf16 %v4878
        %v4920 = vunpack.c.l.bf16 %v4879
        %v4921 = vunpack.c.l.bf16 %v4880
        %v4922 = vunpack.c.l.bf16 %v4881
        %v4923 = vunpack.c.l.bf16 %v4882
        %v4924 = vunpack.c.l.bf16 %v4883
        %v4925 = vunpack.c.l.bf16 %v4884
        %v4926 = vunpack.c.l.bf16 %v4885
        %v4927 = vunpack.c.l.bf16 %v4886
        %v4928 = vunpack.c.l.bf16 %v4887
        %v4929 = vunpack.c.l.bf16 %v4888
        %v4930 = vunpack.c.l.bf16 %v4889
        %v4931 = vunpack.c.l.bf16 %v4890
        %v4932 = vunpack.c.l.bf16 %v4891
        %v4933 = vunpack.c.l.bf16 %v4892
        %v4934 = vunpack.c.l.bf16 %v4893
        %v4935 = vunpack.c.l.bf16 %v4894
        %v4936 = vunpack.c.l.bf16 %v4895
        %v4937 = vunpack.c.l.bf16 %v4896
        %v4938 = vunpack.c.l.bf16 %v4897
        %v4939 = vunpack.c.l.bf16 %v4898
        %v4940 = vunpack.c.l.bf16 %v4899
        %v4941 = vunpack.c.l.bf16 %v4900
        %v4942 = vunpack.c.l.bf16 %v4901
        %v4943 = vunpack.c.l.bf16 %v4902
        %v4944 = vunpack.c.l.bf16 %v4903
        %v4945 = vunpack.c.l.bf16 %v4904
        %v4946 = vunpack.c.l.bf16 %v4905
        %v4947 = vunpack.c.l.bf16 %v4906
        %v4948 = vunpack.c.l.bf16 %v4907
        %v4949 = vunpack.c.l.bf16 %v4908
        %v4950 = vunpack.c.l.bf16 %v4909
        %v4951 = vunpack.c.l.bf16 %v4910
        %v4952 = vunpack.c.l.bf16 %v4911
        %v4953 = vunpack.c.l.bf16 %v4912
        %v4954 = vunpack.c.l.bf16 %v4913
        %v4955 = vunpack.c.l.bf16 %v4914
        %v4956 = vunpack.c.l.bf16 %v4915
        %v4957 = vadd.f32 %v4834, %v4916
        %v4958 = vadd.f32 %v4835, %v4917
        %v4959 = vadd.f32 %v4836, %v4918
        %v4960 = vadd.f32 %v4837, %v4919
        %v4961 = vadd.f32 %v4838, %v4920
        %v4962 = vadd.f32 %v4839, %v4921
        %v4963 = vadd.f32 %v4840, %v4922
        %v4964 = vadd.f32 %v4841, %v4923
        %v4965 = vadd.f32 %v4842, %v4924
        %v4966 = vadd.f32 %v4843, %v4925
        %v4967 = vadd.f32 %v4844, %v4926
        %v4968 = vadd.f32 %v4845, %v4927
        %v4969 = vadd.f32 %v4846, %v4928
        %v4970 = vadd.f32 %v4847, %v4929
        %v4971 = vadd.f32 %v4848, %v4930
        %v4972 = vadd.f32 %v4849, %v4931
        %v4973 = vadd.f32 %v4850, %v4932
        %v4974 = vadd.f32 %v4851, %v4933
        %v4975 = vadd.f32 %v4852, %v4934
        %v4976 = vadd.f32 %v4853, %v4935
        %v4977 = vadd.f32 %v4854, %v4936
        %v4978 = vadd.f32 %v4855, %v4937
        %v4979 = vadd.f32 %v4856, %v4938
        %v4980 = vadd.f32 %v4857, %v4939
        %v4981 = vadd.f32 %v4858, %v4940
        %v4982 = vadd.f32 %v4859, %v4941
        %v4983 = vadd.f32 %v4860, %v4942
        %v4984 = vadd.f32 %v4861, %v4943
        %v4985 = vadd.f32 %v4862, %v4944
        %v4986 = vadd.f32 %v4863, %v4945
        %v4987 = vadd.f32 %v4864, %v4946
        %v4988 = vadd.f32 %v4865, %v4947
        %v4989 = vadd.f32 %v4866, %v4948
        %v4990 = vadd.f32 %v4867, %v4949
        %v4991 = vadd.f32 %v4868, %v4950
        %v4992 = vadd.f32 %v4869, %v4951
        %v4993 = vadd.f32 %v4870, %v4952
        %v4994 = vadd.f32 %v4871, %v4953
        %v4995 = vadd.f32 %v4872, %v4954
        %v4996 = vadd.f32 %v4873, %v4955
        %v4997 = vadd.f32 %v4874, %v4956
        %4998 = vst [vmem:[%s419] sm:$0xff] %v4957
        %4999 = vst [vmem:[%s419 + $0x8] sm:$0xff] %v4958
        %5000 = vst [vmem:[%s419 + $0x10] sm:$0xff] %v4959
        %5001 = vst [vmem:[%s419 + $0x18] sm:$0xff] %v4960
        %5002 = vst [vmem:[%s419 + $0x20] sm:$0xff] %v4961
        %5003 = vst [vmem:[%s419 + $0x28] sm:$0xff] %v4962
        %5004 = vst [vmem:[%s419 + $0x30] sm:$0xff] %v4963
        %5005 = vst [vmem:[%s419 + $0x38] sm:$0xff] %v4964
        %5006 = vst [vmem:[%s419 + $0x40] sm:$0xff] %v4965
        %5007 = vst [vmem:[%s419 + $0x48] sm:$0xff] %v4966
        %5008 = vst [vmem:[%s419 + $0x50] sm:$0xff] %v4967
        %5009 = vst [vmem:[%s419 + $0x58] sm:$0xff] %v4968
        %5010 = vst [vmem:[%s419 + $0x60] sm:$0xff] %v4969
        %5011 = vst [vmem:[%s419 + $0x68] sm:$0xff] %v4970
        %5012 = vst [vmem:[%s419 + $0x70] sm:$0xff] %v4971
        %5013 = vst [vmem:[%s419 + $0x78] sm:$0xff] %v4972
        %5014 = vst [vmem:[%s419 + $0x80] sm:$0xff] %v4973
        %5015 = vst [vmem:[%s419 + $0x88] sm:$0xff] %v4974
        %5016 = vst [vmem:[%s419 + $0x90] sm:$0xff] %v4975
        %5017 = vst [vmem:[%s419 + $0x98] sm:$0xff] %v4976
        %5018 = vst [vmem:[%s419 + $0xa0] sm:$0xff] %v4977
        %5019 = vst [vmem:[%s419 + $0xa8] sm:$0xff] %v4978
        %5020 = vst [vmem:[%s419 + $0xb0] sm:$0xff] %v4979
        %5021 = vst [vmem:[%s419 + $0xb8] sm:$0xff] %v4980
        %5022 = vst [vmem:[%s419 + $0xc0] sm:$0xff] %v4981
        %5023 = vst [vmem:[%s419 + $0xc8] sm:$0xff] %v4982
        %5024 = vst [vmem:[%s419 + $0xd0] sm:$0xff] %v4983
        %5025 = vst [vmem:[%s419 + $0xd8] sm:$0xff] %v4984
        %5026 = vst [vmem:[%s419 + $0xe0] sm:$0xff] %v4985
        %5027 = vst [vmem:[%s419 + $0xe8] sm:$0xff] %v4986
        %5028 = vst [vmem:[%s419 + $0xf0] sm:$0xff] %v4987
        %5029 = vst [vmem:[%s419 + $0xf8] sm:$0xff] %v4988
        %5030 = vst [vmem:[%s419 + $0x100] sm:$0xff] %v4989
        %5031 = vst [vmem:[%s419 + $0x108] sm:$0xff] %v4990
        %5032 = vst [vmem:[%s419 + $0x110] sm:$0xff] %v4991
        %5033 = vst [vmem:[%s419 + $0x118] sm:$0xff] %v4992
        %5034 = vst [vmem:[%s419 + $0x120] sm:$0xff] %v4993
        %5035 = vst [vmem:[%s419 + $0x128] sm:$0xff] %v4994
        %5036 = vst [vmem:[%s419 + $0x130] sm:$0xff] %v4995
        %5037 = vst [vmem:[%s419 + $0x138] sm:$0xff] %v4996
        %5038 = vst [vmem:[%s419 + $0x140] sm:$0xff] %v4997
        %s5039 = sand.u32 %s210, 1
        %s5040 = scalar_lea.sflag [#allocation5], %s5039
        %s5041 = sand.u32 %s210, 1
        %s5042 = smul.addr %s5041, 328
        %s5043 = scalar_lea.vmem [#allocation17], %s5042
        // Predicated region
        $region85: #{tpu_custom_call.1} parent=51 // pred_check
          %p5044 = pneg %p220
        $region86: #{tpu_custom_call.1} parent=51 // pred_check_branch
          %5046 = sbr.rel (%p5044) target = $region88
        $region87: #{tpu_custom_call.1} parent=51 // pred_region
          %s5048 = ssub.s32 5248, 5248
          %5049 = vsyncadd %s5040, %s5048
          %s5050 = smul.addr %s29, 41
          %s5051 = smul.addr %s5050, 128
          %s5052 = scalar_lea.hbm %s8, %s5051
          %s5053 = sshll.u32 %s5043, 4
          %s5054 = int_to_ptr.vmem [resolvable:$true] %s5053
          %5059 = dma.vmem_to_hbm [thread:$0]  %s5054, 5248, %s5052, %s5040, 128, 128, 8
        $region88: #{tpu_custom_call.1} parent=51 // pred_fallthru
          _
      $region52: #{tpu_custom_call.1} parent=5 // pred_fallthru
        _
      %p5060 = scmp.le.s32.totalorder 2, %s24
      // Predicated region
      $region89: #{tpu_custom_call.1} parent=5 // pred_check
        %p5061 = pneg %p5060
      $region90: #{tpu_custom_call.1} parent=5 // pred_check_branch
        %5063 = sbr.rel (%p5061) target = $region92
      $region91: #{tpu_custom_call.1} parent=5 // pred_region
        %s5064 = ssub.s32 %s24, 2
        // Predicated region
        $region93: #{tpu_custom_call.1} parent=91 // pred_check
          %p5065 = pneg %p226
        $region94: #{tpu_custom_call.1} parent=91 // pred_check_branch
          %5067 = sbr.rel (%p5065) target = $region96
        $region95: #{tpu_custom_call.1} parent=91 // pred_region
          %s5068 = sand.u32 %s211, 1
          %s5069 = scalar_lea.sflag [#allocation5], %s5068
          %s5070 = sand.u32 %s211, 1
          %s5071 = smul.addr %s5070, 328
          %s5072 = scalar_lea.vmem [#allocation17], %s5071
          %5073 = dma.done %s5069, 5248
        $region96: #{tpu_custom_call.1} parent=91 // pred_fallthru
          _
      $region92: #{tpu_custom_call.1} parent=5 // pred_fallthru
        _
    $region6: #{tpu_custom_call.1} parent=1 // loop_footer
      %s28 = sadd.s32 1, %s24
    $region7: #{tpu_custom_call.1} parent=1 // loop_footer_branch
      %23 = sbr.rel target = $region3
    $region8: #{tpu_custom_call.1} parent=1 // loop_exit
      _
    %5074 = vsyncpa [#allocation4], 1
    %s5075 = scalar_lea.sflag [#allocation4], 1
    %5076 = vsyncpa %s5075, 1
    %5077 = vsyncpa [#allocation7], 1
    %5078 = vsyncpa [#allocation10], 1
    %5079 = vsyncpa [#allocation13], 1
    %5080 = vsyncpa [#allocation16], 1
    %5081 = vsyncpa [#allocation5], 1
    %s5082 = scalar_lea.sflag [#allocation5], 1
    %5083 = vsyncpa %s5082, 1

</llo_original>
